<compile_context>
chip_gen: v6e
topology: v6e:2x2x1
jax: 0.10.0
libtpu: 0.0.40
codegen_flags: <defaults>
</compile_context>

<pallas_src>
import functools

import jax
import jax.numpy as jnp
from jax.experimental import pallas as pl
from jax.experimental.pallas import tpu as pltpu


def _obsbot_kernel(xy0_ref, x_ref, grd_ref, wx_ref, wh_ref, b_ref, wo_ref,
                   bo_ref, out_ref, *, H, W, eps=1e-6, step_scale=0.1):
    """One batch element: T-step observer -> predictor -> policy recurrence.

    Shapes inside the kernel (batch dim squeezed away by the BlockSpecs):
      xy0_ref : (npc, 2)    initial observation-point coords in [0, 1]
      x_ref   : (T, C, HW)  all frames of this batch element
      grd_ref : (2, HW)     grid coords pre-scaled to pixel units
                            (row 0 = x*(W-1), row 1 = y*(H-1))
      wx/wh/b/wo/bo         policy-LSTM params, gate column order [i|f|o|g]
      out_ref : (T, C, HW)  predicted grid fields R_grd for every step
    """
    T, C, _ = x_ref.shape
    npc = xy0_ref.shape[0]
    hidden = wh_ref.shape[0]

    # Loop-invariant loads, hoisted out of the T recurrence.
    xgs = grd_ref[0:1, :]                     # (1, HW)  x * (W-1)
    ygs = grd_ref[1:2, :]                     # (1, HW)  y * (H-1)
    wx = wx_ref[...]
    wh = wh_ref[...]
    bias = b_ref[...]
    wo = wo_ref[...]
    bo = bo_ref[...]

    sx = jnp.float32(W - 1)
    sy = jnp.float32(H - 1)
    # eps scaled into the pixel-unit metric; the IDW normalization cancels the
    # constant (W-1)*(H-1) factor, so this matches the [0,1]-metric IDW.
    eps_s = jnp.float32(eps * (W - 1) * (H - 1))
    inv_c = jnp.float32(1.0 / C)

    def step(t, xy):
        R = x_ref[t]                          # (C, HW) dynamic load, frame t
        xp = xy[:, 0:1]                       # (npc, 1)  in [0, 1]
        yp = xy[:, 1:2]                       # (npc, 1)

        # Lane-dense distances in pixel units: (npc, HW) -> full 128-lane vregs.
        dxs = jnp.abs(xgs - xp * sx)
        dys = jnp.abs(ygs - yp * sy)

        # ---- observer_interp2d ('bilinear'): differentiable hat weights ----
        w_obs = jnp.maximum(0.0, 1.0 - dxs) * jnp.maximum(0.0, 1.0 - dys)
        # (npc, HW) x (C, HW) contract HW -> (npc, C)
        r_pc = jax.lax.dot_general(
            w_obs, R, (((1,), (1,)), ((), ())),
            preferred_element_type=jnp.float32)

        # ---- predictor_interp2d: normalized inverse-distance weighting -----
        d2s = dxs * dxs + dys * dys
        w_pred = pl.reciprocal(d2s + eps_s, approx=True)          # EUP slot
        inv_norm = pl.reciprocal(jnp.sum(w_pred, axis=0, keepdims=True),
                                 approx=True)                     # EUP slot
        w_pred = w_pred * inv_norm                                 # (npc, HW)

        # pc -> grid combine.  C is tiny here, so do it on the VPU as C
        # broadcast-multiply + sublane-sum passes (also yields the channel sum
        # of r_pc for free); for large C switch this back to one MXU dot.
        rows = []
        r_sum = jnp.zeros((npc, 1), jnp.float32)
        for c in range(C):
            r_c = r_pc[:, c:c + 1]                                 # (npc, 1)
            r_sum = r_sum + r_c
            rows.append(jnp.sum(r_c * w_pred, axis=0, keepdims=True))
        r_grd = jnp.concatenate(rows, axis=0)                      # (C, HW)
        out_ref[t] = r_grd

        # ---- policy_lstm ('seq2seq'): LSTM over the npc observation points -
        r_mean = r_sum * inv_c                                     # (npc, 1)
        feat = jnp.concatenate([xp, yp, r_mean], axis=1)           # (npc, 3)
        # Hoisted input projection + bias: one matmul / one add for all points.
        gates_x = jnp.dot(feat, wx,
                          preferred_element_type=jnp.float32) + bias

        h = jnp.zeros((1, hidden), jnp.float32)
        c_st = jnp.zeros((1, hidden), jnp.float32)
        h_list = []
        for p in range(npc):   # npc is small & static -> fully unrolled
            gates = gates_x[p:p + 1, :] + jnp.dot(
                h, wh, preferred_element_type=jnp.float32)         # (1, 4*hid)
            sfo = jax.nn.sigmoid(gates[:, :3 * hidden])   # i|f|o: one EUP push
            i_g = sfo[:, :hidden]
            f_g = sfo[:, hidden:2 * hidden]
            o_g = sfo[:, 2 * hidden:]
            g_g = jnp.tanh(gates[:, 3 * hidden:])
            c_st = f_g * c_st + i_g * g_g
            h = o_g * jnp.tanh(c_st)
            h_list.append(h)

        # Single output matmul instead of npc masked selects.
        h_all = jnp.concatenate(h_list, axis=0)                    # (npc, hid)
        delta = jnp.dot(h_all, wo,
                        preferred_element_type=jnp.float32) + bo   # (npc, 2)
        return jnp.clip(xy + step_scale * jnp.tanh(delta), 0.0, 1.0)

    _ = jax.lax.fori_loop(0, T, step, xy0_ref[...])


def obsbot_forward(x, xy_pc0, params, *, eps=1e-6, step_scale=0.1):
    """obsbot.forward (mode='run'): x (B,T,C,H,W) -> xout (B,T,C,H,W).

    xy_pc0 : (B, npc, 2) initial observation-point coordinates in [0, 1].
    params : (wx, wh, b, wo, bo) policy-LSTM params, gate columns [i|f|o|g].
    """
    B, T, C, H, W = x.shape
    assert H == W, "obsbot builds a square image grid (image_size x image_size)"
    HW = H * W
    npc = xy_pc0.shape[1]
    wx, wh, b, wo, bo = params
    hidden = wh.shape[0]

    # Reshape once; BlockSpec indexes the batch axis directly.
    x_flat = x.reshape(B, T, C, HW)

    # Grid coordinates pre-scaled to pixel units (loop-invariant constant,
    # DMA'd effectively once since its block index never changes).
    xs = jnp.linspace(0.0, float(W - 1), W, dtype=jnp.float32)
    ys = jnp.linspace(0.0, float(H - 1), H, dtype=jnp.float32)
    xgs = jnp.tile(xs[None, :], (H, 1)).reshape(1, HW)
    ygs = jnp.tile(ys[:, None], (1, W)).reshape(1, HW)
    grd = jnp.concatenate([xgs, ygs], axis=0)                      # (2, HW)

    kernel = functools.partial(_obsbot_kernel, H=H, W=W, eps=eps,
                               step_scale=step_scale)

    out = pl.pallas_call(
        kernel,
        out_shape=jax.ShapeDtypeStruct((B, T, C, HW), jnp.float32),
        grid=(B,),
        in_specs=[
            pl.BlockSpec((None, npc, 2), lambda bb: (bb, 0, 0)),        # XY_pc0
            pl.BlockSpec((None, T, C, HW), lambda bb: (bb, 0, 0, 0)),   # frames
            pl.BlockSpec((2, HW), lambda bb: (0, 0)),                   # grid xy
            pl.BlockSpec((3, 4 * hidden), lambda bb: (0, 0)),           # wx
            pl.BlockSpec((hidden, 4 * hidden), lambda bb: (0, 0)),      # wh
            pl.BlockSpec((1, 4 * hidden), lambda bb: (0, 0)),           # b
            pl.BlockSpec((hidden, 2), lambda bb: (0, 0)),               # wo
            pl.BlockSpec((1, 2), lambda bb: (0, 0)),                    # bo
        ],
        out_specs=pl.BlockSpec((None, T, C, HW), lambda bb: (bb, 0, 0, 0)),
        compiler_params=pltpu.CompilerParams(
            dimension_semantics=("parallel",),
            # Far more than this toy problem needs; at realistic C/H*W sizes
            # chunk T (grid=(B, T//T_blk)) to stay under v7x's 64 MiB VMEM.
            vmem_limit_bytes=32 * 1024 * 1024),
    )(xy_pc0, x_flat, grd, wx, wh, b, wo, bo)

    return out.reshape(B, T, C, H, W)


if __name__ == "__main__":
    # Small shapes consistent with the module: image_size=16, pc_size=4, batch=2.
    B, T, C, H, W = 2, 8, 2, 16, 16
    pc_size = 4
    npc = pc_size * pc_size
    hidden = 16

    key = jax.random.PRNGKey(0)
    kx, k1, k2, k3 = jax.random.split(key, 4)
    x = jax.random.normal(kx, (B, T, C, H, W), dtype=jnp.float32)

    # pc_initialize='regular' -> regular grid of observation points in [0, 1],
    # flattened the same way the PyTorch module flattens Xpc/Ypc (X fastest).
    xs_pc = jnp.linspace(0.0, 1.0, pc_size)
    Xpc = jnp.tile(xs_pc, pc_size)
    Ypc = jnp.repeat(xs_pc, pc_size)
    xy_pc0 = jnp.broadcast_to(
        jnp.stack([Xpc, Ypc], axis=1)[None], (B, npc, 2)).astype(jnp.float32)

    # Deterministic policy-LSTM parameters, gate column order [i | f | o | g].
    wx = 0.1 * jax.random.normal(k1, (3, 4 * hidden), dtype=jnp.float32)
    wh = 0.1 * jax.random.normal(k2, (hidden, 4 * hidden), dtype=jnp.float32)
    b = jnp.zeros((1, 4 * hidden), dtype=jnp.float32)
    wo = 0.1 * jax.random.normal(k3, (hidden, 2), dtype=jnp.float32)
    bo = jnp.zeros((1, 2), dtype=jnp.float32)

    fwd = jax.jit(obsbot_forward)
    out = fwd(x, xy_pc0, (wx, wh, b, wo, bo))
    jax.block_until_ready(out)
    assert out.shape == (B, T, C, H, W)
    print("KERNEL_OK")
</pallas_src>

<mosaic_0001>
module attributes {stable_mosaic.version = 11 : i64} {
  func.func @_obsbot_kernel(%arg0: i32, %arg1: memref<1x16x2xf32, #tpu.memory_space<vmem>>, %arg2: memref<1x8x2x256xf32, #tpu.memory_space<vmem>>, %arg3: memref<2x256xf32, #tpu.memory_space<vmem>>, %arg4: memref<3x64xf32, #tpu.memory_space<vmem>>, %arg5: memref<16x64xf32, #tpu.memory_space<vmem>>, %arg6: memref<1x64xf32, #tpu.memory_space<vmem>>, %arg7: memref<16x2xf32, #tpu.memory_space<vmem>>, %arg8: memref<1x2xf32, #tpu.memory_space<vmem>>, %arg9: memref<1x8x2x256xf32, #tpu.memory_space<vmem>>) attributes {dimension_semantics = [#tpu.dimension_semantics<parallel>], iteration_bounds = array<i64: 2>, scalar_prefetch = 0 : i64, scratch_operands = 0 : i64, tpu.core_type = #tpu.core_type<tc>, window_params = [{transform_indices = @transform_0, window_bounds = array<i64: 1, 16, 2>}, {transform_indices = @transform_1, window_bounds = array<i64: 1, 8, 2, 256>}, {pipeline_mode = #tpu.pipeline_mode<synchronous>, transform_indices = @transform_2, window_bounds = array<i64: 2, 256>}, {pipeline_mode = #tpu.pipeline_mode<synchronous>, transform_indices = @transform_3, window_bounds = array<i64: 3, 64>}, {pipeline_mode = #tpu.pipeline_mode<synchronous>, transform_indices = @transform_4, window_bounds = array<i64: 16, 64>}, {pipeline_mode = #tpu.pipeline_mode<synchronous>, transform_indices = @transform_5, window_bounds = array<i64: 1, 64>}, {pipeline_mode = #tpu.pipeline_mode<synchronous>, transform_indices = @transform_6, window_bounds = array<i64: 16, 2>}, {pipeline_mode = #tpu.pipeline_mode<synchronous>, transform_indices = @transform_7, window_bounds = array<i64: 1, 2>}, {transform_indices = @transform_8, window_bounds = array<i64: 1, 8, 2, 256>}]} {
    %c0 = arith.constant 0 : index
    %c0_0 = arith.constant 0 : index
    %0 = vector.load %arg3[%c0, %c0_0] : memref<2x256xf32, #tpu.memory_space<vmem>>, vector<1x256xf32>
    %c1 = arith.constant 1 : index
    %c0_1 = arith.constant 0 : index
    %1 = vector.load %arg3[%c1, %c0_1] : memref<2x256xf32, #tpu.memory_space<vmem>>, vector<1x256xf32>
    %c0_2 = arith.constant 0 : index
    %c0_3 = arith.constant 0 : index
    %2 = vector.load %arg4[%c0_2, %c0_3] : memref<3x64xf32, #tpu.memory_space<vmem>>, vector<3x64xf32>
    %c0_4 = arith.constant 0 : index
    %c0_5 = arith.constant 0 : index
    %3 = vector.load %arg5[%c0_4, %c0_5] : memref<16x64xf32, #tpu.memory_space<vmem>>, vector<16x64xf32>
    %c0_6 = arith.constant 0 : index
    %c0_7 = arith.constant 0 : index
    %4 = vector.load %arg6[%c0_6, %c0_7] : memref<1x64xf32, #tpu.memory_space<vmem>>, vector<1x64xf32>
    %c0_8 = arith.constant 0 : index
    %c0_9 = arith.constant 0 : index
    %5 = vector.load %arg7[%c0_8, %c0_9] : memref<16x2xf32, #tpu.memory_space<vmem>>, vector<16x2xf32>
    %c0_10 = arith.constant 0 : index
    %c0_11 = arith.constant 0 : index
    %6 = vector.load %arg8[%c0_10, %c0_11] : memref<1x2xf32, #tpu.memory_space<vmem>>, vector<1x2xf32>
    %c0_12 = arith.constant 0 : index
    %c0_13 = arith.constant 0 : index
    %c0_14 = arith.constant 0 : index
    %7 = vector.load %arg1[%c0_12, %c0_13, %c0_14] : memref<1x16x2xf32, #tpu.memory_space<vmem>>, vector<1x16x2xf32>
    %8 = vector.shape_cast %7 : vector<1x16x2xf32> to vector<16x2xf32>
    %cst = arith.constant 1.500000e+01 : f32
    %cst_15 = arith.constant 1.500000e+01 : f32
    %cst_16 = arith.constant 2.250000e-04 : f32
    %cst_17 = arith.constant 5.000000e-01 : f32
    %c0_i32 = arith.constant 0 : i32
    %c8_i32 = arith.constant 8 : i32
    %9 = arith.addi %c0_i32, %c8_i32 : i32
    %c1_i32 = arith.constant 1 : i32
    %10 = scf.for %arg10 = %c0_i32 to %9 step %c1_i32 iter_args(%arg11 = %8) -> (vector<16x2xf32>)  : i32 {
      %c0_19 = arith.constant 0 : index
      %11 = arith.index_cast %arg10 : i32 to index
      %c0_20 = arith.constant 0 : index
      %c0_21 = arith.constant 0 : index
      %12 = vector.load %arg2[%c0_19, %11, %c0_20, %c0_21] : memref<1x8x2x256xf32, #tpu.memory_space<vmem>>, vector<1x1x2x256xf32>
      %13 = vector.shape_cast %12 : vector<1x1x2x256xf32> to vector<2x256xf32>
      %14 = vector.extract_strided_slice %arg11 {offsets = [0, 0], sizes = [16, 1], strides = [1, 1]} : vector<16x2xf32> to vector<16x1xf32>
      %15 = vector.extract_strided_slice %arg11 {offsets = [0, 1], sizes = [16, 1], strides = [1, 1]} : vector<16x2xf32> to vector<16x1xf32>
      %16 = vector.broadcast %cst : f32 to vector<16x1xf32>
      %17 = arith.mulf %14, %16 : vector<16x1xf32>
      %18 = vector.broadcast %0 : vector<1x256xf32> to vector<16x256xf32>
      %19 = vector.broadcast %17 : vector<16x1xf32> to vector<16x256xf32>
      %20 = arith.subf %18, %19 : vector<16x256xf32>
      %21 = math.absf %20 : vector<16x256xf32>
      %22 = vector.broadcast %cst_15 : f32 to vector<16x1xf32>
      %23 = arith.mulf %15, %22 : vector<16x1xf32>
      %24 = vector.broadcast %1 : vector<1x256xf32> to vector<16x256xf32>
      %25 = vector.broadcast %23 : vector<16x1xf32> to vector<16x256xf32>
      %26 = arith.subf %24, %25 : vector<16x256xf32>
      %27 = math.absf %26 : vector<16x256xf32>
      %cst_22 = arith.constant 1.000000e+00 : f32
      %28 = vector.broadcast %cst_22 : f32 to vector<16x256xf32>
      %29 = arith.subf %28, %21 : vector<16x256xf32>
      %cst_23 = arith.constant 0.000000e+00 : f32
      %30 = vector.broadcast %cst_23 : f32 to vector<16x256xf32>
      %31 = arith.maximumf %30, %29 : vector<16x256xf32>
      %cst_24 = arith.constant 1.000000e+00 : f32
      %32 = vector.broadcast %cst_24 : f32 to vector<16x256xf32>
      %33 = arith.subf %32, %27 : vector<16x256xf32>
      %cst_25 = arith.constant 0.000000e+00 : f32
      %34 = vector.broadcast %cst_25 : f32 to vector<16x256xf32>
      %35 = arith.maximumf %34, %33 : vector<16x256xf32>
      %36 = arith.mulf %31, %35 : vector<16x256xf32>
      %cst_26 = arith.constant dense<0.000000e+00> : vector<16x2xf32>
      %37 = tpu.matmul %36, %13, %cst_26 {dimension_numbers = #tpu.dot_dimension_numbers<[1], [1], [0], [0], [0, 0, 1, 0], [], []>} : vector<16x256xf32>, vector<2x256xf32>, vector<16x2xf32> -> vector<16x2xf32>
      %38 = arith.mulf %21, %21 : vector<16x256xf32>
      %39 = arith.mulf %27, %27 : vector<16x256xf32>
      %40 = arith.addf %38, %39 : vector<16x256xf32>
      %41 = vector.broadcast %cst_16 : f32 to vector<16x256xf32>
      %42 = arith.addf %40, %41 : vector<16x256xf32>
      %43 = tpu.reciprocal %42 {approx = true} : vector<16x256xf32> -> vector<16x256xf32>
      %cst_27 = arith.constant dense<0.000000e+00> : vector<256xf32>
      %44 = vector.multi_reduction <add>, %43, %cst_27 [0] : vector<16x256xf32> to vector<256xf32>
      %45 = vector.shape_cast %44 : vector<256xf32> to vector<1x256xf32>
      %46 = tpu.reciprocal %45 {approx = true} : vector<1x256xf32> -> vector<1x256xf32>
      %47 = vector.broadcast %46 : vector<1x256xf32> to vector<16x256xf32>
      %48 = arith.mulf %43, %47 : vector<16x256xf32>
      %cst_28 = arith.constant 0.000000e+00 : f32
      %49 = vector.broadcast %cst_28 : f32 to vector<16x1xf32>
      %50 = vector.extract_strided_slice %37 {offsets = [0, 0], sizes = [16, 1], strides = [1, 1]} : vector<16x2xf32> to vector<16x1xf32>
      %51 = arith.addf %49, %50 : vector<16x1xf32>
      %52 = vector.broadcast %50 : vector<16x1xf32> to vector<16x256xf32>
      %53 = arith.mulf %52, %48 : vector<16x256xf32>
      %cst_29 = arith.constant dense<0.000000e+00> : vector<256xf32>
      %54 = vector.multi_reduction <add>, %53, %cst_29 [0] : vector<16x256xf32> to vector<256xf32>
      %55 = vector.shape_cast %54 : vector<256xf32> to vector<1x256xf32>
      %56 = vector.extract_strided_slice %37 {offsets = [0, 1], sizes = [16, 1], strides = [1, 1]} : vector<16x2xf32> to vector<16x1xf32>
      %57 = arith.addf %51, %56 : vector<16x1xf32>
      %58 = vector.broadcast %56 : vector<16x1xf32> to vector<16x256xf32>
      %59 = arith.mulf %58, %48 : vector<16x256xf32>
      %cst_30 = arith.constant dense<0.000000e+00> : vector<256xf32>
      %60 = vector.multi_reduction <add>, %59, %cst_30 [0] : vector<16x256xf32> to vector<256xf32>
      %61 = vector.shape_cast %60 : vector<256xf32> to vector<1x256xf32>
      %62 = tpu.concatenate %55, %61 in 0 : vector<1x256xf32>, vector<1x256xf32> -> vector<2x256xf32>
      %c0_31 = arith.constant 0 : index
      %63 = arith.index_cast %arg10 : i32 to index
      %c0_32 = arith.constant 0 : index
      %c0_33 = arith.constant 0 : index
      %64 = vector.load %arg9[%c0_31, %63, %c0_32, %c0_33] : memref<1x8x2x256xf32, #tpu.memory_space<vmem>>, vector<1x1x2x256xf32>
      %65 = vector.shape_cast %64 : vector<1x1x2x256xf32> to vector<2x256xf32>
      %66 = vector.shape_cast %62 : vector<2x256xf32> to vector<1x1x2x256xf32>
      tpu.vector_store %arg9[%c0_31, %63, %c0_32, %c0_33], %66 {strides = array<i32>} : memref<1x8x2x256xf32, #tpu.memory_space<vmem>>, vector<1x1x2x256xf32>,
      %67 = vector.broadcast %cst_17 : f32 to vector<16x1xf32>
      %68 = arith.mulf %57, %67 : vector<16x1xf32>
      %69 = tpu.concatenate %14, %15, %68 in 1 : vector<16x1xf32>, vector<16x1xf32>, vector<16x1xf32> -> vector<16x3xf32>
      %cst_34 = arith.constant dense<0.000000e+00> : vector<16x64xf32>
      %70 = tpu.matmul %69, %2, %cst_34 {dimension_numbers = #tpu.dot_dimension_numbers<[1], [0], [0], [1], [0, 0, 1, 1], [], []>} : vector<16x3xf32>, vector<3x64xf32>, vector<16x64xf32> -> vector<16x64xf32>
      %71 = vector.broadcast %4 : vector<1x64xf32> to vector<16x64xf32>
      %72 = arith.addf %70, %71 : vector<16x64xf32>
      %cst_35 = arith.constant 0.000000e+00 : f32
      %73 = vector.broadcast %cst_35 : f32 to vector<1x16xf32>
      %cst_36 = arith.constant 0.000000e+00 : f32
      %74 = vector.broadcast %cst_36 : f32 to vector<1x16xf32>
      %75 = vector.extract_strided_slice %72 {offsets = [0, 0], sizes = [1, 64], strides = [1, 1]} : vector<16x64xf32> to vector<1x64xf32>
      %cst_37 = arith.constant dense<0.000000e+00> : vector<1x64xf32>
      %76 = tpu.matmul %73, %3, %cst_37 {dimension_numbers = #tpu.dot_dimension_numbers<[1], [0], [0], [1], [0, 0, 1, 1], [], []>} : vector<1x16xf32>, vector<16x64xf32>, vector<1x64xf32> -> vector<1x64xf32>
      %77 = arith.addf %75, %76 : vector<1x64xf32>
      %78 = vector.extract_strided_slice %77 {offsets = [0, 0], sizes = [1, 48], strides = [1, 1]} : vector<1x64xf32> to vector<1x48xf32>
      %79 = arith.negf %78 : vector<1x48xf32>
      %80 = math.exp %79 : vector<1x48xf32>
      %cst_38 = arith.constant 1.000000e+00 : f32
      %81 = vector.broadcast %cst_38 : f32 to vector<1x48xf32>
      %82 = arith.addf %81, %80 : vector<1x48xf32>
      %83 = arith.divf %81, %82 : vector<1x48xf32>
      %84 = vector.extract_strided_slice %83 {offsets = [0, 0], sizes = [1, 16], strides = [1, 1]} : vector<1x48xf32> to vector<1x16xf32>
      %85 = vector.extract_strided_slice %83 {offsets = [0, 16], sizes = [1, 16], strides = [1, 1]} : vector<1x48xf32> to vector<1x16xf32>
      %86 = vector.extract_strided_slice %83 {offsets = [0, 32], sizes = [1, 16], strides = [1, 1]} : vector<1x48xf32> to vector<1x16xf32>
      %87 = vector.extract_strided_slice %77 {offsets = [0, 48], sizes = [1, 16], strides = [1, 1]} : vector<1x64xf32> to vector<1x16xf32>
      %88 = math.tanh %87 : vector<1x16xf32>
      %89 = arith.mulf %85, %74 : vector<1x16xf32>
      %90 = arith.mulf %84, %88 : vector<1x16xf32>
      %91 = arith.addf %89, %90 : vector<1x16xf32>
      %92 = math.tanh %91 : vector<1x16xf32>
      %93 = arith.mulf %86, %92 : vector<1x16xf32>
      %94 = vector.extract_strided_slice %72 {offsets = [1, 0], sizes = [1, 64], strides = [1, 1]} : vector<16x64xf32> to vector<1x64xf32>
      %cst_39 = arith.constant dense<0.000000e+00> : vector<1x64xf32>
      %95 = tpu.matmul %93, %3, %cst_39 {dimension_numbers = #tpu.dot_dimension_numbers<[1], [0], [0], [1], [0, 0, 1, 1], [], []>} : vector<1x16xf32>, vector<16x64xf32>, vector<1x64xf32> -> vector<1x64xf32>
      %96 = arith.addf %94, %95 : vector<1x64xf32>
      %97 = vector.extract_strided_slice %96 {offsets = [0, 0], sizes = [1, 48], strides = [1, 1]} : vector<1x64xf32> to vector<1x48xf32>
      %98 = arith.negf %97 : vector<1x48xf32>
      %99 = math.exp %98 : vector<1x48xf32>
      %cst_40 = arith.constant 1.000000e+00 : f32
      %100 = vector.broadcast %cst_40 : f32 to vector<1x48xf32>
      %101 = arith.addf %100, %99 : vector<1x48xf32>
      %102 = arith.divf %100, %101 : vector<1x48xf32>
      %103 = vector.extract_strided_slice %102 {offsets = [0, 0], sizes = [1, 16], strides = [1, 1]} : vector<1x48xf32> to vector<1x16xf32>
      %104 = vector.extract_strided_slice %102 {offsets = [0, 16], sizes = [1, 16], strides = [1, 1]} : vector<1x48xf32> to vector<1x16xf32>
      %105 = vector.extract_strided_slice %102 {offsets = [0, 32], sizes = [1, 16], strides = [1, 1]} : vector<1x48xf32> to vector<1x16xf32>
      %106 = vector.extract_strided_slice %96 {offsets = [0, 48], sizes = [1, 16], strides = [1, 1]} : vector<1x64xf32> to vector<1x16xf32>
      %107 = math.tanh %106 : vector<1x16xf32>
      %108 = arith.mulf %104, %91 : vector<1x16xf32>
      %109 = arith.mulf %103, %107 : vector<1x16xf32>
      %110 = arith.addf %108, %109 : vector<1x16xf32>
      %111 = math.tanh %110 : vector<1x16xf32>
      %112 = arith.mulf %105, %111 : vector<1x16xf32>
      %113 = vector.extract_strided_slice %72 {offsets = [2, 0], sizes = [1, 64], strides = [1, 1]} : vector<16x64xf32> to vector<1x64xf32>
      %cst_41 = arith.constant dense<0.000000e+00> : vector<1x64xf32>
      %114 = tpu.matmul %112, %3, %cst_41 {dimension_numbers = #tpu.dot_dimension_numbers<[1], [0], [0], [1], [0, 0, 1, 1], [], []>} : vector<1x16xf32>, vector<16x64xf32>, vector<1x64xf32> -> vector<1x64xf32>
      %115 = arith.addf %113, %114 : vector<1x64xf32>
      %116 = vector.extract_strided_slice %115 {offsets = [0, 0], sizes = [1, 48], strides = [1, 1]} : vector<1x64xf32> to vector<1x48xf32>
      %117 = arith.negf %116 : vector<1x48xf32>
      %118 = math.exp %117 : vector<1x48xf32>
      %cst_42 = arith.constant 1.000000e+00 : f32
      %119 = vector.broadcast %cst_42 : f32 to vector<1x48xf32>
      %120 = arith.addf %119, %118 : vector<1x48xf32>
      %121 = arith.divf %119, %120 : vector<1x48xf32>
      %122 = vector.extract_strided_slice %121 {offsets = [0, 0], sizes = [1, 16], strides = [1, 1]} : vector<1x48xf32> to vector<1x16xf32>
      %123 = vector.extract_strided_slice %121 {offsets = [0, 16], sizes = [1, 16], strides = [1, 1]} : vector<1x48xf32> to vector<1x16xf32>
      %124 = vector.extract_strided_slice %121 {offsets = [0, 32], sizes = [1, 16], strides = [1, 1]} : vector<1x48xf32> to vector<1x16xf32>
      %125 = vector.extract_strided_slice %115 {offsets = [0, 48], sizes = [1, 16], strides = [1, 1]} : vector<1x64xf32> to vector<1x16xf32>
      %126 = math.tanh %125 : vector<1x16xf32>
      %127 = arith.mulf %123, %110 : vector<1x16xf32>
      %128 = arith.mulf %122, %126 : vector<1x16xf32>
      %129 = arith.addf %127, %128 : vector<1x16xf32>
      %130 = math.tanh %129 : vector<1x16xf32>
      %131 = arith.mulf %124, %130 : vector<1x16xf32>
      %132 = vector.extract_strided_slice %72 {offsets = [3, 0], sizes = [1, 64], strides = [1, 1]} : vector<16x64xf32> to vector<1x64xf32>
      %cst_43 = arith.constant dense<0.000000e+00> : vector<1x64xf32>
      %133 = tpu.matmul %131, %3, %cst_43 {dimension_numbers = #tpu.dot_dimension_numbers<[1], [0], [0], [1], [0, 0, 1, 1], [], []>} : vector<1x16xf32>, vector<16x64xf32>, vector<1x64xf32> -> vector<1x64xf32>
      %134 = arith.addf %132, %133 : vector<1x64xf32>
      %135 = vector.extract_strided_slice %134 {offsets = [0, 0], sizes = [1, 48], strides = [1, 1]} : vector<1x64xf32> to vector<1x48xf32>
      %136 = arith.negf %135 : vector<1x48xf32>
      %137 = math.exp %136 : vector<1x48xf32>
      %cst_44 = arith.constant 1.000000e+00 : f32
      %138 = vector.broadcast %cst_44 : f32 to vector<1x48xf32>
      %139 = arith.addf %138, %137 : vector<1x48xf32>
      %140 = arith.divf %138, %139 : vector<1x48xf32>
      %141 = vector.extract_strided_slice %140 {offsets = [0, 0], sizes = [1, 16], strides = [1, 1]} : vector<1x48xf32> to vector<1x16xf32>
      %142 = vector.extract_strided_slice %140 {offsets = [0, 16], sizes = [1, 16], strides = [1, 1]} : vector<1x48xf32> to vector<1x16xf32>
      %143 = vector.extract_strided_slice %140 {offsets = [0, 32], sizes = [1, 16], strides = [1, 1]} : vector<1x48xf32> to vector<1x16xf32>
      %144 = vector.extract_strided_slice %134 {offsets = [0, 48], sizes = [1, 16], strides = [1, 1]} : vector<1x64xf32> to vector<1x16xf32>
      %145 = math.tanh %144 : vector<1x16xf32>
      %146 = arith.mulf %142, %129 : vector<1x16xf32>
      %147 = arith.mulf %141, %145 : vector<1x16xf32>
      %148 = arith.addf %146, %147 : vector<1x16xf32>
      %149 = math.tanh %148 : vector<1x16xf32>
      %150 = arith.mulf %143, %149 : vector<1x16xf32>
      %151 = vector.extract_strided_slice %72 {offsets = [4, 0], sizes = [1, 64], strides = [1, 1]} : vector<16x64xf32> to vector<1x64xf32>
      %cst_45 = arith.constant dense<0.000000e+00> : vector<1x64xf32>
      %152 = tpu.matmul %150, %3, %cst_45 {dimension_numbers = #tpu.dot_dimension_numbers<[1], [0], [0], [1], [0, 0, 1, 1], [], []>} : vector<1x16xf32>, vector<16x64xf32>, vector<1x64xf32> -> vector<1x64xf32>
      %153 = arith.addf %151, %152 : vector<1x64xf32>
      %154 = vector.extract_strided_slice %153 {offsets = [0, 0], sizes = [1, 48], strides = [1, 1]} : vector<1x64xf32> to vector<1x48xf32>
      %155 = arith.negf %154 : vector<1x48xf32>
      %156 = math.exp %155 : vector<1x48xf32>
      %cst_46 = arith.constant 1.000000e+00 : f32
      %157 = vector.broadcast %cst_46 : f32 to vector<1x48xf32>
      %158 = arith.addf %157, %156 : vector<1x48xf32>
      %159 = arith.divf %157, %158 : vector<1x48xf32>
      %160 = vector.extract_strided_slice %159 {offsets = [0, 0], sizes = [1, 16], strides = [1, 1]} : vector<1x48xf32> to vector<1x16xf32>
      %161 = vector.extract_strided_slice %159 {offsets = [0, 16], sizes = [1, 16], strides = [1, 1]} : vector<1x48xf32> to vector<1x16xf32>
      %162 = vector.extract_strided_slice %159 {offsets = [0, 32], sizes = [1, 16], strides = [1, 1]} : vector<1x48xf32> to vector<1x16xf32>
      %163 = vector.extract_strided_slice %153 {offsets = [0, 48], sizes = [1, 16], strides = [1, 1]} : vector<1x64xf32> to vector<1x16xf32>
      %164 = math.tanh %163 : vector<1x16xf32>
      %165 = arith.mulf %161, %148 : vector<1x16xf32>
      %166 = arith.mulf %160, %164 : vector<1x16xf32>
      %167 = arith.addf %165, %166 : vector<1x16xf32>
      %168 = math.tanh %167 : vector<1x16xf32>
      %169 = arith.mulf %162, %168 : vector<1x16xf32>
      %170 = vector.extract_strided_slice %72 {offsets = [5, 0], sizes = [1, 64], strides = [1, 1]} : vector<16x64xf32> to vector<1x64xf32>
      %cst_47 = arith.constant dense<0.000000e+00> : vector<1x64xf32>
      %171 = tpu.matmul %169, %3, %cst_47 {dimension_numbers = #tpu.dot_dimension_numbers<[1], [0], [0], [1], [0, 0, 1, 1], [], []>} : vector<1x16xf32>, vector<16x64xf32>, vector<1x64xf32> -> vector<1x64xf32>
      %172 = arith.addf %170, %171 : vector<1x64xf32>
      %173 = vector.extract_strided_slice %172 {offsets = [0, 0], sizes = [1, 48], strides = [1, 1]} : vector<1x64xf32> to vector<1x48xf32>
      %174 = arith.negf %173 : vector<1x48xf32>
      %175 = math.exp %174 : vector<1x48xf32>
      %cst_48 = arith.constant 1.000000e+00 : f32
      %176 = vector.broadcast %cst_48 : f32 to vector<1x48xf32>
      %177 = arith.addf %176, %175 : vector<1x48xf32>
      %178 = arith.divf %176, %177 : vector<1x48xf32>
      %179 = vector.extract_strided_slice %178 {offsets = [0, 0], sizes = [1, 16], strides = [1, 1]} : vector<1x48xf32> to vector<1x16xf32>
      %180 = vector.extract_strided_slice %178 {offsets = [0, 16], sizes = [1, 16], strides = [1, 1]} : vector<1x48xf32> to vector<1x16xf32>
      %181 = vector.extract_strided_slice %178 {offsets = [0, 32], sizes = [1, 16], strides = [1, 1]} : vector<1x48xf32> to vector<1x16xf32>
      %182 = vector.extract_strided_slice %172 {offsets = [0, 48], sizes = [1, 16], strides = [1, 1]} : vector<1x64xf32> to vector<1x16xf32>
      %183 = math.tanh %182 : vector<1x16xf32>
      %184 = arith.mulf %180, %167 : vector<1x16xf32>
      %185 = arith.mulf %179, %183 : vector<1x16xf32>
      %186 = arith.addf %184, %185 : vector<1x16xf32>
      %187 = math.tanh %186 : vector<1x16xf32>
      %188 = arith.mulf %181, %187 : vector<1x16xf32>
      %189 = vector.extract_strided_slice %72 {offsets = [6, 0], sizes = [1, 64], strides = [1, 1]} : vector<16x64xf32> to vector<1x64xf32>
      %cst_49 = arith.constant dense<0.000000e+00> : vector<1x64xf32>
      %190 = tpu.matmul %188, %3, %cst_49 {dimension_numbers = #tpu.dot_dimension_numbers<[1], [0], [0], [1], [0, 0, 1, 1], [], []>} : vector<1x16xf32>, vector<16x64xf32>, vector<1x64xf32> -> vector<1x64xf32>
      %191 = arith.addf %189, %190 : vector<1x64xf32>
      %192 = vector.extract_strided_slice %191 {offsets = [0, 0], sizes = [1, 48], strides = [1, 1]} : vector<1x64xf32> to vector<1x48xf32>
      %193 = arith.negf %192 : vector<1x48xf32>
      %194 = math.exp %193 : vector<1x48xf32>
      %cst_50 = arith.constant 1.000000e+00 : f32
      %195 = vector.broadcast %cst_50 : f32 to vector<1x48xf32>
      %196 = arith.addf %195, %194 : vector<1x48xf32>
      %197 = arith.divf %195, %196 : vector<1x48xf32>
      %198 = vector.extract_strided_slice %197 {offsets = [0, 0], sizes = [1, 16], strides = [1, 1]} : vector<1x48xf32> to vector<1x16xf32>
      %199 = vector.extract_strided_slice %197 {offsets = [0, 16], sizes = [1, 16], strides = [1, 1]} : vector<1x48xf32> to vector<1x16xf32>
      %200 = vector.extract_strided_slice %197 {offsets = [0, 32], sizes = [1, 16], strides = [1, 1]} : vector<1x48xf32> to vector<1x16xf32>
      %201 = vector.extract_strided_slice %191 {offsets = [0, 48], sizes = [1, 16], strides = [1, 1]} : vector<1x64xf32> to vector<1x16xf32>
      %202 = math.tanh %201 : vector<1x16xf32>
      %203 = arith.mulf %199, %186 : vector<1x16xf32>
      %204 = arith.mulf %198, %202 : vector<1x16xf32>
      %205 = arith.addf %203, %204 : vector<1x16xf32>
      %206 = math.tanh %205 : vector<1x16xf32>
      %207 = arith.mulf %200, %206 : vector<1x16xf32>
      %208 = vector.extract_strided_slice %72 {offsets = [7, 0], sizes = [1, 64], strides = [1, 1]} : vector<16x64xf32> to vector<1x64xf32>
      %cst_51 = arith.constant dense<0.000000e+00> : vector<1x64xf32>
      %209 = tpu.matmul %207, %3, %cst_51 {dimension_numbers = #tpu.dot_dimension_numbers<[1], [0], [0], [1], [0, 0, 1, 1], [], []>} : vector<1x16xf32>, vector<16x64xf32>, vector<1x64xf32> -> vector<1x64xf32>
      %210 = arith.addf %208, %209 : vector<1x64xf32>
      %211 = vector.extract_strided_slice %210 {offsets = [0, 0], sizes = [1, 48], strides = [1, 1]} : vector<1x64xf32> to vector<1x48xf32>
      %212 = arith.negf %211 : vector<1x48xf32>
      %213 = math.exp %212 : vector<1x48xf32>
      %cst_52 = arith.constant 1.000000e+00 : f32
      %214 = vector.broadcast %cst_52 : f32 to vector<1x48xf32>
      %215 = arith.addf %214, %213 : vector<1x48xf32>
      %216 = arith.divf %214, %215 : vector<1x48xf32>
      %217 = vector.extract_strided_slice %216 {offsets = [0, 0], sizes = [1, 16], strides = [1, 1]} : vector<1x48xf32> to vector<1x16xf32>
      %218 = vector.extract_strided_slice %216 {offsets = [0, 16], sizes = [1, 16], strides = [1, 1]} : vector<1x48xf32> to vector<1x16xf32>
      %219 = vector.extract_strided_slice %216 {offsets = [0, 32], sizes = [1, 16], strides = [1, 1]} : vector<1x48xf32> to vector<1x16xf32>
      %220 = vector.extract_strided_slice %210 {offsets = [0, 48], sizes = [1, 16], strides = [1, 1]} : vector<1x64xf32> to vector<1x16xf32>
      %221 = math.tanh %220 : vector<1x16xf32>
      %222 = arith.mulf %218, %205 : vector<1x16xf32>
      %223 = arith.mulf %217, %221 : vector<1x16xf32>
      %224 = arith.addf %222, %223 : vector<1x16xf32>
      %225 = math.tanh %224 : vector<1x16xf32>
      %226 = arith.mulf %219, %225 : vector<1x16xf32>
      %227 = vector.extract_strided_slice %72 {offsets = [8, 0], sizes = [1, 64], strides = [1, 1]} : vector<16x64xf32> to vector<1x64xf32>
      %cst_53 = arith.constant dense<0.000000e+00> : vector<1x64xf32>
      %228 = tpu.matmul %226, %3, %cst_53 {dimension_numbers = #tpu.dot_dimension_numbers<[1], [0], [0], [1], [0, 0, 1, 1], [], []>} : vector<1x16xf32>, vector<16x64xf32>, vector<1x64xf32> -> vector<1x64xf32>
      %229 = arith.addf %227, %228 : vector<1x64xf32>
      %230 = vector.extract_strided_slice %229 {offsets = [0, 0], sizes = [1, 48], strides = [1, 1]} : vector<1x64xf32> to vector<1x48xf32>
      %231 = arith.negf %230 : vector<1x48xf32>
      %232 = math.exp %231 : vector<1x48xf32>
      %cst_54 = arith.constant 1.000000e+00 : f32
      %233 = vector.broadcast %cst_54 : f32 to vector<1x48xf32>
      %234 = arith.addf %233, %232 : vector<1x48xf32>
      %235 = arith.divf %233, %234 : vector<1x48xf32>
      %236 = vector.extract_strided_slice %235 {offsets = [0, 0], sizes = [1, 16], strides = [1, 1]} : vector<1x48xf32> to vector<1x16xf32>
      %237 = vector.extract_strided_slice %235 {offsets = [0, 16], sizes = [1, 16], strides = [1, 1]} : vector<1x48xf32> to vector<1x16xf32>
      %238 = vector.extract_strided_slice %235 {offsets = [0, 32], sizes = [1, 16], strides = [1, 1]} : vector<1x48xf32> to vector<1x16xf32>
      %239 = vector.extract_strided_slice %229 {offsets = [0, 48], sizes = [1, 16], strides = [1, 1]} : vector<1x64xf32> to vector<1x16xf32>
      %240 = math.tanh %239 : vector<1x16xf32>
      %241 = arith.mulf %237, %224 : vector<1x16xf32>
      %242 = arith.mulf %236, %240 : vector<1x16xf32>
      %243 = arith.addf %241, %242 : vector<1x16xf32>
      %244 = math.tanh %243 : vector<1x16xf32>
      %245 = arith.mulf %238, %244 : vector<1x16xf32>
      %246 = vector.extract_strided_slice %72 {offsets = [9, 0], sizes = [1, 64], strides = [1, 1]} : vector<16x64xf32> to vector<1x64xf32>
      %cst_55 = arith.constant dense<0.000000e+00> : vector<1x64xf32>
      %247 = tpu.matmul %245, %3, %cst_55 {dimension_numbers = #tpu.dot_dimension_numbers<[1], [0], [0], [1], [0, 0, 1, 1], [], []>} : vector<1x16xf32>, vector<16x64xf32>, vector<1x64xf32> -> vector<1x64xf32>
      %248 = arith.addf %246, %247 : vector<1x64xf32>
      %249 = vector.extract_strided_slice %248 {offsets = [0, 0], sizes = [1, 48], strides = [1, 1]} : vector<1x64xf32> to vector<1x48xf32>
      %250 = arith.negf %249 : vector<1x48xf32>
      %251 = math.exp %250 : vector<1x48xf32>
      %cst_56 = arith.constant 1.000000e+00 : f32
      %252 = vector.broadcast %cst_56 : f32 to vector<1x48xf32>
      %253 = arith.addf %252, %251 : vector<1x48xf32>
      %254 = arith.divf %252, %253 : vector<1x48xf32>
      %255 = vector.extract_strided_slice %254 {offsets = [0, 0], sizes = [1, 16], strides = [1, 1]} : vector<1x48xf32> to vector<1x16xf32>
      %256 = vector.extract_strided_slice %254 {offsets = [0, 16], sizes = [1, 16], strides = [1, 1]} : vector<1x48xf32> to vector<1x16xf32>
      %257 = vector.extract_strided_slice %254 {offsets = [0, 32], sizes = [1, 16], strides = [1, 1]} : vector<1x48xf32> to vector<1x16xf32>
      %258 = vector.extract_strided_slice %248 {offsets = [0, 48], sizes = [1, 16], strides = [1, 1]} : vector<1x64xf32> to vector<1x16xf32>
      %259 = math.tanh %258 : vector<1x16xf32>
      %260 = arith.mulf %256, %243 : vector<1x16xf32>
      %261 = arith.mulf %255, %259 : vector<1x16xf32>
      %262 = arith.addf %260, %261 : vector<1x16xf32>
      %263 = math.tanh %262 : vector<1x16xf32>
      %264 = arith.mulf %257, %263 : vector<1x16xf32>
      %265 = vector.extract_strided_slice %72 {offsets = [10, 0], sizes = [1, 64], strides = [1, 1]} : vector<16x64xf32> to vector<1x64xf32>
      %cst_57 = arith.constant dense<0.000000e+00> : vector<1x64xf32>
      %266 = tpu.matmul %264, %3, %cst_57 {dimension_numbers = #tpu.dot_dimension_numbers<[1], [0], [0], [1], [0, 0, 1, 1], [], []>} : vector<1x16xf32>, vector<16x64xf32>, vector<1x64xf32> -> vector<1x64xf32>
      %267 = arith.addf %265, %266 : vector<1x64xf32>
      %268 = vector.extract_strided_slice %267 {offsets = [0, 0], sizes = [1, 48], strides = [1, 1]} : vector<1x64xf32> to vector<1x48xf32>
      %269 = arith.negf %268 : vector<1x48xf32>
      %270 = math.exp %269 : vector<1x48xf32>
      %cst_58 = arith.constant 1.000000e+00 : f32
      %271 = vector.broadcast %cst_58 : f32 to vector<1x48xf32>
      %272 = arith.addf %271, %270 : vector<1x48xf32>
      %273 = arith.divf %271, %272 : vector<1x48xf32>
      %274 = vector.extract_strided_slice %273 {offsets = [0, 0], sizes = [1, 16], strides = [1, 1]} : vector<1x48xf32> to vector<1x16xf32>
      %275 = vector.extract_strided_slice %273 {offsets = [0, 16], sizes = [1, 16], strides = [1, 1]} : vector<1x48xf32> to vector<1x16xf32>
      %276 = vector.extract_strided_slice %273 {offsets = [0, 32], sizes = [1, 16], strides = [1, 1]} : vector<1x48xf32> to vector<1x16xf32>
      %277 = vector.extract_strided_slice %267 {offsets = [0, 48], sizes = [1, 16], strides = [1, 1]} : vector<1x64xf32> to vector<1x16xf32>
      %278 = math.tanh %277 : vector<1x16xf32>
      %279 = arith.mulf %275, %262 : vector<1x16xf32>
      %280 = arith.mulf %274, %278 : vector<1x16xf32>
      %281 = arith.addf %279, %280 : vector<1x16xf32>
      %282 = math.tanh %281 : vector<1x16xf32>
      %283 = arith.mulf %276, %282 : vector<1x16xf32>
      %284 = vector.extract_strided_slice %72 {offsets = [11, 0], sizes = [1, 64], strides = [1, 1]} : vector<16x64xf32> to vector<1x64xf32>
      %cst_59 = arith.constant dense<0.000000e+00> : vector<1x64xf32>
      %285 = tpu.matmul %283, %3, %cst_59 {dimension_numbers = #tpu.dot_dimension_numbers<[1], [0], [0], [1], [0, 0, 1, 1], [], []>} : vector<1x16xf32>, vector<16x64xf32>, vector<1x64xf32> -> vector<1x64xf32>
      %286 = arith.addf %284, %285 : vector<1x64xf32>
      %287 = vector.extract_strided_slice %286 {offsets = [0, 0], sizes = [1, 48], strides = [1, 1]} : vector<1x64xf32> to vector<1x48xf32>
      %288 = arith.negf %287 : vector<1x48xf32>
      %289 = math.exp %288 : vector<1x48xf32>
      %cst_60 = arith.constant 1.000000e+00 : f32
      %290 = vector.broadcast %cst_60 : f32 to vector<1x48xf32>
      %291 = arith.addf %290, %289 : vector<1x48xf32>
      %292 = arith.divf %290, %291 : vector<1x48xf32>
      %293 = vector.extract_strided_slice %292 {offsets = [0, 0], sizes = [1, 16], strides = [1, 1]} : vector<1x48xf32> to vector<1x16xf32>
      %294 = vector.extract_strided_slice %292 {offsets = [0, 16], sizes = [1, 16], strides = [1, 1]} : vector<1x48xf32> to vector<1x16xf32>
      %295 = vector.extract_strided_slice %292 {offsets = [0, 32], sizes = [1, 16], strides = [1, 1]} : vector<1x48xf32> to vector<1x16xf32>
      %296 = vector.extract_strided_slice %286 {offsets = [0, 48], sizes = [1, 16], strides = [1, 1]} : vector<1x64xf32> to vector<1x16xf32>
      %297 = math.tanh %296 : vector<1x16xf32>
      %298 = arith.mulf %294, %281 : vector<1x16xf32>
      %299 = arith.mulf %293, %297 : vector<1x16xf32>
      %300 = arith.addf %298, %299 : vector<1x16xf32>
      %301 = math.tanh %300 : vector<1x16xf32>
      %302 = arith.mulf %295, %301 : vector<1x16xf32>
      %303 = vector.extract_strided_slice %72 {offsets = [12, 0], sizes = [1, 64], strides = [1, 1]} : vector<16x64xf32> to vector<1x64xf32>
      %cst_61 = arith.constant dense<0.000000e+00> : vector<1x64xf32>
      %304 = tpu.matmul %302, %3, %cst_61 {dimension_numbers = #tpu.dot_dimension_numbers<[1], [0], [0], [1], [0, 0, 1, 1], [], []>} : vector<1x16xf32>, vector<16x64xf32>, vector<1x64xf32> -> vector<1x64xf32>
      %305 = arith.addf %303, %304 : vector<1x64xf32>
      %306 = vector.extract_strided_slice %305 {offsets = [0, 0], sizes = [1, 48], strides = [1, 1]} : vector<1x64xf32> to vector<1x48xf32>
      %307 = arith.negf %306 : vector<1x48xf32>
      %308 = math.exp %307 : vector<1x48xf32>
      %cst_62 = arith.constant 1.000000e+00 : f32
      %309 = vector.broadcast %cst_62 : f32 to vector<1x48xf32>
      %310 = arith.addf %309, %308 : vector<1x48xf32>
      %311 = arith.divf %309, %310 : vector<1x48xf32>
      %312 = vector.extract_strided_slice %311 {offsets = [0, 0], sizes = [1, 16], strides = [1, 1]} : vector<1x48xf32> to vector<1x16xf32>
      %313 = vector.extract_strided_slice %311 {offsets = [0, 16], sizes = [1, 16], strides = [1, 1]} : vector<1x48xf32> to vector<1x16xf32>
      %314 = vector.extract_strided_slice %311 {offsets = [0, 32], sizes = [1, 16], strides = [1, 1]} : vector<1x48xf32> to vector<1x16xf32>
      %315 = vector.extract_strided_slice %305 {offsets = [0, 48], sizes = [1, 16], strides = [1, 1]} : vector<1x64xf32> to vector<1x16xf32>
      %316 = math.tanh %315 : vector<1x16xf32>
      %317 = arith.mulf %313, %300 : vector<1x16xf32>
      %318 = arith.mulf %312, %316 : vector<1x16xf32>
      %319 = arith.addf %317, %318 : vector<1x16xf32>
      %320 = math.tanh %319 : vector<1x16xf32>
      %321 = arith.mulf %314, %320 : vector<1x16xf32>
      %322 = vector.extract_strided_slice %72 {offsets = [13, 0], sizes = [1, 64], strides = [1, 1]} : vector<16x64xf32> to vector<1x64xf32>
      %cst_63 = arith.constant dense<0.000000e+00> : vector<1x64xf32>
      %323 = tpu.matmul %321, %3, %cst_63 {dimension_numbers = #tpu.dot_dimension_numbers<[1], [0], [0], [1], [0, 0, 1, 1], [], []>} : vector<1x16xf32>, vector<16x64xf32>, vector<1x64xf32> -> vector<1x64xf32>
      %324 = arith.addf %322, %323 : vector<1x64xf32>
      %325 = vector.extract_strided_slice %324 {offsets = [0, 0], sizes = [1, 48], strides = [1, 1]} : vector<1x64xf32> to vector<1x48xf32>
      %326 = arith.negf %325 : vector<1x48xf32>
      %327 = math.exp %326 : vector<1x48xf32>
      %cst_64 = arith.constant 1.000000e+00 : f32
      %328 = vector.broadcast %cst_64 : f32 to vector<1x48xf32>
      %329 = arith.addf %328, %327 : vector<1x48xf32>
      %330 = arith.divf %328, %329 : vector<1x48xf32>
      %331 = vector.extract_strided_slice %330 {offsets = [0, 0], sizes = [1, 16], strides = [1, 1]} : vector<1x48xf32> to vector<1x16xf32>
      %332 = vector.extract_strided_slice %330 {offsets = [0, 16], sizes = [1, 16], strides = [1, 1]} : vector<1x48xf32> to vector<1x16xf32>
      %333 = vector.extract_strided_slice %330 {offsets = [0, 32], sizes = [1, 16], strides = [1, 1]} : vector<1x48xf32> to vector<1x16xf32>
      %334 = vector.extract_strided_slice %324 {offsets = [0, 48], sizes = [1, 16], strides = [1, 1]} : vector<1x64xf32> to vector<1x16xf32>
      %335 = math.tanh %334 : vector<1x16xf32>
      %336 = arith.mulf %332, %319 : vector<1x16xf32>
      %337 = arith.mulf %331, %335 : vector<1x16xf32>
      %338 = arith.addf %336, %337 : vector<1x16xf32>
      %339 = math.tanh %338 : vector<1x16xf32>
      %340 = arith.mulf %333, %339 : vector<1x16xf32>
      %341 = vector.extract_strided_slice %72 {offsets = [14, 0], sizes = [1, 64], strides = [1, 1]} : vector<16x64xf32> to vector<1x64xf32>
      %cst_65 = arith.constant dense<0.000000e+00> : vector<1x64xf32>
      %342 = tpu.matmul %340, %3, %cst_65 {dimension_numbers = #tpu.dot_dimension_numbers<[1], [0], [0], [1], [0, 0, 1, 1], [], []>} : vector<1x16xf32>, vector<16x64xf32>, vector<1x64xf32> -> vector<1x64xf32>
      %343 = arith.addf %341, %342 : vector<1x64xf32>
      %344 = vector.extract_strided_slice %343 {offsets = [0, 0], sizes = [1, 48], strides = [1, 1]} : vector<1x64xf32> to vector<1x48xf32>
      %345 = arith.negf %344 : vector<1x48xf32>
      %346 = math.exp %345 : vector<1x48xf32>
      %cst_66 = arith.constant 1.000000e+00 : f32
      %347 = vector.broadcast %cst_66 : f32 to vector<1x48xf32>
      %348 = arith.addf %347, %346 : vector<1x48xf32>
      %349 = arith.divf %347, %348 : vector<1x48xf32>
      %350 = vector.extract_strided_slice %349 {offsets = [0, 0], sizes = [1, 16], strides = [1, 1]} : vector<1x48xf32> to vector<1x16xf32>
      %351 = vector.extract_strided_slice %349 {offsets = [0, 16], sizes = [1, 16], strides = [1, 1]} : vector<1x48xf32> to vector<1x16xf32>
      %352 = vector.extract_strided_slice %349 {offsets = [0, 32], sizes = [1, 16], strides = [1, 1]} : vector<1x48xf32> to vector<1x16xf32>
      %353 = vector.extract_strided_slice %343 {offsets = [0, 48], sizes = [1, 16], strides = [1, 1]} : vector<1x64xf32> to vector<1x16xf32>
      %354 = math.tanh %353 : vector<1x16xf32>
      %355 = arith.mulf %351, %338 : vector<1x16xf32>
      %356 = arith.mulf %350, %354 : vector<1x16xf32>
      %357 = arith.addf %355, %356 : vector<1x16xf32>
      %358 = math.tanh %357 : vector<1x16xf32>
      %359 = arith.mulf %352, %358 : vector<1x16xf32>
      %360 = vector.extract_strided_slice %72 {offsets = [15, 0], sizes = [1, 64], strides = [1, 1]} : vector<16x64xf32> to vector<1x64xf32>
      %cst_67 = arith.constant dense<0.000000e+00> : vector<1x64xf32>
      %361 = tpu.matmul %359, %3, %cst_67 {dimension_numbers = #tpu.dot_dimension_numbers<[1], [0], [0], [1], [0, 0, 1, 1], [], []>} : vector<1x16xf32>, vector<16x64xf32>, vector<1x64xf32> -> vector<1x64xf32>
      %362 = arith.addf %360, %361 : vector<1x64xf32>
      %363 = vector.extract_strided_slice %362 {offsets = [0, 0], sizes = [1, 48], strides = [1, 1]} : vector<1x64xf32> to vector<1x48xf32>
      %364 = arith.negf %363 : vector<1x48xf32>
      %365 = math.exp %364 : vector<1x48xf32>
      %cst_68 = arith.constant 1.000000e+00 : f32
      %366 = vector.broadcast %cst_68 : f32 to vector<1x48xf32>
      %367 = arith.addf %366, %365 : vector<1x48xf32>
      %368 = arith.divf %366, %367 : vector<1x48xf32>
      %369 = vector.extract_strided_slice %368 {offsets = [0, 0], sizes = [1, 16], strides = [1, 1]} : vector<1x48xf32> to vector<1x16xf32>
      %370 = vector.extract_strided_slice %368 {offsets = [0, 16], sizes = [1, 16], strides = [1, 1]} : vector<1x48xf32> to vector<1x16xf32>
      %371 = vector.extract_strided_slice %368 {offsets = [0, 32], sizes = [1, 16], strides = [1, 1]} : vector<1x48xf32> to vector<1x16xf32>
      %372 = vector.extract_strided_slice %362 {offsets = [0, 48], sizes = [1, 16], strides = [1, 1]} : vector<1x64xf32> to vector<1x16xf32>
      %373 = math.tanh %372 : vector<1x16xf32>
      %374 = arith.mulf %370, %357 : vector<1x16xf32>
      %375 = arith.mulf %369, %373 : vector<1x16xf32>
      %376 = arith.addf %374, %375 : vector<1x16xf32>
      %377 = math.tanh %376 : vector<1x16xf32>
      %378 = arith.mulf %371, %377 : vector<1x16xf32>
      %379 = tpu.concatenate %93, %112, %131, %150, %169, %188, %207, %226, %245, %264, %283, %302, %321, %340, %359, %378 in 0 : vector<1x16xf32>, vector<1x16xf32>, vector<1x16xf32>, vector<1x16xf32>, vector<1x16xf32>, vector<1x16xf32>, vector<1x16xf32>, vector<1x16xf32>, vector<1x16xf32>, vector<1x16xf32>, vector<1x16xf32>, vector<1x16xf32>, vector<1x16xf32>, vector<1x16xf32>, vector<1x16xf32>, vector<1x16xf32> -> vector<16x16xf32>
      %cst_69 = arith.constant dense<0.000000e+00> : vector<16x2xf32>
      %380 = tpu.matmul %379, %5, %cst_69 {dimension_numbers = #tpu.dot_dimension_numbers<[1], [0], [0], [1], [0, 0, 1, 1], [], []>} : vector<16x16xf32>, vector<16x2xf32>, vector<16x2xf32> -> vector<16x2xf32>
      %381 = vector.broadcast %6 : vector<1x2xf32> to vector<16x2xf32>
      %382 = arith.addf %380, %381 : vector<16x2xf32>
      %383 = math.tanh %382 : vector<16x2xf32>
      %cst_70 = arith.constant 1.000000e-01 : f32
      %384 = vector.broadcast %cst_70 : f32 to vector<16x2xf32>
      %385 = arith.mulf %384, %383 : vector<16x2xf32>
      %386 = arith.addf %arg11, %385 : vector<16x2xf32>
      %cst_71 = arith.constant 0.000000e+00 : f32
      %cst_72 = arith.constant 1.000000e+00 : f32
      %387 = vector.broadcast %cst_71 : f32 to vector<16x2xf32>
      %388 = arith.maximumf %387, %386 : vector<16x2xf32>
      %389 = vector.broadcast %cst_72 : f32 to vector<16x2xf32>
      %390 = arith.minimumf %389, %388 : vector<16x2xf32>
      scf.yield %390 : vector<16x2xf32>
    }
    %c8_i32_18 = arith.constant 8 : i32
    return
  }
  func.func @transform_0(%arg0: i32) -> (i32, i32, i32) {
    %c0_i32 = arith.constant 0 : i32
    %c0_i32_0 = arith.constant 0 : i32
    %c0_i32_1 = arith.constant 0 : i32
    return %arg0, %c0_i32, %c0_i32_0 : i32, i32, i32
  }
  func.func @transform_1(%arg0: i32) -> (i32, i32, i32, i32) {
    %c0_i32 = arith.constant 0 : i32
    %c0_i32_0 = arith.constant 0 : i32
    %c0_i32_1 = arith.constant 0 : i32
    %c0_i32_2 = arith.constant 0 : i32
    return %arg0, %c0_i32, %c0_i32_0, %c0_i32_1 : i32, i32, i32, i32
  }
  func.func @transform_2(%arg0: i32) -> (i32, i32) {
    %c0_i32 = arith.constant 0 : i32
    %c0_i32_0 = arith.constant 0 : i32
    %c0_i32_1 = arith.constant 0 : i32
    return %c0_i32, %c0_i32_0 : i32, i32
  }
  func.func @transform_3(%arg0: i32) -> (i32, i32) {
    %c0_i32 = arith.constant 0 : i32
    %c0_i32_0 = arith.constant 0 : i32
    %c0_i32_1 = arith.constant 0 : i32
    return %c0_i32, %c0_i32_0 : i32, i32
  }
  func.func @transform_4(%arg0: i32) -> (i32, i32) {
    %c0_i32 = arith.constant 0 : i32
    %c0_i32_0 = arith.constant 0 : i32
    %c0_i32_1 = arith.constant 0 : i32
    return %c0_i32, %c0_i32_0 : i32, i32
  }
  func.func @transform_5(%arg0: i32) -> (i32, i32) {
    %c0_i32 = arith.constant 0 : i32
    %c0_i32_0 = arith.constant 0 : i32
    %c0_i32_1 = arith.constant 0 : i32
    return %c0_i32, %c0_i32_0 : i32, i32
  }
  func.func @transform_6(%arg0: i32) -> (i32, i32) {
    %c0_i32 = arith.constant 0 : i32
    %c0_i32_0 = arith.constant 0 : i32
    %c0_i32_1 = arith.constant 0 : i32
    return %c0_i32, %c0_i32_0 : i32, i32
  }
  func.func @transform_7(%arg0: i32) -> (i32, i32) {
    %c0_i32 = arith.constant 0 : i32
    %c0_i32_0 = arith.constant 0 : i32
    %c0_i32_1 = arith.constant 0 : i32
    return %c0_i32, %c0_i32_0 : i32, i32
  }
  func.func @transform_8(%arg0: i32) -> (i32, i32, i32, i32) {
    %c0_i32 = arith.constant 0 : i32
    %c0_i32_0 = arith.constant 0 : i32
    %c0_i32_1 = arith.constant 0 : i32
    %c0_i32_2 = arith.constant 0 : i32
    return %arg0, %c0_i32, %c0_i32_0, %c0_i32_1 : i32, i32, i32, i32
  }
}

</mosaic_0001>

<llo_original>
// kernel: tile.10
$region0: #{tile.10}
  #allocation0 [shape = 's32[1]{0}', space=sflag, size = 0x4, scoped, tag = 'scoped memory for tile.10']
  %s0 = inlined_call_operand.vmem [shape: f32[16], index: 0, kind: input, shape index: {}]
  %s1 = inlined_call_operand.vmem [shape: f32[16,1,1,16], index: 1, kind: output, shape index: {}]
  // Predicated region
  $region2: #{tile.10} parent=0 // pred_check
    _
  $region3: #{tile.10} parent=0 // pred_check_branch
    %3 = sbr.rel (0) target = $region5
  $region4: #{tile.10} parent=0 // pred_region
    _
  $region5: #{tile.10} parent=0 // pred_fallthru
    _
  %v4 = vld [vmem:[%s0] ss:$0 sm:$0xff]
  %5 = vst [vmem:[%s1] sm:$0xff] %v4
  %s6 = scalar_lea.vmem %s1, 8
  %7 = vst [vmem:[%s6] sm:$0xff] %v4

// kernel: tile.11
$region0: #{tile.11}
  %s0 = inlined_call_operand.vmem [shape: f32[16,1,1,16], index: 0, kind: input, shape index: {}]
  %s1 = inlined_call_operand.vmem [shape: f32[1,256], index: 1, kind: output, shape index: {}]
  $region1: #{tile.11} parent=0
    #allocation0 [shape = 'u8[8192]{0}', space=vmem, size = 0x2000, scoped, tag = 'scoped mem for output reshape']
    %s2 = smov 3
    %v3 = vld [vmem:[%s0] ss:$8 sm:%s2]
    %vm4 = vcmask 130048
    %5 = vst.msk [vmem:[#allocation0] ss:$8 sm:$0x3] %vm4, %v3
    %s6 = scalar_lea.vmem %s0, 7
    %s7 = smov 3
    %v8 = vld [vmem:[%s6] ss:$8 sm:%s7]
    %9 = vrot.lane.b32.xlu0 %v8, 112
    %v10 = vpop.permute.xlu0 %9
    %vm11 = vcmask 1048448
    %12 = vst.msk [vmem:[#allocation0] ss:$8 sm:$0x3] %vm11, %v10
    %s13 = scalar_lea.vmem %s0, 6
    %s14 = smov 3
    %v15 = vld [vmem:[%s13] ss:$8 sm:%s14]
    %16 = vrot.lane.b32.xlu0 %v15, 96
    %v17 = vpop.permute.xlu0 %16
    %vm18 = vcmask 917248
    %19 = vst.msk [vmem:[#allocation0] ss:$8 sm:$0x3] %vm18, %v17
    %s20 = scalar_lea.vmem %s0, 5
    %s21 = smov 3
    %v22 = vld [vmem:[%s20] ss:$8 sm:%s21]
    %23 = vrot.lane.b32.xlu0 %v22, 80
    %v24 = vpop.permute.xlu0 %23
    %vm25 = vcmask 786048
    %26 = vst.msk [vmem:[#allocation0] ss:$8 sm:$0x3] %vm25, %v24
    %s27 = scalar_lea.vmem %s0, 4
    %s28 = smov 3
    %v29 = vld [vmem:[%s27] ss:$8 sm:%s28]
    %30 = vrot.lane.b32.xlu0 %v29, 64
    %v31 = vpop.permute.xlu0 %30
    %vm32 = vcmask 654848
    %33 = vst.msk [vmem:[#allocation0] ss:$8 sm:$0x3] %vm32, %v31
    %s34 = scalar_lea.vmem %s0, 3
    %s35 = smov 3
    %v36 = vld [vmem:[%s34] ss:$8 sm:%s35]
    %37 = vrot.lane.b32.xlu0 %v36, 48
    %v38 = vpop.permute.xlu0 %37
    %vm39 = vcmask 523648
    %40 = vst.msk [vmem:[#allocation0] ss:$8 sm:$0x3] %vm39, %v38
    %s41 = scalar_lea.vmem %s0, 2
    %s42 = smov 3
    %v43 = vld [vmem:[%s41] ss:$8 sm:%s42]
    %44 = vrot.lane.b32.xlu0 %v43, 32
    %v45 = vpop.permute.xlu0 %44
    %vm46 = vcmask 392448
    %47 = vst.msk [vmem:[#allocation0] ss:$8 sm:$0x3] %vm46, %v45
    %s48 = scalar_lea.vmem %s0, 1
    %s49 = smov 3
    %v50 = vld [vmem:[%s48] ss:$8 sm:%s49]
    %51 = vrot.lane.b32.xlu0 %v50, 16
    %v52 = vpop.permute.xlu0 %51
    %vm53 = vcmask 261248
    %54 = vst.msk [vmem:[#allocation0] ss:$8 sm:$0x3] %vm53, %v52
    %s56 = sshll.u32 1, 1
    %s57 = ssub.s32 %s56, 1
    %v59 = vld [vmem:[#allocation0] sm:%s57]
    %s60 = sshll.u32 1, 1
    %s61 = ssub.s32 %s60, 1
    %62 = vst [vmem:[%s1] sm:%s61] %v59
    %s63 = scalar_lea.vmem [#allocation0], 8
    %v64 = vld [vmem:[%s63] sm:%s57]
    %s65 = sshll.u32 1, 1
    %s66 = ssub.s32 %s65, 1
    %s67 = scalar_lea.vmem %s1, 1
    %68 = vst [vmem:[%s67] sm:%s66] %v64

// kernel: obsbot_forward.1
$region0: #{obsbot_forward.1}
  #allocation0 [shape = 'u32[]', space=smem, size = 0x4, offset = 0x4, fixed_abs, tag = 'smem constant byte address 0x4 - core index']
  #allocation1 [shape = 'u32[144,128]{1,0:T(1,128)}', space=vmem, size = 0x12000, scoped, tag = 'internal scratch']
  %s0 = inlined_call_operand.vmem [shape: f32[2,16,2], index: 0, kind: input, shape index: {}]
  %s1 = inlined_call_operand.vmem [shape: f32[2,8,2,256], index: 1, kind: input, shape index: {}]
  %s2 = inlined_call_operand.vmem [shape: f32[2,256], index: 2, kind: input, shape index: {}]
  %s3 = inlined_call_operand.vmem [shape: f32[3,64], index: 3, kind: input, shape index: {}]
  %s4 = inlined_call_operand.vmem [shape: f32[16,64], index: 4, kind: input, shape index: {}]
  %s5 = inlined_call_operand.vmem [shape: f32[1,64], index: 5, kind: input, shape index: {}]
  %s6 = inlined_call_operand.vmem [shape: f32[16,2], index: 6, kind: input, shape index: {}]
  %s7 = inlined_call_operand.vmem [shape: f32[1,2], index: 7, kind: input, shape index: {}]
  %s8 = inlined_call_operand.vmem [shape: f32[2,8,2,256], index: 8, kind: output, shape index: {}]
  %s9 = sld [smem:[#allocation0]]
  $region72: #{obsbot_forward.1} parent=0
    _
  %s11 = ssub.s32 1, %s9
  %s12 = scalar_select 0, %s11, %s9
  loop: start=0, step=1, limit=4
  $region2: #{obsbot_forward.1} parent=0 // loop_pre_header
    _
  $region3: #{obsbot_forward.1} parent=0 // loop_header
    %s14 = sphi 0, %s18
    %p15 = scmp.ge.s32.totalorder %s14, 4
    %s24 = sphi 0, %s26
    %s27 = sphi 0, %s24
    %s28 = sphi 0, %s27
    %s44 = sphi 0, %s28
    %s50 = sphi 0, %s52
    %s53 = sphi 0, %s50
    %s54 = sphi 0, %s53
    %s70 = sphi 0, %s54
    %s74 = sphi 0, %s74
    %s76 = sphi 0, %s74
    %s77 = sphi 0, %s76
    %s91 = sphi 0, %s77
    %s95 = sphi 0, %s95
    %s97 = sphi 0, %s95
    %s98 = sphi 0, %s97
    %s112 = sphi 0, %s98
    %s116 = sphi 0, %s116
    %s118 = sphi 0, %s116
    %s119 = sphi 0, %s118
    %s133 = sphi 0, %s119
    %s137 = sphi 0, %s137
    %s139 = sphi 0, %s137
    %s140 = sphi 0, %s139
    %s154 = sphi 0, %s140
    %s158 = sphi 0, %s158
    %s160 = sphi 0, %s158
    %s161 = sphi 0, %s160
    %s175 = sphi 0, %s161
    %s179 = sphi 0, %s179
    %s181 = sphi 0, %s179
    %s182 = sphi 0, %s181
    %s196 = sphi 0, %s182
    %s202 = sphi 0, %s204
    %s205 = sphi 0, %s202
    %s206 = sphi 0, %s205
    %s222 = sphi 0, %s206
  $region4: #{obsbot_forward.1} parent=0 // loop_header_branch
    %17 = sbr.rel (%p15) target = $region8
  $region5: #{obsbot_forward.1} parent=0 // loop_body
    %s19 = ssub.s32 %s14, 1
    %s20 = ssub.s32 %s14, 2
    %s21 = sadd.s32 %s14, 1
    %s22 = ssub.s32 %s14, %s21
    %p23 = scmp.eq.s32.totalorder %s22, 0
    %s25 = sadd.s32 %s24, 1
    %s26 = scalar_select %p23, %s24, %s25
    %p29 = pneg %p23
    %p30 = scmp.eq.s32.totalorder %s14, 1
    %p31 = por %p29, %p30
    %p32 = scmp.ne.s32.totalorder %s24, %s27
    %p33 = scmp.eq.s32.totalorder %s14, 0
    %p34 = por %p32, %p33
    %p35 = scmp.ne.s32.totalorder %s24, %s27
    %p36 = scmp.eq.s32.totalorder %s19, 1
    %p37 = por %p35, %p36
    %p38 = scmp.ne.s32.totalorder %s27, %s28
    %p39 = scmp.eq.s32.totalorder %s19, 0
    %p40 = por %p38, %p39
    %p41 = scmp.ne.s32.totalorder %s27, %s28
    %p42 = scmp.eq.s32.totalorder %s20, 1
    %p43 = por %p41, %p42
    %p45 = scmp.ne.s32.totalorder %s28, %s44
    %p46 = scmp.eq.s32.totalorder %s20, 0
    %p47 = por %p45, %p46
    %s48 = ssub.s32 %s14, %s21
    %p49 = scmp.eq.s32.totalorder %s48, 0
    %s51 = sadd.s32 %s50, 1
    %s52 = scalar_select %p49, %s50, %s51
    %p55 = pneg %p49
    %p56 = scmp.eq.s32.totalorder %s14, 1
    %p57 = por %p55, %p56
    %p58 = scmp.ne.s32.totalorder %s50, %s53
    %p59 = scmp.eq.s32.totalorder %s14, 0
    %p60 = por %p58, %p59
    %p61 = scmp.ne.s32.totalorder %s50, %s53
    %p62 = scmp.eq.s32.totalorder %s19, 1
    %p63 = por %p61, %p62
    %p64 = scmp.ne.s32.totalorder %s53, %s54
    %p65 = scmp.eq.s32.totalorder %s19, 0
    %p66 = por %p64, %p65
    %p67 = scmp.ne.s32.totalorder %s53, %s54
    %p68 = scmp.eq.s32.totalorder %s20, 1
    %p69 = por %p67, %p68
    %p71 = scmp.ne.s32.totalorder %s54, %s70
    %p72 = scmp.eq.s32.totalorder %s20, 0
    %p73 = por %p71, %p72
    %s75 = sadd.s32 %s74, 1
    %p78 = scmp.eq.s32.totalorder %s14, 1
    %p79 = scmp.ne.s32.totalorder %s74, %s76
    %p80 = scmp.eq.s32.totalorder %s14, 0
    %p81 = por %p79, %p80
    %p82 = scmp.ne.s32.totalorder %s74, %s76
    %p83 = scmp.eq.s32.totalorder %s19, 1
    %p84 = por %p82, %p83
    %p85 = scmp.ne.s32.totalorder %s76, %s77
    %p86 = scmp.eq.s32.totalorder %s19, 0
    %p87 = por %p85, %p86
    %p88 = scmp.ne.s32.totalorder %s76, %s77
    %p89 = scmp.eq.s32.totalorder %s20, 1
    %p90 = por %p88, %p89
    %p92 = scmp.ne.s32.totalorder %s77, %s91
    %p93 = scmp.eq.s32.totalorder %s20, 0
    %p94 = por %p92, %p93
    %s96 = sadd.s32 %s95, 1
    %p99 = scmp.eq.s32.totalorder %s14, 1
    %p100 = scmp.ne.s32.totalorder %s95, %s97
    %p101 = scmp.eq.s32.totalorder %s14, 0
    %p102 = por %p100, %p101
    %p103 = scmp.ne.s32.totalorder %s95, %s97
    %p104 = scmp.eq.s32.totalorder %s19, 1
    %p105 = por %p103, %p104
    %p106 = scmp.ne.s32.totalorder %s97, %s98
    %p107 = scmp.eq.s32.totalorder %s19, 0
    %p108 = por %p106, %p107
    %p109 = scmp.ne.s32.totalorder %s97, %s98
    %p110 = scmp.eq.s32.totalorder %s20, 1
    %p111 = por %p109, %p110
    %p113 = scmp.ne.s32.totalorder %s98, %s112
    %p114 = scmp.eq.s32.totalorder %s20, 0
    %p115 = por %p113, %p114
    %s117 = sadd.s32 %s116, 1
    %p120 = scmp.eq.s32.totalorder %s14, 1
    %p121 = scmp.ne.s32.totalorder %s116, %s118
    %p122 = scmp.eq.s32.totalorder %s14, 0
    %p123 = por %p121, %p122
    %p124 = scmp.ne.s32.totalorder %s116, %s118
    %p125 = scmp.eq.s32.totalorder %s19, 1
    %p126 = por %p124, %p125
    %p127 = scmp.ne.s32.totalorder %s118, %s119
    %p128 = scmp.eq.s32.totalorder %s19, 0
    %p129 = por %p127, %p128
    %p130 = scmp.ne.s32.totalorder %s118, %s119
    %p131 = scmp.eq.s32.totalorder %s20, 1
    %p132 = por %p130, %p131
    %p134 = scmp.ne.s32.totalorder %s119, %s133
    %p135 = scmp.eq.s32.totalorder %s20, 0
    %p136 = por %p134, %p135
    %s138 = sadd.s32 %s137, 1
    %p141 = scmp.eq.s32.totalorder %s14, 1
    %p142 = scmp.ne.s32.totalorder %s137, %s139
    %p143 = scmp.eq.s32.totalorder %s14, 0
    %p144 = por %p142, %p143
    %p145 = scmp.ne.s32.totalorder %s137, %s139
    %p146 = scmp.eq.s32.totalorder %s19, 1
    %p147 = por %p145, %p146
    %p148 = scmp.ne.s32.totalorder %s139, %s140
    %p149 = scmp.eq.s32.totalorder %s19, 0
    %p150 = por %p148, %p149
    %p151 = scmp.ne.s32.totalorder %s139, %s140
    %p152 = scmp.eq.s32.totalorder %s20, 1
    %p153 = por %p151, %p152
    %p155 = scmp.ne.s32.totalorder %s140, %s154
    %p156 = scmp.eq.s32.totalorder %s20, 0
    %p157 = por %p155, %p156
    %s159 = sadd.s32 %s158, 1
    %p162 = scmp.eq.s32.totalorder %s14, 1
    %p163 = scmp.ne.s32.totalorder %s158, %s160
    %p164 = scmp.eq.s32.totalorder %s14, 0
    %p165 = por %p163, %p164
    %p166 = scmp.ne.s32.totalorder %s158, %s160
    %p167 = scmp.eq.s32.totalorder %s19, 1
    %p168 = por %p166, %p167
    %p169 = scmp.ne.s32.totalorder %s160, %s161
    %p170 = scmp.eq.s32.totalorder %s19, 0
    %p171 = por %p169, %p170
    %p172 = scmp.ne.s32.totalorder %s160, %s161
    %p173 = scmp.eq.s32.totalorder %s20, 1
    %p174 = por %p172, %p173
    %p176 = scmp.ne.s32.totalorder %s161, %s175
    %p177 = scmp.eq.s32.totalorder %s20, 0
    %p178 = por %p176, %p177
    %s180 = sadd.s32 %s179, 1
    %p183 = scmp.eq.s32.totalorder %s14, 1
    %p184 = scmp.ne.s32.totalorder %s179, %s181
    %p185 = scmp.eq.s32.totalorder %s14, 0
    %p186 = por %p184, %p185
    %p187 = scmp.ne.s32.totalorder %s179, %s181
    %p188 = scmp.eq.s32.totalorder %s19, 1
    %p189 = por %p187, %p188
    %p190 = scmp.ne.s32.totalorder %s181, %s182
    %p191 = scmp.eq.s32.totalorder %s19, 0
    %p192 = por %p190, %p191
    %p193 = scmp.ne.s32.totalorder %s181, %s182
    %p194 = scmp.eq.s32.totalorder %s20, 1
    %p195 = por %p193, %p194
    %p197 = scmp.ne.s32.totalorder %s182, %s196
    %p198 = scmp.eq.s32.totalorder %s20, 0
    %p199 = por %p197, %p198
    %s200 = ssub.s32 %s14, %s21
    %p201 = scmp.eq.s32.totalorder %s200, 0
    %s203 = sadd.s32 %s202, 1
    %s204 = scalar_select %p201, %s202, %s203
    %p207 = pneg %p201
    %p208 = scmp.eq.s32.totalorder %s14, 1
    %p209 = por %p207, %p208
    %p210 = scmp.ne.s32.totalorder %s202, %s205
    %p211 = scmp.eq.s32.totalorder %s14, 0
    %p212 = por %p210, %p211
    %p213 = scmp.ne.s32.totalorder %s202, %s205
    %p214 = scmp.eq.s32.totalorder %s19, 1
    %p215 = por %p213, %p214
    %p216 = scmp.ne.s32.totalorder %s205, %s206
    %p217 = scmp.eq.s32.totalorder %s19, 0
    %p218 = por %p216, %p217
    %p219 = scmp.ne.s32.totalorder %s205, %s206
    %p220 = scmp.eq.s32.totalorder %s20, 1
    %p221 = por %p219, %p220
    %p223 = scmp.ne.s32.totalorder %s206, %s222
    %p224 = scmp.eq.s32.totalorder %s20, 0
    %p225 = por %p223, %p224
    %p226 = scmp.le.s32.totalorder 1, %s14
    %p227 = scmp.lt.s32.totalorder %s14, 3
    %p228 = pnand %p226, %p227
    %p229 = pneg %p228
    // Predicated region
    $region9: #{obsbot_forward.1} parent=5 // pred_check
      _
    $region10: #{obsbot_forward.1} parent=5 // pred_check_branch
      %231 = sbr.rel (%p228) target = $region12
    $region11: #{obsbot_forward.1} parent=5 // pred_region
      %s232 = ssub.s32 %s14, 1
      // Predicated region
      $region13: #{obsbot_forward.1} parent=11 // pred_check
        %p233 = pneg %p87
      $region14: #{obsbot_forward.1} parent=11 // pred_check_branch
        %235 = sbr.rel (%p233) target = $region16
      $region15: #{obsbot_forward.1} parent=11 // pred_region
        _
      $region16: #{obsbot_forward.1} parent=11 // pred_fallthru
        _
      // Predicated region
      $region17: #{obsbot_forward.1} parent=11 // pred_check
        %p236 = pneg %p108
      $region18: #{obsbot_forward.1} parent=11 // pred_check_branch
        %238 = sbr.rel (%p236) target = $region20
      $region19: #{obsbot_forward.1} parent=11 // pred_region
        _
      $region20: #{obsbot_forward.1} parent=11 // pred_fallthru
        _
      // Predicated region
      $region21: #{obsbot_forward.1} parent=11 // pred_check
        %p239 = pneg %p129
      $region22: #{obsbot_forward.1} parent=11 // pred_check_branch
        %241 = sbr.rel (%p239) target = $region24
      $region23: #{obsbot_forward.1} parent=11 // pred_region
        _
      $region24: #{obsbot_forward.1} parent=11 // pred_fallthru
        _
      // Predicated region
      $region25: #{obsbot_forward.1} parent=11 // pred_check
        %p242 = pneg %p150
      $region26: #{obsbot_forward.1} parent=11 // pred_check_branch
        %244 = sbr.rel (%p242) target = $region28
      $region27: #{obsbot_forward.1} parent=11 // pred_region
        _
      $region28: #{obsbot_forward.1} parent=11 // pred_fallthru
        _
      // Predicated region
      $region29: #{obsbot_forward.1} parent=11 // pred_check
        %p245 = pneg %p171
      $region30: #{obsbot_forward.1} parent=11 // pred_check_branch
        %247 = sbr.rel (%p245) target = $region32
      $region31: #{obsbot_forward.1} parent=11 // pred_region
        _
      $region32: #{obsbot_forward.1} parent=11 // pred_fallthru
        _
      // Predicated region
      $region33: #{obsbot_forward.1} parent=11 // pred_check
        %p248 = pneg %p192
      $region34: #{obsbot_forward.1} parent=11 // pred_check_branch
        %250 = sbr.rel (%p248) target = $region36
      $region35: #{obsbot_forward.1} parent=11 // pred_region
        _
      $region36: #{obsbot_forward.1} parent=11 // pred_fallthru
        _
    $region12: #{obsbot_forward.1} parent=5 // pred_fallthru
      _
    %p251 = scmp.lt.s32.totalorder %s14, 2
    // Predicated region
    $region37: #{obsbot_forward.1} parent=5 // pred_check
      %p252 = pneg %p251
    $region38: #{obsbot_forward.1} parent=5 // pred_check_branch
      %254 = sbr.rel (%p252) target = $region40
    $region39: #{obsbot_forward.1} parent=5 // pred_region
      // Predicated region
      $region41: #{obsbot_forward.1} parent=39 // pred_check
        %p255 = pneg %p34
      $region42: #{obsbot_forward.1} parent=39 // pred_check_branch
        %257 = sbr.rel (%p255) target = $region44
      $region43: #{obsbot_forward.1} parent=39 // pred_region
        %p258 = scmp.lt.s32.totalorder %s14, 1
        %s259 = scalar_select %p258, %s14, 1
        %s260 = smul.addr %s259, 2
        %s261 = smul.addr %s260, 8
        %s262 = scalar_lea.vmem %s0, %s261
      $region44: #{obsbot_forward.1} parent=39 // pred_fallthru
        _
      // Predicated region
      $region45: #{obsbot_forward.1} parent=39 // pred_check
        %p263 = pneg %p60
      $region46: #{obsbot_forward.1} parent=39 // pred_check_branch
        %265 = sbr.rel (%p263) target = $region48
      $region47: #{obsbot_forward.1} parent=39 // pred_region
        %p266 = scmp.lt.s32.totalorder %s14, 1
        %s267 = scalar_select %p266, %s14, 1
        %s268 = smul.addr %s267, 16
        %s269 = smul.addr %s268, 2
        %s270 = scalar_lea.vmem %s1, %s269
      $region48: #{obsbot_forward.1} parent=39 // pred_fallthru
        _
    $region40: #{obsbot_forward.1} parent=5 // pred_fallthru
      _
    %p271 = scmp.le.s32.totalorder 1, %s14
    %p272 = scmp.lt.s32.totalorder %s14, 3
    %p273 = pnand %p271, %p272
    %p274 = pneg %p273
    // Predicated region
    $region49: #{obsbot_forward.1} parent=5 // pred_check
      _
    $region50: #{obsbot_forward.1} parent=5 // pred_check_branch
      %276 = sbr.rel (%p273) target = $region52
    $region51: #{obsbot_forward.1} parent=5 // pred_region
      %s277 = ssub.s32 %s14, 1
      %p278 = scmp.lt.s32.totalorder %s19, 1
      %s279 = scalar_select %p278, %s19, 1
      %s280 = smul.addr %s279, 2
      %s281 = smul.addr %s280, 8
      %s282 = scalar_lea.vmem %s0, %s281
      %p283 = pneg %p40
      %p284 = pneg %p37
      %p285 = scmp.lt.s32.totalorder %s19, 1
      %s286 = scalar_select %p285, %s19, 1
      %s287 = smul.addr %s286, 16
      %s288 = smul.addr %s287, 2
      %s289 = scalar_lea.vmem %s1, %s288
      %p290 = pneg %p66
      %p291 = pneg %p63
      %p292 = pneg %p87
      %p293 = pneg %p84
      %p294 = pneg %p108
      %p295 = pneg %p105
      %p296 = pneg %p129
      %p297 = pneg %p126
      %p298 = pneg %p150
      %p299 = pneg %p147
      %p300 = pneg %p171
      %p301 = pneg %p168
      %p302 = pneg %p192
      %p303 = pneg %p189
      %p304 = pneg %p218
      %p305 = pneg %p215
      %p306 = scmp.lt.s32.totalorder %s19, 1
      %s307 = scalar_select %p306, %s19, 1
      %s308 = smul.addr %s307, 16
      %s309 = smul.addr %s308, 2
      %s310 = scalar_lea.vmem %s8, %s309
      %p311 = scmp.lt.s32.totalorder %s19, 1
      %s312 = scalar_select %p311, %s19, 1
      %s313 = smul.addr %s312, 2
      %s314 = smul.addr %s313, 8
      %s315 = scalar_lea.vmem %s0, %s314
      %p316 = scmp.lt.s32.totalorder %s19, 1
      %s317 = scalar_select %p316, %s19, 1
      %s318 = smul.addr %s317, 16
      %s319 = smul.addr %s318, 2
      %s320 = scalar_lea.vmem %s1, %s319
      %p321 = scmp.lt.s32.totalorder %s19, 1
      %s322 = scalar_select %p321, %s19, 1
      %s323 = smul.addr %s322, 16
      %s324 = smul.addr %s323, 2
      %s325 = scalar_lea.vmem %s8, %s324
      %v326 = vld [vmem:[%s2] ss:$2 sm:$0x3]
      %s327 = scalar_lea.vmem %s2, 1
      %v328 = vld [vmem:[%s327] ss:$2 sm:$0x3]
      %v329 = vld [vmem:[%s3] sm:$0x7]
      %v330 = vld [vmem:[%s4] sm:$0xff]
      %v331 = vld [vmem:[%s4 + $0x8] sm:$0xff]
      %v332 = vld [vmem:[%s5] sm:$0x1]
      %v333 = vld [vmem:[%s6] sm:$0xff]
      %v334 = vld [vmem:[%s6 + $0x8] sm:$0xff]
      %v335 = vld [vmem:[%s7] sm:$0x1]
      %v336 = vld [vmem:[%s315] sm:$0xff]
      %v337 = vld [vmem:[%s315 + $0x8] sm:$0xff]
      loop: start=0, step=1, limit=8
      $region53: #{obsbot_forward.1} parent=51 // loop_pre_header
        _
      $region54: #{obsbot_forward.1} parent=51 // loop_header
        %s339 = sphi 0, %s343
        %p340 = scmp.ge.s32.totalorder %s339, 8
        %v344 = vphi %v336, %v2557
        %v345 = vphi %v337, %v2558
      $region55: #{obsbot_forward.1} parent=51 // loop_header_branch
        %342 = sbr.rel (%p340) target = $region59
      $region56: #{obsbot_forward.1} parent=51 // loop_body
        %s346 = smul.u32 %s339, 2
        %s347 = smul.addr %s346, 2
        %s348 = scalar_lea.vmem %s320, %s347
        %v349 = vld [vmem:[%s348] sm:$0xf]
        %v350 = vmul.f32 %v344, 15.0
        %v351 = vmul.f32 %v345, 15.0
        %v353 = vlaneseq
        %v354 = vshrl.u32 %v353, 7
        %v355 = vsub.s32 0, %v354
        %v356 = vrot.slane %v326, %v355
        %v357 = vlaneseq
        %v358 = vshrl.u32 %v357, 7
        %v359 = vsub.s32 1, %v358
        %v360 = vrot.slane %v326, %v359
        %364 = vset.pattern.permute.xlu0 0
        %365 = vperm.xlu0 %364, %v350
        %v366 = vpop.permute.xlu0 %365
        %369 = vset.pattern.permute.xlu0 0
        %370 = vperm.xlu0 %369, %v351
        %v371 = vpop.permute.xlu0 %370
        %v373 = vsub.f32 %v356, %v366
        %v374 = vsub.f32 %v360, %v366
        %v375 = vsub.f32 %v356, %v371
        %v376 = vsub.f32 %v360, %v371
        %v377 = vand.u32 2147483647, %v373
        %v378 = vand.u32 2147483647, %v374
        %v379 = vand.u32 2147483647, %v375
        %v380 = vand.u32 2147483647, %v376
        %v382 = vlaneseq
        %v383 = vshrl.u32 %v382, 7
        %v384 = vsub.s32 0, %v383
        %v385 = vrot.slane %v328, %v384
        %v386 = vlaneseq
        %v387 = vshrl.u32 %v386, 7
        %v388 = vsub.s32 1, %v387
        %v389 = vrot.slane %v328, %v388
        %392 = vset.pattern.permute.xlu0 1
        %393 = vperm.xlu0 %392, %v350
        %v394 = vpop.permute.xlu0 %393
        %396 = vset.pattern.permute.xlu0 1
        %397 = vperm.xlu0 %396, %v351
        %v398 = vpop.permute.xlu0 %397
        %v400 = vsub.f32 %v385, %v394
        %v401 = vsub.f32 %v389, %v394
        %v402 = vsub.f32 %v385, %v398
        %v403 = vsub.f32 %v389, %v398
        %v404 = vand.u32 2147483647, %v400
        %v405 = vand.u32 2147483647, %v401
        %v406 = vand.u32 2147483647, %v402
        %v407 = vand.u32 2147483647, %v403
        %v408 = vsub.f32 1.0, %v377
        %v409 = vsub.f32 1.0, %v378
        %v410 = vsub.f32 1.0, %v379
        %v411 = vsub.f32 1.0, %v380
        %v412 = vmax.f32 %v408, 0.0
        %v413 = vmax.f32 %v409, 0.0
        %v414 = vmax.f32 %v410, 0.0
        %v415 = vmax.f32 %v411, 0.0
        %v416 = vsub.f32 1.0, %v404
        %v417 = vsub.f32 1.0, %v405
        %v418 = vsub.f32 1.0, %v406
        %v419 = vsub.f32 1.0, %v407
        %v420 = vmax.f32 %v416, 0.0
        %v421 = vmax.f32 %v417, 0.0
        %v422 = vmax.f32 %v418, 0.0
        %v423 = vmax.f32 %v419, 0.0
        %v424 = vmul.f32 %v412, %v420
        %v425 = vmul.f32 %v413, %v421
        %v426 = vmul.f32 %v414, %v422
        %v427 = vmul.f32 %v415, %v423
        %v430 = vunpack.c.l.s4 1983009808
        %v431 = vunpack.c.0.s8 %v430
        %v432 = vlaneseq
        %v433 = vshrl.u32 %v432, 7
        %v434 = vsub.s32 %v431, %v433
        %v435 = vrot.slane %v349, %v434
        %v436 = vcombine.high %v435, %v435
        %439 = vmatprep.subr.mxu0 0.0
        %440 = vmatpush1.xpose.msra.mxu0 0.0
        %441 = vmatprep.subr.mxu0 0.0
        %442 = vmatpush1.xpose.msra.mxu0 0.0
        %443 = vmatprep.subr.mxu0 0.0
        %444 = vmatpush1.xpose.msra.mxu0 0.0
        %445 = vmatprep.subr.mxu0 0.0
        %446 = vmatpush1.xpose.msra.mxu0 0.0
        %447 = vmatprep.subr.mxu0 0.0
        %448 = vmatpush1.xpose.msra.mxu0 0.0
        %449 = vmatprep.subr.mxu0 0.0
        %450 = vmatpush1.xpose.msra.mxu0 0.0
        %451 = vmatprep.subr.mxu0 0.0
        %452 = vmatpush1.xpose.msra.mxu0 0.0
        %453 = vmatprep.subr.mxu0 0.0
        %454 = vmatpush1.xpose.msra.mxu0 0.0
        %455 = vmatprep.subr.mxu0 0.0
        %456 = vmatpush1.xpose.msra.mxu0 0.0
        %457 = vmatprep.subr.mxu0 0.0
        %458 = vmatpush1.xpose.msra.mxu0 0.0
        %459 = vmatprep.subr.mxu0 0.0
        %460 = vmatpush1.xpose.msra.mxu0 0.0
        %461 = vmatprep.subr.mxu0 0.0
        %462 = vmatpush1.xpose.msra.mxu0 0.0
        %463 = vmatprep.subr.mxu0 0.0
        %464 = vmatpush1.xpose.msra.mxu0 0.0
        %465 = vmatprep.subr.mxu0 0.0
        %466 = vmatpush1.xpose.msra.mxu0 0.0
        %467 = vmatprep.subr.mxu0 0.0
        %468 = vmatpush1.xpose.msra.mxu0 0.0
        %469 = vmatprep.subr.mxu0 %v436
        %470 = vmatpush1.xpose.msra.mxu0 %v435
        %471 = vmatprep.subr.mxu0 0.0
        %472 = vmatpush2.xpose.msra.mxu0 0.0
        %473 = vmatprep.subr.mxu0 0.0
        %474 = vmatpush2.xpose.msra.mxu0 0.0
        %475 = vmatprep.subr.mxu0 0.0
        %476 = vmatpush2.xpose.msra.mxu0 0.0
        %477 = vmatprep.subr.mxu0 0.0
        %478 = vmatpush2.xpose.msra.mxu0 0.0
        %479 = vmatprep.subr.mxu0 0.0
        %480 = vmatpush2.xpose.msra.mxu0 0.0
        %481 = vmatprep.subr.mxu0 0.0
        %482 = vmatpush2.xpose.msra.mxu0 0.0
        %483 = vmatprep.subr.mxu0 0.0
        %484 = vmatpush2.xpose.msra.mxu0 0.0
        %485 = vmatprep.subr.mxu0 0.0
        %486 = vmatpush2.xpose.msra.mxu0 0.0
        %487 = vmatprep.subr.mxu0 0.0
        %488 = vmatpush2.xpose.msra.mxu0 0.0
        %489 = vmatprep.subr.mxu0 0.0
        %490 = vmatpush2.xpose.msra.mxu0 0.0
        %491 = vmatprep.subr.mxu0 0.0
        %492 = vmatpush2.xpose.msra.mxu0 0.0
        %493 = vmatprep.subr.mxu0 0.0
        %494 = vmatpush2.xpose.msra.mxu0 0.0
        %495 = vmatprep.subr.mxu0 0.0
        %496 = vmatpush2.xpose.msra.mxu0 0.0
        %497 = vmatprep.subr.mxu0 0.0
        %498 = vmatpush2.xpose.msra.mxu0 0.0
        %499 = vmatprep.subr.mxu0 0.0
        %500 = vmatpush2.xpose.msra.mxu0 0.0
        %501 = vmatprep.subr.mxu0 0.0
        %502 = vmatpush2.xpose.msra.mxu0 0.0
        %503 = vmatprep.mubr.f32.mxu0 %v425
        %504 = vmatmul.mubr.f32.gmra.mxu0 %v424
        %v505 = vpop.f32.mrf.mxu0
        %v506 = vadd.f32 0.0, %v505
        %v507 = vpop.f32.mrf.mxu0
        %508 = vmatprep.mubr.f32.mxu0 %v427
        %509 = vmatmul.mubr.f32.gmra.mxu0 %v426
        %v510 = vpop.f32.mrf.mxu0
        %v511 = vadd.f32 0.0, %v510
        %v512 = vpop.f32.mrf.mxu0
        %513 = vdwg.mxu0
        %v514 = vmul.f32 %v377, %v377
        %v515 = vmul.f32 %v378, %v378
        %v516 = vmul.f32 %v379, %v379
        %v517 = vmul.f32 %v380, %v380
        %v518 = vmul.f32 %v404, %v404
        %v519 = vmul.f32 %v405, %v405
        %v520 = vmul.f32 %v406, %v406
        %v521 = vmul.f32 %v407, %v407
        %v522 = vadd.f32 %v514, %v518
        %v523 = vadd.f32 %v515, %v519
        %v524 = vadd.f32 %v516, %v520
        %v525 = vadd.f32 %v517, %v521
        %v526 = vadd.f32 %v522, 0.000225
        %v527 = vadd.f32 %v523, 0.000225
        %v528 = vadd.f32 %v524, 0.000225
        %v529 = vadd.f32 %v525, 0.000225
        %v530 = vrcp.pop %v526
        %v531 = vrcp.pop %v527
        %v532 = vrcp.pop %v528
        %v533 = vrcp.pop %v529
        %v534 = vadd.f32 %v530, %v532
        %v535 = vrot.slane %v534, 4
        %v536 = vadd.f32 %v534, %v535
        %v537 = vrot.slane %v536, 2
        %v538 = vadd.f32 %v536, %v537
        %v539 = vrot.slane %v538, 1
        %v540 = vadd.f32 %v538, %v539
        %v541 = vadd.f32 %v531, %v533
        %v542 = vrot.slane %v541, 4
        %v543 = vadd.f32 %v541, %v542
        %v544 = vrot.slane %v543, 2
        %v545 = vadd.f32 %v543, %v544
        %v546 = vrot.slane %v545, 1
        %v547 = vadd.f32 %v545, %v546
        %v548 = vrcp.pop %v540
        %v549 = vrcp.pop %v547
        %v550 = vmul.f32 %v530, %v548
        %v551 = vmul.f32 %v531, %v549
        %v552 = vmul.f32 %v532, %v548
        %v553 = vmul.f32 %v533, %v549
        %v554 = vadd.f32 %v506, 0.0
        %v555 = vadd.f32 %v511, 0.0
        %557 = vset.pattern.permute.xlu0 0
        %558 = vperm.xlu0 %557, %v506
        %v559 = vpop.permute.xlu0 %558
        %562 = vset.pattern.permute.xlu0 0
        %563 = vperm.xlu0 %562, %v511
        %v564 = vpop.permute.xlu0 %563
        %v566 = vmul.f32 %v559, %v550
        %v567 = vmul.f32 %v559, %v551
        %v568 = vmul.f32 %v564, %v552
        %v569 = vmul.f32 %v564, %v553
        %v570 = vadd.f32 %v566, %v568
        %v571 = vrot.slane %v570, 4
        %v572 = vadd.f32 %v570, %v571
        %v573 = vrot.slane %v572, 2
        %v574 = vadd.f32 %v572, %v573
        %v575 = vrot.slane %v574, 1
        %v576 = vadd.f32 %v574, %v575
        %v577 = vadd.f32 %v567, %v569
        %v578 = vrot.slane %v577, 4
        %v579 = vadd.f32 %v577, %v578
        %v580 = vrot.slane %v579, 2
        %v581 = vadd.f32 %v579, %v580
        %v582 = vrot.slane %v581, 1
        %v583 = vadd.f32 %v581, %v582
        %584 = vrot.lane.b32.xlu0 %v506, 127
        %v585 = vpop.permute.xlu0 %584
        %586 = vrot.lane.b32.xlu0 %v511, 127
        %v587 = vpop.permute.xlu0 %586
        %v590 = vadd.f32 %v554, %v585
        %v591 = vadd.f32 %v555, %v587
        %592 = vset.pattern.permute.xlu0 1
        %593 = vperm.xlu0 %592, %v506
        %v594 = vpop.permute.xlu0 %593
        %596 = vset.pattern.permute.xlu0 1
        %597 = vperm.xlu0 %596, %v511
        %v598 = vpop.permute.xlu0 %597
        %v600 = vmul.f32 %v594, %v550
        %v601 = vmul.f32 %v594, %v551
        %v602 = vmul.f32 %v598, %v552
        %v603 = vmul.f32 %v598, %v553
        %v604 = vadd.f32 %v600, %v602
        %v605 = vrot.slane %v604, 4
        %v606 = vadd.f32 %v604, %v605
        %v607 = vrot.slane %v606, 2
        %v608 = vadd.f32 %v606, %v607
        %v609 = vrot.slane %v608, 1
        %v610 = vadd.f32 %v608, %v609
        %v611 = vadd.f32 %v601, %v603
        %v612 = vrot.slane %v611, 4
        %v613 = vadd.f32 %v611, %v612
        %v614 = vrot.slane %v613, 2
        %v615 = vadd.f32 %v613, %v614
        %v616 = vrot.slane %v615, 1
        %v617 = vadd.f32 %v615, %v616
        %vm618 = vcmask 1040384
        %v619 = vsel %vm618, %v576, %v610
        %v620 = vsel %vm618, %v583, %v617
        %v623 = vcombine.low %v619, %v620
        %v625 = vunpack.c.l.s4 1983009808
        %v626 = vunpack.c.0.s8 %v625
        %v627 = vlaneseq
        %v628 = vshrl.u32 %v627, 7
        %v629 = vsub.s32 %v626, %v628
        %v630 = vrot.slane %v623, %v629
        %s632 = smul.addr %s346, 2
        %s633 = scalar_lea.vmem %s325, %s632
        %634 = vst [vmem:[%s633] sm:$0xf] %v630
        %v635 = vmul.f32 %v590, 0.5
        %v636 = vmul.f32 %v591, 0.5
        %639 = vrot.lane.b32.xlu0 %v635, 2
        %v640 = vpop.permute.xlu0 %639
        %641 = vrot.lane.b32.xlu0 %v636, 2
        %v642 = vpop.permute.xlu0 %641
        %vm645 = vcmask 15360
        %v646 = vsel %vm645, %v344, %v640
        %v647 = vsel %vm645, %v345, %v642
        %v649 = vlaneseq
        %v650 = vshrl.u32 %v649, 7
        %v651 = vsub.s32 0, %v650
        %v652 = vrot.slane %v332, %v651
        %vm654 = vcmask 23552
        %v656 = vsel %vm654, %v646, 0
        %v659 = vsel %vm654, %v647, 0
        %vm661 = vcmask 1042432
        %v663 = vsel %vm661, %v329, 0
        %665 = vmatprep.subr.mxu0 0.0
        %666 = vmatpush1.msra.mxu0 0.0
        %667 = vmatprep.subr.mxu0 0.0
        %668 = vmatpush1.msra.mxu0 0.0
        %669 = vmatprep.subr.mxu0 0.0
        %670 = vmatpush1.msra.mxu0 0.0
        %671 = vmatprep.subr.mxu0 0.0
        %672 = vmatpush1.msra.mxu0 0.0
        %673 = vmatprep.subr.mxu0 0.0
        %674 = vmatpush1.msra.mxu0 0.0
        %675 = vmatprep.subr.mxu0 0.0
        %676 = vmatpush1.msra.mxu0 0.0
        %677 = vmatprep.subr.mxu0 0.0
        %678 = vmatpush1.msra.mxu0 0.0
        %679 = vmatprep.subr.mxu0 0.0
        %680 = vmatpush1.msra.mxu0 0.0
        %681 = vmatprep.subr.mxu0 0.0
        %682 = vmatpush1.msra.mxu0 0.0
        %683 = vmatprep.subr.mxu0 0.0
        %684 = vmatpush1.msra.mxu0 0.0
        %685 = vmatprep.subr.mxu0 0.0
        %686 = vmatpush1.msra.mxu0 0.0
        %687 = vmatprep.subr.mxu0 0.0
        %688 = vmatpush1.msra.mxu0 0.0
        %689 = vmatprep.subr.mxu0 0.0
        %690 = vmatpush1.msra.mxu0 0.0
        %691 = vmatprep.subr.mxu0 0.0
        %692 = vmatpush1.msra.mxu0 0.0
        %693 = vmatprep.subr.mxu0 0.0
        %694 = vmatpush1.msra.mxu0 0.0
        %695 = vmatprep.subr.mxu0 0.0
        %696 = vmatpush1.msra.mxu0 %v663
        %697 = vmatprep.subr.mxu0 0.0
        %698 = vmatpush2.msra.mxu0 0.0
        %699 = vmatprep.subr.mxu0 0.0
        %700 = vmatpush2.msra.mxu0 0.0
        %701 = vmatprep.subr.mxu0 0.0
        %702 = vmatpush2.msra.mxu0 0.0
        %703 = vmatprep.subr.mxu0 0.0
        %704 = vmatpush2.msra.mxu0 0.0
        %705 = vmatprep.subr.mxu0 0.0
        %706 = vmatpush2.msra.mxu0 0.0
        %707 = vmatprep.subr.mxu0 0.0
        %708 = vmatpush2.msra.mxu0 0.0
        %709 = vmatprep.subr.mxu0 0.0
        %710 = vmatpush2.msra.mxu0 0.0
        %711 = vmatprep.subr.mxu0 0.0
        %712 = vmatpush2.msra.mxu0 0.0
        %713 = vmatprep.subr.mxu0 0.0
        %714 = vmatpush2.msra.mxu0 0.0
        %715 = vmatprep.subr.mxu0 0.0
        %716 = vmatpush2.msra.mxu0 0.0
        %717 = vmatprep.subr.mxu0 0.0
        %718 = vmatpush2.msra.mxu0 0.0
        %719 = vmatprep.subr.mxu0 0.0
        %720 = vmatpush2.msra.mxu0 0.0
        %721 = vmatprep.subr.mxu0 0.0
        %722 = vmatpush2.msra.mxu0 0.0
        %723 = vmatprep.subr.mxu0 0.0
        %724 = vmatpush2.msra.mxu0 0.0
        %725 = vmatprep.subr.mxu0 0.0
        %726 = vmatpush2.msra.mxu0 0.0
        %727 = vmatprep.subr.mxu0 0.0
        %728 = vmatpush2.msra.mxu0 0.0
        %729 = vmatprep.mubr.f32.mxu0 0.0
        %730 = vmatmul.mubr.f32.gmra.mxu0 %v656
        %v731 = vpop.f32.mrf.mxu0
        %v732 = vadd.f32 %v652, %v731
        %v733 = vpop.f32.mrf.mxu0
        %734 = vmatprep.mubr.f32.mxu0 0.0
        %735 = vmatmul.mubr.f32.gmra.mxu0 %v659
        %v736 = vpop.f32.mrf.mxu0
        %v737 = vadd.f32 %v652, %v736
        %v738 = vpop.f32.mrf.mxu0
        %739 = vdwg.mxu0
        %vm740 = vcmask 130048
        %v742 = vsel %vm740, 0.0, 0
        %744 = vmatprep.subr.mxu0 0.0
        %745 = vmatpush1.msra.mxu0 0.0
        %746 = vmatprep.subr.mxu0 0.0
        %747 = vmatpush1.msra.mxu0 0.0
        %748 = vmatprep.subr.mxu0 0.0
        %749 = vmatpush1.msra.mxu0 0.0
        %750 = vmatprep.subr.mxu0 0.0
        %751 = vmatpush1.msra.mxu0 0.0
        %752 = vmatprep.subr.mxu0 0.0
        %753 = vmatpush1.msra.mxu0 0.0
        %754 = vmatprep.subr.mxu0 0.0
        %755 = vmatpush1.msra.mxu0 0.0
        %756 = vmatprep.subr.mxu0 0.0
        %757 = vmatpush1.msra.mxu0 0.0
        %758 = vmatprep.subr.mxu0 0.0
        %759 = vmatpush1.msra.mxu0 0.0
        %760 = vmatprep.subr.mxu0 0.0
        %761 = vmatpush1.msra.mxu0 0.0
        %762 = vmatprep.subr.mxu0 0.0
        %763 = vmatpush1.msra.mxu0 0.0
        %764 = vmatprep.subr.mxu0 0.0
        %765 = vmatpush1.msra.mxu0 0.0
        %766 = vmatprep.subr.mxu0 0.0
        %767 = vmatpush1.msra.mxu0 0.0
        %768 = vmatprep.subr.mxu0 0.0
        %769 = vmatpush1.msra.mxu0 0.0
        %770 = vmatprep.subr.mxu0 0.0
        %771 = vmatpush1.msra.mxu0 0.0
        %772 = vmatprep.subr.mxu0 0.0
        %773 = vmatpush1.msra.mxu0 %v331
        %774 = vmatprep.subr.mxu0 0.0
        %775 = vmatpush1.msra.mxu0 %v330
        %776 = vmatprep.subr.mxu0 0.0
        %777 = vmatpush2.msra.mxu0 0.0
        %778 = vmatprep.subr.mxu0 0.0
        %779 = vmatpush2.msra.mxu0 0.0
        %780 = vmatprep.subr.mxu0 0.0
        %781 = vmatpush2.msra.mxu0 0.0
        %782 = vmatprep.subr.mxu0 0.0
        %783 = vmatpush2.msra.mxu0 0.0
        %784 = vmatprep.subr.mxu0 0.0
        %785 = vmatpush2.msra.mxu0 0.0
        %786 = vmatprep.subr.mxu0 0.0
        %787 = vmatpush2.msra.mxu0 0.0
        %788 = vmatprep.subr.mxu0 0.0
        %789 = vmatpush2.msra.mxu0 0.0
        %790 = vmatprep.subr.mxu0 0.0
        %791 = vmatpush2.msra.mxu0 0.0
        %792 = vmatprep.subr.mxu0 0.0
        %793 = vmatpush2.msra.mxu0 0.0
        %794 = vmatprep.subr.mxu0 0.0
        %795 = vmatpush2.msra.mxu0 0.0
        %796 = vmatprep.subr.mxu0 0.0
        %797 = vmatpush2.msra.mxu0 0.0
        %798 = vmatprep.subr.mxu0 0.0
        %799 = vmatpush2.msra.mxu0 0.0
        %800 = vmatprep.subr.mxu0 0.0
        %801 = vmatpush2.msra.mxu0 0.0
        %802 = vmatprep.subr.mxu0 0.0
        %803 = vmatpush2.msra.mxu0 0.0
        %804 = vmatprep.subr.mxu0 0.0
        %805 = vmatpush2.msra.mxu0 0.0
        %806 = vmatprep.subr.mxu0 0.0
        %807 = vmatpush2.msra.mxu0 0.0
        %808 = vmatprep.mubr.f32.mxu0 0.0
        %809 = vmatmul.mubr.f32.gmra.mxu0 %v742
        %v810 = vpop.f32.mrf.mxu0
        %v811 = vadd.f32 0.0, %v810
        %v812 = vpop.f32.mrf.mxu0
        %813 = vdwg.mxu0
        %v814 = vadd.f32 %v732, %v811
        %v815 = vxor.u32 %v814, 2147483648
        %v816 = vmul.f32 %v815, 1.442695
        %v817 = vpow.pop %v816
        %v818 = vadd.f32 %v817, 1.0
        %v819 = vrcp.pop %v818
        %v820 = vmul.f32 1.0, %v819
        %v821 = vtanh.pop %v814
        %v822 = vmul.f32 %v820, 0.0
        %824 = vrot.lane.b32.xlu0 %v821, 80
        %v825 = vpop.permute.xlu0 %824
        %v827 = vmul.f32 %v820, %v825
        %829 = vrot.lane.b32.xlu0 %v827, 16
        %v830 = vpop.permute.xlu0 %829
        %v832 = vadd.f32 %v822, %v830
        %v833 = vtanh.pop %v832
        %835 = vrot.lane.b32.xlu0 %v833, 16
        %v836 = vpop.permute.xlu0 %835
        %v838 = vmul.f32 %v820, %v836
        %840 = vrot.lane.b32.xlu0 %v838, 96
        %v841 = vpop.permute.xlu0 %840
        %v842 = vsel %vm740, %v841, 0
        %844 = vmatprep.subr.mxu0 0.0
        %845 = vmatpush1.msra.mxu0 0.0
        %846 = vmatprep.subr.mxu0 0.0
        %847 = vmatpush1.msra.mxu0 0.0
        %848 = vmatprep.subr.mxu0 0.0
        %849 = vmatpush1.msra.mxu0 0.0
        %850 = vmatprep.subr.mxu0 0.0
        %851 = vmatpush1.msra.mxu0 0.0
        %852 = vmatprep.subr.mxu0 0.0
        %853 = vmatpush1.msra.mxu0 0.0
        %854 = vmatprep.subr.mxu0 0.0
        %855 = vmatpush1.msra.mxu0 0.0
        %856 = vmatprep.subr.mxu0 0.0
        %857 = vmatpush1.msra.mxu0 0.0
        %858 = vmatprep.subr.mxu0 0.0
        %859 = vmatpush1.msra.mxu0 0.0
        %860 = vmatprep.subr.mxu0 0.0
        %861 = vmatpush1.msra.mxu0 0.0
        %862 = vmatprep.subr.mxu0 0.0
        %863 = vmatpush1.msra.mxu0 0.0
        %864 = vmatprep.subr.mxu0 0.0
        %865 = vmatpush1.msra.mxu0 0.0
        %866 = vmatprep.subr.mxu0 0.0
        %867 = vmatpush1.msra.mxu0 0.0
        %868 = vmatprep.subr.mxu0 0.0
        %869 = vmatpush1.msra.mxu0 0.0
        %870 = vmatprep.subr.mxu0 0.0
        %871 = vmatpush1.msra.mxu0 0.0
        %872 = vmatprep.subr.mxu0 0.0
        %873 = vmatpush1.msra.mxu0 %v331
        %874 = vmatprep.subr.mxu0 0.0
        %875 = vmatpush1.msra.mxu0 %v330
        %876 = vmatprep.subr.mxu0 0.0
        %877 = vmatpush2.msra.mxu0 0.0
        %878 = vmatprep.subr.mxu0 0.0
        %879 = vmatpush2.msra.mxu0 0.0
        %880 = vmatprep.subr.mxu0 0.0
        %881 = vmatpush2.msra.mxu0 0.0
        %882 = vmatprep.subr.mxu0 0.0
        %883 = vmatpush2.msra.mxu0 0.0
        %884 = vmatprep.subr.mxu0 0.0
        %885 = vmatpush2.msra.mxu0 0.0
        %886 = vmatprep.subr.mxu0 0.0
        %887 = vmatpush2.msra.mxu0 0.0
        %888 = vmatprep.subr.mxu0 0.0
        %889 = vmatpush2.msra.mxu0 0.0
        %890 = vmatprep.subr.mxu0 0.0
        %891 = vmatpush2.msra.mxu0 0.0
        %892 = vmatprep.subr.mxu0 0.0
        %893 = vmatpush2.msra.mxu0 0.0
        %894 = vmatprep.subr.mxu0 0.0
        %895 = vmatpush2.msra.mxu0 0.0
        %896 = vmatprep.subr.mxu0 0.0
        %897 = vmatpush2.msra.mxu0 0.0
        %898 = vmatprep.subr.mxu0 0.0
        %899 = vmatpush2.msra.mxu0 0.0
        %900 = vmatprep.subr.mxu0 0.0
        %901 = vmatpush2.msra.mxu0 0.0
        %902 = vmatprep.subr.mxu0 0.0
        %903 = vmatpush2.msra.mxu0 0.0
        %904 = vmatprep.subr.mxu0 0.0
        %905 = vmatpush2.msra.mxu0 0.0
        %906 = vmatprep.subr.mxu0 0.0
        %907 = vmatpush2.msra.mxu0 0.0
        %908 = vmatprep.mubr.f32.mxu0 0.0
        %909 = vmatmul.mubr.f32.gmra.mxu0 %v842
        %v910 = vpop.f32.mrf.mxu0
        %v911 = vadd.f32 0.0, %v910
        %v912 = vpop.f32.mrf.mxu0
        %913 = vdwg.mxu0
        %v915 = vrot.slane %v911, 7
        %v917 = vadd.f32 %v732, %v915
        %v918 = vxor.u32 %v917, 2147483648
        %v919 = vmul.f32 %v918, 1.442695
        %v920 = vpow.pop %v919
        %v921 = vadd.f32 %v920, 1.0
        %v922 = vrcp.pop %v921
        %v923 = vmul.f32 1.0, %v922
        %v924 = vtanh.pop %v917
        %v926 = vrot.slane %v832, 7
        %v928 = vmul.f32 %v923, %v926
        %930 = vrot.lane.b32.xlu0 %v924, 80
        %v931 = vpop.permute.xlu0 %930
        %v933 = vmul.f32 %v923, %v931
        %935 = vrot.lane.b32.xlu0 %v933, 16
        %v936 = vpop.permute.xlu0 %935
        %v938 = vadd.f32 %v928, %v936
        %v939 = vtanh.pop %v938
        %941 = vrot.lane.b32.xlu0 %v939, 16
        %v942 = vpop.permute.xlu0 %941
        %v944 = vmul.f32 %v923, %v942
        %v946 = vrot.slane %v944, 1
        %947 = vrot.lane.b32.xlu0 %v946, 96
        %v948 = vpop.permute.xlu0 %947
        %v949 = vsel %vm740, %v948, 0
        %951 = vmatprep.subr.mxu0 0.0
        %952 = vmatpush1.msra.mxu0 0.0
        %953 = vmatprep.subr.mxu0 0.0
        %954 = vmatpush1.msra.mxu0 0.0
        %955 = vmatprep.subr.mxu0 0.0
        %956 = vmatpush1.msra.mxu0 0.0
        %957 = vmatprep.subr.mxu0 0.0
        %958 = vmatpush1.msra.mxu0 0.0
        %959 = vmatprep.subr.mxu0 0.0
        %960 = vmatpush1.msra.mxu0 0.0
        %961 = vmatprep.subr.mxu0 0.0
        %962 = vmatpush1.msra.mxu0 0.0
        %963 = vmatprep.subr.mxu0 0.0
        %964 = vmatpush1.msra.mxu0 0.0
        %965 = vmatprep.subr.mxu0 0.0
        %966 = vmatpush1.msra.mxu0 0.0
        %967 = vmatprep.subr.mxu0 0.0
        %968 = vmatpush1.msra.mxu0 0.0
        %969 = vmatprep.subr.mxu0 0.0
        %970 = vmatpush1.msra.mxu0 0.0
        %971 = vmatprep.subr.mxu0 0.0
        %972 = vmatpush1.msra.mxu0 0.0
        %973 = vmatprep.subr.mxu0 0.0
        %974 = vmatpush1.msra.mxu0 0.0
        %975 = vmatprep.subr.mxu0 0.0
        %976 = vmatpush1.msra.mxu0 0.0
        %977 = vmatprep.subr.mxu0 0.0
        %978 = vmatpush1.msra.mxu0 0.0
        %979 = vmatprep.subr.mxu0 0.0
        %980 = vmatpush1.msra.mxu0 %v331
        %981 = vmatprep.subr.mxu0 0.0
        %982 = vmatpush1.msra.mxu0 %v330
        %983 = vmatprep.subr.mxu0 0.0
        %984 = vmatpush2.msra.mxu0 0.0
        %985 = vmatprep.subr.mxu0 0.0
        %986 = vmatpush2.msra.mxu0 0.0
        %987 = vmatprep.subr.mxu0 0.0
        %988 = vmatpush2.msra.mxu0 0.0
        %989 = vmatprep.subr.mxu0 0.0
        %990 = vmatpush2.msra.mxu0 0.0
        %991 = vmatprep.subr.mxu0 0.0
        %992 = vmatpush2.msra.mxu0 0.0
        %993 = vmatprep.subr.mxu0 0.0
        %994 = vmatpush2.msra.mxu0 0.0
        %995 = vmatprep.subr.mxu0 0.0
        %996 = vmatpush2.msra.mxu0 0.0
        %997 = vmatprep.subr.mxu0 0.0
        %998 = vmatpush2.msra.mxu0 0.0
        %999 = vmatprep.subr.mxu0 0.0
        %1000 = vmatpush2.msra.mxu0 0.0
        %1001 = vmatprep.subr.mxu0 0.0
        %1002 = vmatpush2.msra.mxu0 0.0
        %1003 = vmatprep.subr.mxu0 0.0
        %1004 = vmatpush2.msra.mxu0 0.0
        %1005 = vmatprep.subr.mxu0 0.0
        %1006 = vmatpush2.msra.mxu0 0.0
        %1007 = vmatprep.subr.mxu0 0.0
        %1008 = vmatpush2.msra.mxu0 0.0
        %1009 = vmatprep.subr.mxu0 0.0
        %1010 = vmatpush2.msra.mxu0 0.0
        %1011 = vmatprep.subr.mxu0 0.0
        %1012 = vmatpush2.msra.mxu0 0.0
        %1013 = vmatprep.subr.mxu0 0.0
        %1014 = vmatpush2.msra.mxu0 0.0
        %1015 = vmatprep.mubr.f32.mxu0 0.0
        %1016 = vmatmul.mubr.f32.gmra.mxu0 %v949
        %v1017 = vpop.f32.mrf.mxu0
        %v1018 = vadd.f32 0.0, %v1017
        %v1019 = vpop.f32.mrf.mxu0
        %1020 = vdwg.mxu0
        %v1022 = vrot.slane %v1018, 6
        %v1024 = vadd.f32 %v732, %v1022
        %v1025 = vxor.u32 %v1024, 2147483648
        %v1026 = vmul.f32 %v1025, 1.442695
        %v1027 = vpow.pop %v1026
        %v1028 = vadd.f32 %v1027, 1.0
        %v1029 = vrcp.pop %v1028
        %v1030 = vmul.f32 1.0, %v1029
        %v1031 = vtanh.pop %v1024
        %v1033 = vrot.slane %v938, 7
        %v1035 = vmul.f32 %v1030, %v1033
        %1037 = vrot.lane.b32.xlu0 %v1031, 80
        %v1038 = vpop.permute.xlu0 %1037
        %v1040 = vmul.f32 %v1030, %v1038
        %1042 = vrot.lane.b32.xlu0 %v1040, 16
        %v1043 = vpop.permute.xlu0 %1042
        %v1045 = vadd.f32 %v1035, %v1043
        %v1046 = vtanh.pop %v1045
        %1048 = vrot.lane.b32.xlu0 %v1046, 16
        %v1049 = vpop.permute.xlu0 %1048
        %v1051 = vmul.f32 %v1030, %v1049
        %v1053 = vrot.slane %v1051, 2
        %1054 = vrot.lane.b32.xlu0 %v1053, 96
        %v1055 = vpop.permute.xlu0 %1054
        %v1056 = vsel %vm740, %v1055, 0
        %1058 = vmatprep.subr.mxu0 0.0
        %1059 = vmatpush1.msra.mxu0 0.0
        %1060 = vmatprep.subr.mxu0 0.0
        %1061 = vmatpush1.msra.mxu0 0.0
        %1062 = vmatprep.subr.mxu0 0.0
        %1063 = vmatpush1.msra.mxu0 0.0
        %1064 = vmatprep.subr.mxu0 0.0
        %1065 = vmatpush1.msra.mxu0 0.0
        %1066 = vmatprep.subr.mxu0 0.0
        %1067 = vmatpush1.msra.mxu0 0.0
        %1068 = vmatprep.subr.mxu0 0.0
        %1069 = vmatpush1.msra.mxu0 0.0
        %1070 = vmatprep.subr.mxu0 0.0
        %1071 = vmatpush1.msra.mxu0 0.0
        %1072 = vmatprep.subr.mxu0 0.0
        %1073 = vmatpush1.msra.mxu0 0.0
        %1074 = vmatprep.subr.mxu0 0.0
        %1075 = vmatpush1.msra.mxu0 0.0
        %1076 = vmatprep.subr.mxu0 0.0
        %1077 = vmatpush1.msra.mxu0 0.0
        %1078 = vmatprep.subr.mxu0 0.0
        %1079 = vmatpush1.msra.mxu0 0.0
        %1080 = vmatprep.subr.mxu0 0.0
        %1081 = vmatpush1.msra.mxu0 0.0
        %1082 = vmatprep.subr.mxu0 0.0
        %1083 = vmatpush1.msra.mxu0 0.0
        %1084 = vmatprep.subr.mxu0 0.0
        %1085 = vmatpush1.msra.mxu0 0.0
        %1086 = vmatprep.subr.mxu0 0.0
        %1087 = vmatpush1.msra.mxu0 %v331
        %1088 = vmatprep.subr.mxu0 0.0
        %1089 = vmatpush1.msra.mxu0 %v330
        %1090 = vmatprep.subr.mxu0 0.0
        %1091 = vmatpush2.msra.mxu0 0.0
        %1092 = vmatprep.subr.mxu0 0.0
        %1093 = vmatpush2.msra.mxu0 0.0
        %1094 = vmatprep.subr.mxu0 0.0
        %1095 = vmatpush2.msra.mxu0 0.0
        %1096 = vmatprep.subr.mxu0 0.0
        %1097 = vmatpush2.msra.mxu0 0.0
        %1098 = vmatprep.subr.mxu0 0.0
        %1099 = vmatpush2.msra.mxu0 0.0
        %1100 = vmatprep.subr.mxu0 0.0
        %1101 = vmatpush2.msra.mxu0 0.0
        %1102 = vmatprep.subr.mxu0 0.0
        %1103 = vmatpush2.msra.mxu0 0.0
        %1104 = vmatprep.subr.mxu0 0.0
        %1105 = vmatpush2.msra.mxu0 0.0
        %1106 = vmatprep.subr.mxu0 0.0
        %1107 = vmatpush2.msra.mxu0 0.0
        %1108 = vmatprep.subr.mxu0 0.0
        %1109 = vmatpush2.msra.mxu0 0.0
        %1110 = vmatprep.subr.mxu0 0.0
        %1111 = vmatpush2.msra.mxu0 0.0
        %1112 = vmatprep.subr.mxu0 0.0
        %1113 = vmatpush2.msra.mxu0 0.0
        %1114 = vmatprep.subr.mxu0 0.0
        %1115 = vmatpush2.msra.mxu0 0.0
        %1116 = vmatprep.subr.mxu0 0.0
        %1117 = vmatpush2.msra.mxu0 0.0
        %1118 = vmatprep.subr.mxu0 0.0
        %1119 = vmatpush2.msra.mxu0 0.0
        %1120 = vmatprep.subr.mxu0 0.0
        %1121 = vmatpush2.msra.mxu0 0.0
        %1122 = vmatprep.mubr.f32.mxu0 0.0
        %1123 = vmatmul.mubr.f32.gmra.mxu0 %v1056
        %v1124 = vpop.f32.mrf.mxu0
        %v1125 = vadd.f32 0.0, %v1124
        %v1126 = vpop.f32.mrf.mxu0
        %1127 = vdwg.mxu0
        %v1129 = vrot.slane %v1125, 5
        %v1131 = vadd.f32 %v732, %v1129
        %v1132 = vxor.u32 %v1131, 2147483648
        %v1133 = vmul.f32 %v1132, 1.442695
        %v1134 = vpow.pop %v1133
        %v1135 = vadd.f32 %v1134, 1.0
        %v1136 = vrcp.pop %v1135
        %v1137 = vmul.f32 1.0, %v1136
        %v1138 = vtanh.pop %v1131
        %v1140 = vrot.slane %v1045, 7
        %v1142 = vmul.f32 %v1137, %v1140
        %1144 = vrot.lane.b32.xlu0 %v1138, 80
        %v1145 = vpop.permute.xlu0 %1144
        %v1147 = vmul.f32 %v1137, %v1145
        %1149 = vrot.lane.b32.xlu0 %v1147, 16
        %v1150 = vpop.permute.xlu0 %1149
        %v1152 = vadd.f32 %v1142, %v1150
        %v1153 = vtanh.pop %v1152
        %1155 = vrot.lane.b32.xlu0 %v1153, 16
        %v1156 = vpop.permute.xlu0 %1155
        %v1158 = vmul.f32 %v1137, %v1156
        %v1160 = vrot.slane %v1158, 3
        %1161 = vrot.lane.b32.xlu0 %v1160, 96
        %v1162 = vpop.permute.xlu0 %1161
        %v1163 = vsel %vm740, %v1162, 0
        %1165 = vmatprep.subr.mxu0 0.0
        %1166 = vmatpush1.msra.mxu0 0.0
        %1167 = vmatprep.subr.mxu0 0.0
        %1168 = vmatpush1.msra.mxu0 0.0
        %1169 = vmatprep.subr.mxu0 0.0
        %1170 = vmatpush1.msra.mxu0 0.0
        %1171 = vmatprep.subr.mxu0 0.0
        %1172 = vmatpush1.msra.mxu0 0.0
        %1173 = vmatprep.subr.mxu0 0.0
        %1174 = vmatpush1.msra.mxu0 0.0
        %1175 = vmatprep.subr.mxu0 0.0
        %1176 = vmatpush1.msra.mxu0 0.0
        %1177 = vmatprep.subr.mxu0 0.0
        %1178 = vmatpush1.msra.mxu0 0.0
        %1179 = vmatprep.subr.mxu0 0.0
        %1180 = vmatpush1.msra.mxu0 0.0
        %1181 = vmatprep.subr.mxu0 0.0
        %1182 = vmatpush1.msra.mxu0 0.0
        %1183 = vmatprep.subr.mxu0 0.0
        %1184 = vmatpush1.msra.mxu0 0.0
        %1185 = vmatprep.subr.mxu0 0.0
        %1186 = vmatpush1.msra.mxu0 0.0
        %1187 = vmatprep.subr.mxu0 0.0
        %1188 = vmatpush1.msra.mxu0 0.0
        %1189 = vmatprep.subr.mxu0 0.0
        %1190 = vmatpush1.msra.mxu0 0.0
        %1191 = vmatprep.subr.mxu0 0.0
        %1192 = vmatpush1.msra.mxu0 0.0
        %1193 = vmatprep.subr.mxu0 0.0
        %1194 = vmatpush1.msra.mxu0 %v331
        %1195 = vmatprep.subr.mxu0 0.0
        %1196 = vmatpush1.msra.mxu0 %v330
        %1197 = vmatprep.subr.mxu0 0.0
        %1198 = vmatpush2.msra.mxu0 0.0
        %1199 = vmatprep.subr.mxu0 0.0
        %1200 = vmatpush2.msra.mxu0 0.0
        %1201 = vmatprep.subr.mxu0 0.0
        %1202 = vmatpush2.msra.mxu0 0.0
        %1203 = vmatprep.subr.mxu0 0.0
        %1204 = vmatpush2.msra.mxu0 0.0
        %1205 = vmatprep.subr.mxu0 0.0
        %1206 = vmatpush2.msra.mxu0 0.0
        %1207 = vmatprep.subr.mxu0 0.0
        %1208 = vmatpush2.msra.mxu0 0.0
        %1209 = vmatprep.subr.mxu0 0.0
        %1210 = vmatpush2.msra.mxu0 0.0
        %1211 = vmatprep.subr.mxu0 0.0
        %1212 = vmatpush2.msra.mxu0 0.0
        %1213 = vmatprep.subr.mxu0 0.0
        %1214 = vmatpush2.msra.mxu0 0.0
        %1215 = vmatprep.subr.mxu0 0.0
        %1216 = vmatpush2.msra.mxu0 0.0
        %1217 = vmatprep.subr.mxu0 0.0
        %1218 = vmatpush2.msra.mxu0 0.0
        %1219 = vmatprep.subr.mxu0 0.0
        %1220 = vmatpush2.msra.mxu0 0.0
        %1221 = vmatprep.subr.mxu0 0.0
        %1222 = vmatpush2.msra.mxu0 0.0
        %1223 = vmatprep.subr.mxu0 0.0
        %1224 = vmatpush2.msra.mxu0 0.0
        %1225 = vmatprep.subr.mxu0 0.0
        %1226 = vmatpush2.msra.mxu0 0.0
        %1227 = vmatprep.subr.mxu0 0.0
        %1228 = vmatpush2.msra.mxu0 0.0
        %1229 = vmatprep.mubr.f32.mxu0 0.0
        %1230 = vmatmul.mubr.f32.gmra.mxu0 %v1163
        %v1231 = vpop.f32.mrf.mxu0
        %v1232 = vadd.f32 0.0, %v1231
        %v1233 = vpop.f32.mrf.mxu0
        %1234 = vdwg.mxu0
        %v1236 = vrot.slane %v1232, 4
        %v1238 = vadd.f32 %v732, %v1236
        %v1239 = vxor.u32 %v1238, 2147483648
        %v1240 = vmul.f32 %v1239, 1.442695
        %v1241 = vpow.pop %v1240
        %v1242 = vadd.f32 %v1241, 1.0
        %v1243 = vrcp.pop %v1242
        %v1244 = vmul.f32 1.0, %v1243
        %v1245 = vtanh.pop %v1238
        %v1247 = vrot.slane %v1152, 7
        %v1249 = vmul.f32 %v1244, %v1247
        %1251 = vrot.lane.b32.xlu0 %v1245, 80
        %v1252 = vpop.permute.xlu0 %1251
        %v1254 = vmul.f32 %v1244, %v1252
        %1256 = vrot.lane.b32.xlu0 %v1254, 16
        %v1257 = vpop.permute.xlu0 %1256
        %v1259 = vadd.f32 %v1249, %v1257
        %v1260 = vtanh.pop %v1259
        %1262 = vrot.lane.b32.xlu0 %v1260, 16
        %v1263 = vpop.permute.xlu0 %1262
        %v1265 = vmul.f32 %v1244, %v1263
        %v1267 = vrot.slane %v1265, 4
        %1268 = vrot.lane.b32.xlu0 %v1267, 96
        %v1269 = vpop.permute.xlu0 %1268
        %v1270 = vsel %vm740, %v1269, 0
        %1272 = vmatprep.subr.mxu0 0.0
        %1273 = vmatpush1.msra.mxu0 0.0
        %1274 = vmatprep.subr.mxu0 0.0
        %1275 = vmatpush1.msra.mxu0 0.0
        %1276 = vmatprep.subr.mxu0 0.0
        %1277 = vmatpush1.msra.mxu0 0.0
        %1278 = vmatprep.subr.mxu0 0.0
        %1279 = vmatpush1.msra.mxu0 0.0
        %1280 = vmatprep.subr.mxu0 0.0
        %1281 = vmatpush1.msra.mxu0 0.0
        %1282 = vmatprep.subr.mxu0 0.0
        %1283 = vmatpush1.msra.mxu0 0.0
        %1284 = vmatprep.subr.mxu0 0.0
        %1285 = vmatpush1.msra.mxu0 0.0
        %1286 = vmatprep.subr.mxu0 0.0
        %1287 = vmatpush1.msra.mxu0 0.0
        %1288 = vmatprep.subr.mxu0 0.0
        %1289 = vmatpush1.msra.mxu0 0.0
        %1290 = vmatprep.subr.mxu0 0.0
        %1291 = vmatpush1.msra.mxu0 0.0
        %1292 = vmatprep.subr.mxu0 0.0
        %1293 = vmatpush1.msra.mxu0 0.0
        %1294 = vmatprep.subr.mxu0 0.0
        %1295 = vmatpush1.msra.mxu0 0.0
        %1296 = vmatprep.subr.mxu0 0.0
        %1297 = vmatpush1.msra.mxu0 0.0
        %1298 = vmatprep.subr.mxu0 0.0
        %1299 = vmatpush1.msra.mxu0 0.0
        %1300 = vmatprep.subr.mxu0 0.0
        %1301 = vmatpush1.msra.mxu0 %v331
        %1302 = vmatprep.subr.mxu0 0.0
        %1303 = vmatpush1.msra.mxu0 %v330
        %1304 = vmatprep.subr.mxu0 0.0
        %1305 = vmatpush2.msra.mxu0 0.0
        %1306 = vmatprep.subr.mxu0 0.0
        %1307 = vmatpush2.msra.mxu0 0.0
        %1308 = vmatprep.subr.mxu0 0.0
        %1309 = vmatpush2.msra.mxu0 0.0
        %1310 = vmatprep.subr.mxu0 0.0
        %1311 = vmatpush2.msra.mxu0 0.0
        %1312 = vmatprep.subr.mxu0 0.0
        %1313 = vmatpush2.msra.mxu0 0.0
        %1314 = vmatprep.subr.mxu0 0.0
        %1315 = vmatpush2.msra.mxu0 0.0
        %1316 = vmatprep.subr.mxu0 0.0
        %1317 = vmatpush2.msra.mxu0 0.0
        %1318 = vmatprep.subr.mxu0 0.0
        %1319 = vmatpush2.msra.mxu0 0.0
        %1320 = vmatprep.subr.mxu0 0.0
        %1321 = vmatpush2.msra.mxu0 0.0
        %1322 = vmatprep.subr.mxu0 0.0
        %1323 = vmatpush2.msra.mxu0 0.0
        %1324 = vmatprep.subr.mxu0 0.0
        %1325 = vmatpush2.msra.mxu0 0.0
        %1326 = vmatprep.subr.mxu0 0.0
        %1327 = vmatpush2.msra.mxu0 0.0
        %1328 = vmatprep.subr.mxu0 0.0
        %1329 = vmatpush2.msra.mxu0 0.0
        %1330 = vmatprep.subr.mxu0 0.0
        %1331 = vmatpush2.msra.mxu0 0.0
        %1332 = vmatprep.subr.mxu0 0.0
        %1333 = vmatpush2.msra.mxu0 0.0
        %1334 = vmatprep.subr.mxu0 0.0
        %1335 = vmatpush2.msra.mxu0 0.0
        %1336 = vmatprep.mubr.f32.mxu0 0.0
        %1337 = vmatmul.mubr.f32.gmra.mxu0 %v1270
        %v1338 = vpop.f32.mrf.mxu0
        %v1339 = vadd.f32 0.0, %v1338
        %v1340 = vpop.f32.mrf.mxu0
        %1341 = vdwg.mxu0
        %v1343 = vrot.slane %v1339, 3
        %v1345 = vadd.f32 %v732, %v1343
        %v1346 = vxor.u32 %v1345, 2147483648
        %v1347 = vmul.f32 %v1346, 1.442695
        %v1348 = vpow.pop %v1347
        %v1349 = vadd.f32 %v1348, 1.0
        %v1350 = vrcp.pop %v1349
        %v1351 = vmul.f32 1.0, %v1350
        %v1352 = vtanh.pop %v1345
        %v1354 = vrot.slane %v1259, 7
        %v1356 = vmul.f32 %v1351, %v1354
        %1358 = vrot.lane.b32.xlu0 %v1352, 80
        %v1359 = vpop.permute.xlu0 %1358
        %v1361 = vmul.f32 %v1351, %v1359
        %1363 = vrot.lane.b32.xlu0 %v1361, 16
        %v1364 = vpop.permute.xlu0 %1363
        %v1366 = vadd.f32 %v1356, %v1364
        %v1367 = vtanh.pop %v1366
        %1369 = vrot.lane.b32.xlu0 %v1367, 16
        %v1370 = vpop.permute.xlu0 %1369
        %v1372 = vmul.f32 %v1351, %v1370
        %v1374 = vrot.slane %v1372, 5
        %1375 = vrot.lane.b32.xlu0 %v1374, 96
        %v1376 = vpop.permute.xlu0 %1375
        %v1377 = vsel %vm740, %v1376, 0
        %1379 = vmatprep.subr.mxu0 0.0
        %1380 = vmatpush1.msra.mxu0 0.0
        %1381 = vmatprep.subr.mxu0 0.0
        %1382 = vmatpush1.msra.mxu0 0.0
        %1383 = vmatprep.subr.mxu0 0.0
        %1384 = vmatpush1.msra.mxu0 0.0
        %1385 = vmatprep.subr.mxu0 0.0
        %1386 = vmatpush1.msra.mxu0 0.0
        %1387 = vmatprep.subr.mxu0 0.0
        %1388 = vmatpush1.msra.mxu0 0.0
        %1389 = vmatprep.subr.mxu0 0.0
        %1390 = vmatpush1.msra.mxu0 0.0
        %1391 = vmatprep.subr.mxu0 0.0
        %1392 = vmatpush1.msra.mxu0 0.0
        %1393 = vmatprep.subr.mxu0 0.0
        %1394 = vmatpush1.msra.mxu0 0.0
        %1395 = vmatprep.subr.mxu0 0.0
        %1396 = vmatpush1.msra.mxu0 0.0
        %1397 = vmatprep.subr.mxu0 0.0
        %1398 = vmatpush1.msra.mxu0 0.0
        %1399 = vmatprep.subr.mxu0 0.0
        %1400 = vmatpush1.msra.mxu0 0.0
        %1401 = vmatprep.subr.mxu0 0.0
        %1402 = vmatpush1.msra.mxu0 0.0
        %1403 = vmatprep.subr.mxu0 0.0
        %1404 = vmatpush1.msra.mxu0 0.0
        %1405 = vmatprep.subr.mxu0 0.0
        %1406 = vmatpush1.msra.mxu0 0.0
        %1407 = vmatprep.subr.mxu0 0.0
        %1408 = vmatpush1.msra.mxu0 %v331
        %1409 = vmatprep.subr.mxu0 0.0
        %1410 = vmatpush1.msra.mxu0 %v330
        %1411 = vmatprep.subr.mxu0 0.0
        %1412 = vmatpush2.msra.mxu0 0.0
        %1413 = vmatprep.subr.mxu0 0.0
        %1414 = vmatpush2.msra.mxu0 0.0
        %1415 = vmatprep.subr.mxu0 0.0
        %1416 = vmatpush2.msra.mxu0 0.0
        %1417 = vmatprep.subr.mxu0 0.0
        %1418 = vmatpush2.msra.mxu0 0.0
        %1419 = vmatprep.subr.mxu0 0.0
        %1420 = vmatpush2.msra.mxu0 0.0
        %1421 = vmatprep.subr.mxu0 0.0
        %1422 = vmatpush2.msra.mxu0 0.0
        %1423 = vmatprep.subr.mxu0 0.0
        %1424 = vmatpush2.msra.mxu0 0.0
        %1425 = vmatprep.subr.mxu0 0.0
        %1426 = vmatpush2.msra.mxu0 0.0
        %1427 = vmatprep.subr.mxu0 0.0
        %1428 = vmatpush2.msra.mxu0 0.0
        %1429 = vmatprep.subr.mxu0 0.0
        %1430 = vmatpush2.msra.mxu0 0.0
        %1431 = vmatprep.subr.mxu0 0.0
        %1432 = vmatpush2.msra.mxu0 0.0
        %1433 = vmatprep.subr.mxu0 0.0
        %1434 = vmatpush2.msra.mxu0 0.0
        %1435 = vmatprep.subr.mxu0 0.0
        %1436 = vmatpush2.msra.mxu0 0.0
        %1437 = vmatprep.subr.mxu0 0.0
        %1438 = vmatpush2.msra.mxu0 0.0
        %1439 = vmatprep.subr.mxu0 0.0
        %1440 = vmatpush2.msra.mxu0 0.0
        %1441 = vmatprep.subr.mxu0 0.0
        %1442 = vmatpush2.msra.mxu0 0.0
        %1443 = vmatprep.mubr.f32.mxu0 0.0
        %1444 = vmatmul.mubr.f32.gmra.mxu0 %v1377
        %v1445 = vpop.f32.mrf.mxu0
        %v1446 = vadd.f32 0.0, %v1445
        %v1447 = vpop.f32.mrf.mxu0
        %1448 = vdwg.mxu0
        %v1450 = vrot.slane %v1446, 2
        %v1452 = vadd.f32 %v732, %v1450
        %v1453 = vxor.u32 %v1452, 2147483648
        %v1454 = vmul.f32 %v1453, 1.442695
        %v1455 = vpow.pop %v1454
        %v1456 = vadd.f32 %v1455, 1.0
        %v1457 = vrcp.pop %v1456
        %v1458 = vmul.f32 1.0, %v1457
        %v1459 = vtanh.pop %v1452
        %v1461 = vrot.slane %v1366, 7
        %v1463 = vmul.f32 %v1458, %v1461
        %1465 = vrot.lane.b32.xlu0 %v1459, 80
        %v1466 = vpop.permute.xlu0 %1465
        %v1468 = vmul.f32 %v1458, %v1466
        %1470 = vrot.lane.b32.xlu0 %v1468, 16
        %v1471 = vpop.permute.xlu0 %1470
        %v1473 = vadd.f32 %v1463, %v1471
        %v1474 = vtanh.pop %v1473
        %1476 = vrot.lane.b32.xlu0 %v1474, 16
        %v1477 = vpop.permute.xlu0 %1476
        %v1479 = vmul.f32 %v1458, %v1477
        %v1481 = vrot.slane %v1479, 6
        %1482 = vrot.lane.b32.xlu0 %v1481, 96
        %v1483 = vpop.permute.xlu0 %1482
        %v1484 = vsel %vm740, %v1483, 0
        %1486 = vmatprep.subr.mxu0 0.0
        %1487 = vmatpush1.msra.mxu0 0.0
        %1488 = vmatprep.subr.mxu0 0.0
        %1489 = vmatpush1.msra.mxu0 0.0
        %1490 = vmatprep.subr.mxu0 0.0
        %1491 = vmatpush1.msra.mxu0 0.0
        %1492 = vmatprep.subr.mxu0 0.0
        %1493 = vmatpush1.msra.mxu0 0.0
        %1494 = vmatprep.subr.mxu0 0.0
        %1495 = vmatpush1.msra.mxu0 0.0
        %1496 = vmatprep.subr.mxu0 0.0
        %1497 = vmatpush1.msra.mxu0 0.0
        %1498 = vmatprep.subr.mxu0 0.0
        %1499 = vmatpush1.msra.mxu0 0.0
        %1500 = vmatprep.subr.mxu0 0.0
        %1501 = vmatpush1.msra.mxu0 0.0
        %1502 = vmatprep.subr.mxu0 0.0
        %1503 = vmatpush1.msra.mxu0 0.0
        %1504 = vmatprep.subr.mxu0 0.0
        %1505 = vmatpush1.msra.mxu0 0.0
        %1506 = vmatprep.subr.mxu0 0.0
        %1507 = vmatpush1.msra.mxu0 0.0
        %1508 = vmatprep.subr.mxu0 0.0
        %1509 = vmatpush1.msra.mxu0 0.0
        %1510 = vmatprep.subr.mxu0 0.0
        %1511 = vmatpush1.msra.mxu0 0.0
        %1512 = vmatprep.subr.mxu0 0.0
        %1513 = vmatpush1.msra.mxu0 0.0
        %1514 = vmatprep.subr.mxu0 0.0
        %1515 = vmatpush1.msra.mxu0 %v331
        %1516 = vmatprep.subr.mxu0 0.0
        %1517 = vmatpush1.msra.mxu0 %v330
        %1518 = vmatprep.subr.mxu0 0.0
        %1519 = vmatpush2.msra.mxu0 0.0
        %1520 = vmatprep.subr.mxu0 0.0
        %1521 = vmatpush2.msra.mxu0 0.0
        %1522 = vmatprep.subr.mxu0 0.0
        %1523 = vmatpush2.msra.mxu0 0.0
        %1524 = vmatprep.subr.mxu0 0.0
        %1525 = vmatpush2.msra.mxu0 0.0
        %1526 = vmatprep.subr.mxu0 0.0
        %1527 = vmatpush2.msra.mxu0 0.0
        %1528 = vmatprep.subr.mxu0 0.0
        %1529 = vmatpush2.msra.mxu0 0.0
        %1530 = vmatprep.subr.mxu0 0.0
        %1531 = vmatpush2.msra.mxu0 0.0
        %1532 = vmatprep.subr.mxu0 0.0
        %1533 = vmatpush2.msra.mxu0 0.0
        %1534 = vmatprep.subr.mxu0 0.0
        %1535 = vmatpush2.msra.mxu0 0.0
        %1536 = vmatprep.subr.mxu0 0.0
        %1537 = vmatpush2.msra.mxu0 0.0
        %1538 = vmatprep.subr.mxu0 0.0
        %1539 = vmatpush2.msra.mxu0 0.0
        %1540 = vmatprep.subr.mxu0 0.0
        %1541 = vmatpush2.msra.mxu0 0.0
        %1542 = vmatprep.subr.mxu0 0.0
        %1543 = vmatpush2.msra.mxu0 0.0
        %1544 = vmatprep.subr.mxu0 0.0
        %1545 = vmatpush2.msra.mxu0 0.0
        %1546 = vmatprep.subr.mxu0 0.0
        %1547 = vmatpush2.msra.mxu0 0.0
        %1548 = vmatprep.subr.mxu0 0.0
        %1549 = vmatpush2.msra.mxu0 0.0
        %1550 = vmatprep.mubr.f32.mxu0 0.0
        %1551 = vmatmul.mubr.f32.gmra.mxu0 %v1484
        %v1552 = vpop.f32.mrf.mxu0
        %v1553 = vadd.f32 0.0, %v1552
        %v1554 = vpop.f32.mrf.mxu0
        %1555 = vdwg.mxu0
        %v1557 = vrot.slane %v1553, 1
        %v1559 = vadd.f32 %v732, %v1557
        %v1560 = vxor.u32 %v1559, 2147483648
        %v1561 = vmul.f32 %v1560, 1.442695
        %v1562 = vpow.pop %v1561
        %v1563 = vadd.f32 %v1562, 1.0
        %v1564 = vrcp.pop %v1563
        %v1565 = vmul.f32 1.0, %v1564
        %v1566 = vtanh.pop %v1559
        %v1568 = vrot.slane %v1473, 7
        %v1570 = vmul.f32 %v1565, %v1568
        %1572 = vrot.lane.b32.xlu0 %v1566, 80
        %v1573 = vpop.permute.xlu0 %1572
        %v1575 = vmul.f32 %v1565, %v1573
        %1577 = vrot.lane.b32.xlu0 %v1575, 16
        %v1578 = vpop.permute.xlu0 %1577
        %v1580 = vadd.f32 %v1570, %v1578
        %v1581 = vtanh.pop %v1580
        %1583 = vrot.lane.b32.xlu0 %v1581, 16
        %v1584 = vpop.permute.xlu0 %1583
        %v1586 = vmul.f32 %v1565, %v1584
        %v1588 = vrot.slane %v1586, 7
        %1589 = vrot.lane.b32.xlu0 %v1588, 96
        %v1590 = vpop.permute.xlu0 %1589
        %v1591 = vsel %vm740, %v1590, 0
        %1593 = vmatprep.subr.mxu0 0.0
        %1594 = vmatpush1.msra.mxu0 0.0
        %1595 = vmatprep.subr.mxu0 0.0
        %1596 = vmatpush1.msra.mxu0 0.0
        %1597 = vmatprep.subr.mxu0 0.0
        %1598 = vmatpush1.msra.mxu0 0.0
        %1599 = vmatprep.subr.mxu0 0.0
        %1600 = vmatpush1.msra.mxu0 0.0
        %1601 = vmatprep.subr.mxu0 0.0
        %1602 = vmatpush1.msra.mxu0 0.0
        %1603 = vmatprep.subr.mxu0 0.0
        %1604 = vmatpush1.msra.mxu0 0.0
        %1605 = vmatprep.subr.mxu0 0.0
        %1606 = vmatpush1.msra.mxu0 0.0
        %1607 = vmatprep.subr.mxu0 0.0
        %1608 = vmatpush1.msra.mxu0 0.0
        %1609 = vmatprep.subr.mxu0 0.0
        %1610 = vmatpush1.msra.mxu0 0.0
        %1611 = vmatprep.subr.mxu0 0.0
        %1612 = vmatpush1.msra.mxu0 0.0
        %1613 = vmatprep.subr.mxu0 0.0
        %1614 = vmatpush1.msra.mxu0 0.0
        %1615 = vmatprep.subr.mxu0 0.0
        %1616 = vmatpush1.msra.mxu0 0.0
        %1617 = vmatprep.subr.mxu0 0.0
        %1618 = vmatpush1.msra.mxu0 0.0
        %1619 = vmatprep.subr.mxu0 0.0
        %1620 = vmatpush1.msra.mxu0 0.0
        %1621 = vmatprep.subr.mxu0 0.0
        %1622 = vmatpush1.msra.mxu0 %v331
        %1623 = vmatprep.subr.mxu0 0.0
        %1624 = vmatpush1.msra.mxu0 %v330
        %1625 = vmatprep.subr.mxu0 0.0
        %1626 = vmatpush2.msra.mxu0 0.0
        %1627 = vmatprep.subr.mxu0 0.0
        %1628 = vmatpush2.msra.mxu0 0.0
        %1629 = vmatprep.subr.mxu0 0.0
        %1630 = vmatpush2.msra.mxu0 0.0
        %1631 = vmatprep.subr.mxu0 0.0
        %1632 = vmatpush2.msra.mxu0 0.0
        %1633 = vmatprep.subr.mxu0 0.0
        %1634 = vmatpush2.msra.mxu0 0.0
        %1635 = vmatprep.subr.mxu0 0.0
        %1636 = vmatpush2.msra.mxu0 0.0
        %1637 = vmatprep.subr.mxu0 0.0
        %1638 = vmatpush2.msra.mxu0 0.0
        %1639 = vmatprep.subr.mxu0 0.0
        %1640 = vmatpush2.msra.mxu0 0.0
        %1641 = vmatprep.subr.mxu0 0.0
        %1642 = vmatpush2.msra.mxu0 0.0
        %1643 = vmatprep.subr.mxu0 0.0
        %1644 = vmatpush2.msra.mxu0 0.0
        %1645 = vmatprep.subr.mxu0 0.0
        %1646 = vmatpush2.msra.mxu0 0.0
        %1647 = vmatprep.subr.mxu0 0.0
        %1648 = vmatpush2.msra.mxu0 0.0
        %1649 = vmatprep.subr.mxu0 0.0
        %1650 = vmatpush2.msra.mxu0 0.0
        %1651 = vmatprep.subr.mxu0 0.0
        %1652 = vmatpush2.msra.mxu0 0.0
        %1653 = vmatprep.subr.mxu0 0.0
        %1654 = vmatpush2.msra.mxu0 0.0
        %1655 = vmatprep.subr.mxu0 0.0
        %1656 = vmatpush2.msra.mxu0 0.0
        %1657 = vmatprep.mubr.f32.mxu0 0.0
        %1658 = vmatmul.mubr.f32.gmra.mxu0 %v1591
        %v1659 = vpop.f32.mrf.mxu0
        %v1660 = vadd.f32 0.0, %v1659
        %v1661 = vpop.f32.mrf.mxu0
        %1662 = vdwg.mxu0
        %v1663 = vadd.f32 %v737, %v1660
        %v1664 = vxor.u32 %v1663, 2147483648
        %v1665 = vmul.f32 %v1664, 1.442695
        %v1666 = vpow.pop %v1665
        %v1667 = vadd.f32 %v1666, 1.0
        %v1668 = vrcp.pop %v1667
        %v1669 = vmul.f32 1.0, %v1668
        %v1670 = vtanh.pop %v1663
        %v1672 = vrot.slane %v1580, 7
        %v1674 = vmul.f32 %v1669, %v1672
        %1676 = vrot.lane.b32.xlu0 %v1670, 80
        %v1677 = vpop.permute.xlu0 %1676
        %v1679 = vmul.f32 %v1669, %v1677
        %1681 = vrot.lane.b32.xlu0 %v1679, 16
        %v1682 = vpop.permute.xlu0 %1681
        %v1684 = vadd.f32 %v1674, %v1682
        %v1685 = vtanh.pop %v1684
        %1687 = vrot.lane.b32.xlu0 %v1685, 16
        %v1688 = vpop.permute.xlu0 %1687
        %v1690 = vmul.f32 %v1669, %v1688
        %1692 = vrot.lane.b32.xlu0 %v1690, 96
        %v1693 = vpop.permute.xlu0 %1692
        %v1694 = vsel %vm740, %v1693, 0
        %1696 = vmatprep.subr.mxu0 0.0
        %1697 = vmatpush1.msra.mxu0 0.0
        %1698 = vmatprep.subr.mxu0 0.0
        %1699 = vmatpush1.msra.mxu0 0.0
        %1700 = vmatprep.subr.mxu0 0.0
        %1701 = vmatpush1.msra.mxu0 0.0
        %1702 = vmatprep.subr.mxu0 0.0
        %1703 = vmatpush1.msra.mxu0 0.0
        %1704 = vmatprep.subr.mxu0 0.0
        %1705 = vmatpush1.msra.mxu0 0.0
        %1706 = vmatprep.subr.mxu0 0.0
        %1707 = vmatpush1.msra.mxu0 0.0
        %1708 = vmatprep.subr.mxu0 0.0
        %1709 = vmatpush1.msra.mxu0 0.0
        %1710 = vmatprep.subr.mxu0 0.0
        %1711 = vmatpush1.msra.mxu0 0.0
        %1712 = vmatprep.subr.mxu0 0.0
        %1713 = vmatpush1.msra.mxu0 0.0
        %1714 = vmatprep.subr.mxu0 0.0
        %1715 = vmatpush1.msra.mxu0 0.0
        %1716 = vmatprep.subr.mxu0 0.0
        %1717 = vmatpush1.msra.mxu0 0.0
        %1718 = vmatprep.subr.mxu0 0.0
        %1719 = vmatpush1.msra.mxu0 0.0
        %1720 = vmatprep.subr.mxu0 0.0
        %1721 = vmatpush1.msra.mxu0 0.0
        %1722 = vmatprep.subr.mxu0 0.0
        %1723 = vmatpush1.msra.mxu0 0.0
        %1724 = vmatprep.subr.mxu0 0.0
        %1725 = vmatpush1.msra.mxu0 %v331
        %1726 = vmatprep.subr.mxu0 0.0
        %1727 = vmatpush1.msra.mxu0 %v330
        %1728 = vmatprep.subr.mxu0 0.0
        %1729 = vmatpush2.msra.mxu0 0.0
        %1730 = vmatprep.subr.mxu0 0.0
        %1731 = vmatpush2.msra.mxu0 0.0
        %1732 = vmatprep.subr.mxu0 0.0
        %1733 = vmatpush2.msra.mxu0 0.0
        %1734 = vmatprep.subr.mxu0 0.0
        %1735 = vmatpush2.msra.mxu0 0.0
        %1736 = vmatprep.subr.mxu0 0.0
        %1737 = vmatpush2.msra.mxu0 0.0
        %1738 = vmatprep.subr.mxu0 0.0
        %1739 = vmatpush2.msra.mxu0 0.0
        %1740 = vmatprep.subr.mxu0 0.0
        %1741 = vmatpush2.msra.mxu0 0.0
        %1742 = vmatprep.subr.mxu0 0.0
        %1743 = vmatpush2.msra.mxu0 0.0
        %1744 = vmatprep.subr.mxu0 0.0
        %1745 = vmatpush2.msra.mxu0 0.0
        %1746 = vmatprep.subr.mxu0 0.0
        %1747 = vmatpush2.msra.mxu0 0.0
        %1748 = vmatprep.subr.mxu0 0.0
        %1749 = vmatpush2.msra.mxu0 0.0
        %1750 = vmatprep.subr.mxu0 0.0
        %1751 = vmatpush2.msra.mxu0 0.0
        %1752 = vmatprep.subr.mxu0 0.0
        %1753 = vmatpush2.msra.mxu0 0.0
        %1754 = vmatprep.subr.mxu0 0.0
        %1755 = vmatpush2.msra.mxu0 0.0
        %1756 = vmatprep.subr.mxu0 0.0
        %1757 = vmatpush2.msra.mxu0 0.0
        %1758 = vmatprep.subr.mxu0 0.0
        %1759 = vmatpush2.msra.mxu0 0.0
        %1760 = vmatprep.mubr.f32.mxu0 0.0
        %1761 = vmatmul.mubr.f32.gmra.mxu0 %v1694
        %v1762 = vpop.f32.mrf.mxu0
        %v1763 = vadd.f32 0.0, %v1762
        %v1764 = vpop.f32.mrf.mxu0
        %1765 = vdwg.mxu0
        %v1767 = vrot.slane %v1763, 7
        %v1769 = vadd.f32 %v737, %v1767
        %v1770 = vxor.u32 %v1769, 2147483648
        %v1771 = vmul.f32 %v1770, 1.442695
        %v1772 = vpow.pop %v1771
        %v1773 = vadd.f32 %v1772, 1.0
        %v1774 = vrcp.pop %v1773
        %v1775 = vmul.f32 1.0, %v1774
        %v1776 = vtanh.pop %v1769
        %v1778 = vrot.slane %v1684, 7
        %v1780 = vmul.f32 %v1775, %v1778
        %1782 = vrot.lane.b32.xlu0 %v1776, 80
        %v1783 = vpop.permute.xlu0 %1782
        %v1785 = vmul.f32 %v1775, %v1783
        %1787 = vrot.lane.b32.xlu0 %v1785, 16
        %v1788 = vpop.permute.xlu0 %1787
        %v1790 = vadd.f32 %v1780, %v1788
        %v1791 = vtanh.pop %v1790
        %1793 = vrot.lane.b32.xlu0 %v1791, 16
        %v1794 = vpop.permute.xlu0 %1793
        %v1796 = vmul.f32 %v1775, %v1794
        %v1798 = vrot.slane %v1796, 1
        %1799 = vrot.lane.b32.xlu0 %v1798, 96
        %v1800 = vpop.permute.xlu0 %1799
        %v1801 = vsel %vm740, %v1800, 0
        %1803 = vmatprep.subr.mxu0 0.0
        %1804 = vmatpush1.msra.mxu0 0.0
        %1805 = vmatprep.subr.mxu0 0.0
        %1806 = vmatpush1.msra.mxu0 0.0
        %1807 = vmatprep.subr.mxu0 0.0
        %1808 = vmatpush1.msra.mxu0 0.0
        %1809 = vmatprep.subr.mxu0 0.0
        %1810 = vmatpush1.msra.mxu0 0.0
        %1811 = vmatprep.subr.mxu0 0.0
        %1812 = vmatpush1.msra.mxu0 0.0
        %1813 = vmatprep.subr.mxu0 0.0
        %1814 = vmatpush1.msra.mxu0 0.0
        %1815 = vmatprep.subr.mxu0 0.0
        %1816 = vmatpush1.msra.mxu0 0.0
        %1817 = vmatprep.subr.mxu0 0.0
        %1818 = vmatpush1.msra.mxu0 0.0
        %1819 = vmatprep.subr.mxu0 0.0
        %1820 = vmatpush1.msra.mxu0 0.0
        %1821 = vmatprep.subr.mxu0 0.0
        %1822 = vmatpush1.msra.mxu0 0.0
        %1823 = vmatprep.subr.mxu0 0.0
        %1824 = vmatpush1.msra.mxu0 0.0
        %1825 = vmatprep.subr.mxu0 0.0
        %1826 = vmatpush1.msra.mxu0 0.0
        %1827 = vmatprep.subr.mxu0 0.0
        %1828 = vmatpush1.msra.mxu0 0.0
        %1829 = vmatprep.subr.mxu0 0.0
        %1830 = vmatpush1.msra.mxu0 0.0
        %1831 = vmatprep.subr.mxu0 0.0
        %1832 = vmatpush1.msra.mxu0 %v331
        %1833 = vmatprep.subr.mxu0 0.0
        %1834 = vmatpush1.msra.mxu0 %v330
        %1835 = vmatprep.subr.mxu0 0.0
        %1836 = vmatpush2.msra.mxu0 0.0
        %1837 = vmatprep.subr.mxu0 0.0
        %1838 = vmatpush2.msra.mxu0 0.0
        %1839 = vmatprep.subr.mxu0 0.0
        %1840 = vmatpush2.msra.mxu0 0.0
        %1841 = vmatprep.subr.mxu0 0.0
        %1842 = vmatpush2.msra.mxu0 0.0
        %1843 = vmatprep.subr.mxu0 0.0
        %1844 = vmatpush2.msra.mxu0 0.0
        %1845 = vmatprep.subr.mxu0 0.0
        %1846 = vmatpush2.msra.mxu0 0.0
        %1847 = vmatprep.subr.mxu0 0.0
        %1848 = vmatpush2.msra.mxu0 0.0
        %1849 = vmatprep.subr.mxu0 0.0
        %1850 = vmatpush2.msra.mxu0 0.0
        %1851 = vmatprep.subr.mxu0 0.0
        %1852 = vmatpush2.msra.mxu0 0.0
        %1853 = vmatprep.subr.mxu0 0.0
        %1854 = vmatpush2.msra.mxu0 0.0
        %1855 = vmatprep.subr.mxu0 0.0
        %1856 = vmatpush2.msra.mxu0 0.0
        %1857 = vmatprep.subr.mxu0 0.0
        %1858 = vmatpush2.msra.mxu0 0.0
        %1859 = vmatprep.subr.mxu0 0.0
        %1860 = vmatpush2.msra.mxu0 0.0
        %1861 = vmatprep.subr.mxu0 0.0
        %1862 = vmatpush2.msra.mxu0 0.0
        %1863 = vmatprep.subr.mxu0 0.0
        %1864 = vmatpush2.msra.mxu0 0.0
        %1865 = vmatprep.subr.mxu0 0.0
        %1866 = vmatpush2.msra.mxu0 0.0
        %1867 = vmatprep.mubr.f32.mxu0 0.0
        %1868 = vmatmul.mubr.f32.gmra.mxu0 %v1801
        %v1869 = vpop.f32.mrf.mxu0
        %v1870 = vadd.f32 0.0, %v1869
        %v1871 = vpop.f32.mrf.mxu0
        %1872 = vdwg.mxu0
        %v1874 = vrot.slane %v1870, 6
        %v1876 = vadd.f32 %v737, %v1874
        %v1877 = vxor.u32 %v1876, 2147483648
        %v1878 = vmul.f32 %v1877, 1.442695
        %v1879 = vpow.pop %v1878
        %v1880 = vadd.f32 %v1879, 1.0
        %v1881 = vrcp.pop %v1880
        %v1882 = vmul.f32 1.0, %v1881
        %v1883 = vtanh.pop %v1876
        %v1885 = vrot.slane %v1790, 7
        %v1887 = vmul.f32 %v1882, %v1885
        %1889 = vrot.lane.b32.xlu0 %v1883, 80
        %v1890 = vpop.permute.xlu0 %1889
        %v1892 = vmul.f32 %v1882, %v1890
        %1894 = vrot.lane.b32.xlu0 %v1892, 16
        %v1895 = vpop.permute.xlu0 %1894
        %v1897 = vadd.f32 %v1887, %v1895
        %v1898 = vtanh.pop %v1897
        %1900 = vrot.lane.b32.xlu0 %v1898, 16
        %v1901 = vpop.permute.xlu0 %1900
        %v1903 = vmul.f32 %v1882, %v1901
        %v1905 = vrot.slane %v1903, 2
        %1906 = vrot.lane.b32.xlu0 %v1905, 96
        %v1907 = vpop.permute.xlu0 %1906
        %v1908 = vsel %vm740, %v1907, 0
        %1910 = vmatprep.subr.mxu0 0.0
        %1911 = vmatpush1.msra.mxu0 0.0
        %1912 = vmatprep.subr.mxu0 0.0
        %1913 = vmatpush1.msra.mxu0 0.0
        %1914 = vmatprep.subr.mxu0 0.0
        %1915 = vmatpush1.msra.mxu0 0.0
        %1916 = vmatprep.subr.mxu0 0.0
        %1917 = vmatpush1.msra.mxu0 0.0
        %1918 = vmatprep.subr.mxu0 0.0
        %1919 = vmatpush1.msra.mxu0 0.0
        %1920 = vmatprep.subr.mxu0 0.0
        %1921 = vmatpush1.msra.mxu0 0.0
        %1922 = vmatprep.subr.mxu0 0.0
        %1923 = vmatpush1.msra.mxu0 0.0
        %1924 = vmatprep.subr.mxu0 0.0
        %1925 = vmatpush1.msra.mxu0 0.0
        %1926 = vmatprep.subr.mxu0 0.0
        %1927 = vmatpush1.msra.mxu0 0.0
        %1928 = vmatprep.subr.mxu0 0.0
        %1929 = vmatpush1.msra.mxu0 0.0
        %1930 = vmatprep.subr.mxu0 0.0
        %1931 = vmatpush1.msra.mxu0 0.0
        %1932 = vmatprep.subr.mxu0 0.0
        %1933 = vmatpush1.msra.mxu0 0.0
        %1934 = vmatprep.subr.mxu0 0.0
        %1935 = vmatpush1.msra.mxu0 0.0
        %1936 = vmatprep.subr.mxu0 0.0
        %1937 = vmatpush1.msra.mxu0 0.0
        %1938 = vmatprep.subr.mxu0 0.0
        %1939 = vmatpush1.msra.mxu0 %v331
        %1940 = vmatprep.subr.mxu0 0.0
        %1941 = vmatpush1.msra.mxu0 %v330
        %1942 = vmatprep.subr.mxu0 0.0
        %1943 = vmatpush2.msra.mxu0 0.0
        %1944 = vmatprep.subr.mxu0 0.0
        %1945 = vmatpush2.msra.mxu0 0.0
        %1946 = vmatprep.subr.mxu0 0.0
        %1947 = vmatpush2.msra.mxu0 0.0
        %1948 = vmatprep.subr.mxu0 0.0
        %1949 = vmatpush2.msra.mxu0 0.0
        %1950 = vmatprep.subr.mxu0 0.0
        %1951 = vmatpush2.msra.mxu0 0.0
        %1952 = vmatprep.subr.mxu0 0.0
        %1953 = vmatpush2.msra.mxu0 0.0
        %1954 = vmatprep.subr.mxu0 0.0
        %1955 = vmatpush2.msra.mxu0 0.0
        %1956 = vmatprep.subr.mxu0 0.0
        %1957 = vmatpush2.msra.mxu0 0.0
        %1958 = vmatprep.subr.mxu0 0.0
        %1959 = vmatpush2.msra.mxu0 0.0
        %1960 = vmatprep.subr.mxu0 0.0
        %1961 = vmatpush2.msra.mxu0 0.0
        %1962 = vmatprep.subr.mxu0 0.0
        %1963 = vmatpush2.msra.mxu0 0.0
        %1964 = vmatprep.subr.mxu0 0.0
        %1965 = vmatpush2.msra.mxu0 0.0
        %1966 = vmatprep.subr.mxu0 0.0
        %1967 = vmatpush2.msra.mxu0 0.0
        %1968 = vmatprep.subr.mxu0 0.0
        %1969 = vmatpush2.msra.mxu0 0.0
        %1970 = vmatprep.subr.mxu0 0.0
        %1971 = vmatpush2.msra.mxu0 0.0
        %1972 = vmatprep.subr.mxu0 0.0
        %1973 = vmatpush2.msra.mxu0 0.0
        %1974 = vmatprep.mubr.f32.mxu0 0.0
        %1975 = vmatmul.mubr.f32.gmra.mxu0 %v1908
        %v1976 = vpop.f32.mrf.mxu0
        %v1977 = vadd.f32 0.0, %v1976
        %v1978 = vpop.f32.mrf.mxu0
        %1979 = vdwg.mxu0
        %v1981 = vrot.slane %v1977, 5
        %v1983 = vadd.f32 %v737, %v1981
        %v1984 = vxor.u32 %v1983, 2147483648
        %v1985 = vmul.f32 %v1984, 1.442695
        %v1986 = vpow.pop %v1985
        %v1987 = vadd.f32 %v1986, 1.0
        %v1988 = vrcp.pop %v1987
        %v1989 = vmul.f32 1.0, %v1988
        %v1990 = vtanh.pop %v1983
        %v1992 = vrot.slane %v1897, 7
        %v1994 = vmul.f32 %v1989, %v1992
        %1996 = vrot.lane.b32.xlu0 %v1990, 80
        %v1997 = vpop.permute.xlu0 %1996
        %v1999 = vmul.f32 %v1989, %v1997
        %2001 = vrot.lane.b32.xlu0 %v1999, 16
        %v2002 = vpop.permute.xlu0 %2001
        %v2004 = vadd.f32 %v1994, %v2002
        %v2005 = vtanh.pop %v2004
        %2007 = vrot.lane.b32.xlu0 %v2005, 16
        %v2008 = vpop.permute.xlu0 %2007
        %v2010 = vmul.f32 %v1989, %v2008
        %v2012 = vrot.slane %v2010, 3
        %2013 = vrot.lane.b32.xlu0 %v2012, 96
        %v2014 = vpop.permute.xlu0 %2013
        %v2015 = vsel %vm740, %v2014, 0
        %2017 = vmatprep.subr.mxu0 0.0
        %2018 = vmatpush1.msra.mxu0 0.0
        %2019 = vmatprep.subr.mxu0 0.0
        %2020 = vmatpush1.msra.mxu0 0.0
        %2021 = vmatprep.subr.mxu0 0.0
        %2022 = vmatpush1.msra.mxu0 0.0
        %2023 = vmatprep.subr.mxu0 0.0
        %2024 = vmatpush1.msra.mxu0 0.0
        %2025 = vmatprep.subr.mxu0 0.0
        %2026 = vmatpush1.msra.mxu0 0.0
        %2027 = vmatprep.subr.mxu0 0.0
        %2028 = vmatpush1.msra.mxu0 0.0
        %2029 = vmatprep.subr.mxu0 0.0
        %2030 = vmatpush1.msra.mxu0 0.0
        %2031 = vmatprep.subr.mxu0 0.0
        %2032 = vmatpush1.msra.mxu0 0.0
        %2033 = vmatprep.subr.mxu0 0.0
        %2034 = vmatpush1.msra.mxu0 0.0
        %2035 = vmatprep.subr.mxu0 0.0
        %2036 = vmatpush1.msra.mxu0 0.0
        %2037 = vmatprep.subr.mxu0 0.0
        %2038 = vmatpush1.msra.mxu0 0.0
        %2039 = vmatprep.subr.mxu0 0.0
        %2040 = vmatpush1.msra.mxu0 0.0
        %2041 = vmatprep.subr.mxu0 0.0
        %2042 = vmatpush1.msra.mxu0 0.0
        %2043 = vmatprep.subr.mxu0 0.0
        %2044 = vmatpush1.msra.mxu0 0.0
        %2045 = vmatprep.subr.mxu0 0.0
        %2046 = vmatpush1.msra.mxu0 %v331
        %2047 = vmatprep.subr.mxu0 0.0
        %2048 = vmatpush1.msra.mxu0 %v330
        %2049 = vmatprep.subr.mxu0 0.0
        %2050 = vmatpush2.msra.mxu0 0.0
        %2051 = vmatprep.subr.mxu0 0.0
        %2052 = vmatpush2.msra.mxu0 0.0
        %2053 = vmatprep.subr.mxu0 0.0
        %2054 = vmatpush2.msra.mxu0 0.0
        %2055 = vmatprep.subr.mxu0 0.0
        %2056 = vmatpush2.msra.mxu0 0.0
        %2057 = vmatprep.subr.mxu0 0.0
        %2058 = vmatpush2.msra.mxu0 0.0
        %2059 = vmatprep.subr.mxu0 0.0
        %2060 = vmatpush2.msra.mxu0 0.0
        %2061 = vmatprep.subr.mxu0 0.0
        %2062 = vmatpush2.msra.mxu0 0.0
        %2063 = vmatprep.subr.mxu0 0.0
        %2064 = vmatpush2.msra.mxu0 0.0
        %2065 = vmatprep.subr.mxu0 0.0
        %2066 = vmatpush2.msra.mxu0 0.0
        %2067 = vmatprep.subr.mxu0 0.0
        %2068 = vmatpush2.msra.mxu0 0.0
        %2069 = vmatprep.subr.mxu0 0.0
        %2070 = vmatpush2.msra.mxu0 0.0
        %2071 = vmatprep.subr.mxu0 0.0
        %2072 = vmatpush2.msra.mxu0 0.0
        %2073 = vmatprep.subr.mxu0 0.0
        %2074 = vmatpush2.msra.mxu0 0.0
        %2075 = vmatprep.subr.mxu0 0.0
        %2076 = vmatpush2.msra.mxu0 0.0
        %2077 = vmatprep.subr.mxu0 0.0
        %2078 = vmatpush2.msra.mxu0 0.0
        %2079 = vmatprep.subr.mxu0 0.0
        %2080 = vmatpush2.msra.mxu0 0.0
        %2081 = vmatprep.mubr.f32.mxu0 0.0
        %2082 = vmatmul.mubr.f32.gmra.mxu0 %v2015
        %v2083 = vpop.f32.mrf.mxu0
        %v2084 = vadd.f32 0.0, %v2083
        %v2085 = vpop.f32.mrf.mxu0
        %2086 = vdwg.mxu0
        %v2088 = vrot.slane %v2084, 4
        %v2090 = vadd.f32 %v737, %v2088
        %v2091 = vxor.u32 %v2090, 2147483648
        %v2092 = vmul.f32 %v2091, 1.442695
        %v2093 = vpow.pop %v2092
        %v2094 = vadd.f32 %v2093, 1.0
        %v2095 = vrcp.pop %v2094
        %v2096 = vmul.f32 1.0, %v2095
        %v2097 = vtanh.pop %v2090
        %v2099 = vrot.slane %v2004, 7
        %v2101 = vmul.f32 %v2096, %v2099
        %2103 = vrot.lane.b32.xlu0 %v2097, 80
        %v2104 = vpop.permute.xlu0 %2103
        %v2106 = vmul.f32 %v2096, %v2104
        %2108 = vrot.lane.b32.xlu0 %v2106, 16
        %v2109 = vpop.permute.xlu0 %2108
        %v2111 = vadd.f32 %v2101, %v2109
        %v2112 = vtanh.pop %v2111
        %2114 = vrot.lane.b32.xlu0 %v2112, 16
        %v2115 = vpop.permute.xlu0 %2114
        %v2117 = vmul.f32 %v2096, %v2115
        %v2119 = vrot.slane %v2117, 4
        %2120 = vrot.lane.b32.xlu0 %v2119, 96
        %v2121 = vpop.permute.xlu0 %2120
        %v2122 = vsel %vm740, %v2121, 0
        %2124 = vmatprep.subr.mxu0 0.0
        %2125 = vmatpush1.msra.mxu0 0.0
        %2126 = vmatprep.subr.mxu0 0.0
        %2127 = vmatpush1.msra.mxu0 0.0
        %2128 = vmatprep.subr.mxu0 0.0
        %2129 = vmatpush1.msra.mxu0 0.0
        %2130 = vmatprep.subr.mxu0 0.0
        %2131 = vmatpush1.msra.mxu0 0.0
        %2132 = vmatprep.subr.mxu0 0.0
        %2133 = vmatpush1.msra.mxu0 0.0
        %2134 = vmatprep.subr.mxu0 0.0
        %2135 = vmatpush1.msra.mxu0 0.0
        %2136 = vmatprep.subr.mxu0 0.0
        %2137 = vmatpush1.msra.mxu0 0.0
        %2138 = vmatprep.subr.mxu0 0.0
        %2139 = vmatpush1.msra.mxu0 0.0
        %2140 = vmatprep.subr.mxu0 0.0
        %2141 = vmatpush1.msra.mxu0 0.0
        %2142 = vmatprep.subr.mxu0 0.0
        %2143 = vmatpush1.msra.mxu0 0.0
        %2144 = vmatprep.subr.mxu0 0.0
        %2145 = vmatpush1.msra.mxu0 0.0
        %2146 = vmatprep.subr.mxu0 0.0
        %2147 = vmatpush1.msra.mxu0 0.0
        %2148 = vmatprep.subr.mxu0 0.0
        %2149 = vmatpush1.msra.mxu0 0.0
        %2150 = vmatprep.subr.mxu0 0.0
        %2151 = vmatpush1.msra.mxu0 0.0
        %2152 = vmatprep.subr.mxu0 0.0
        %2153 = vmatpush1.msra.mxu0 %v331
        %2154 = vmatprep.subr.mxu0 0.0
        %2155 = vmatpush1.msra.mxu0 %v330
        %2156 = vmatprep.subr.mxu0 0.0
        %2157 = vmatpush2.msra.mxu0 0.0
        %2158 = vmatprep.subr.mxu0 0.0
        %2159 = vmatpush2.msra.mxu0 0.0
        %2160 = vmatprep.subr.mxu0 0.0
        %2161 = vmatpush2.msra.mxu0 0.0
        %2162 = vmatprep.subr.mxu0 0.0
        %2163 = vmatpush2.msra.mxu0 0.0
        %2164 = vmatprep.subr.mxu0 0.0
        %2165 = vmatpush2.msra.mxu0 0.0
        %2166 = vmatprep.subr.mxu0 0.0
        %2167 = vmatpush2.msra.mxu0 0.0
        %2168 = vmatprep.subr.mxu0 0.0
        %2169 = vmatpush2.msra.mxu0 0.0
        %2170 = vmatprep.subr.mxu0 0.0
        %2171 = vmatpush2.msra.mxu0 0.0
        %2172 = vmatprep.subr.mxu0 0.0
        %2173 = vmatpush2.msra.mxu0 0.0
        %2174 = vmatprep.subr.mxu0 0.0
        %2175 = vmatpush2.msra.mxu0 0.0
        %2176 = vmatprep.subr.mxu0 0.0
        %2177 = vmatpush2.msra.mxu0 0.0
        %2178 = vmatprep.subr.mxu0 0.0
        %2179 = vmatpush2.msra.mxu0 0.0
        %2180 = vmatprep.subr.mxu0 0.0
        %2181 = vmatpush2.msra.mxu0 0.0
        %2182 = vmatprep.subr.mxu0 0.0
        %2183 = vmatpush2.msra.mxu0 0.0
        %2184 = vmatprep.subr.mxu0 0.0
        %2185 = vmatpush2.msra.mxu0 0.0
        %2186 = vmatprep.subr.mxu0 0.0
        %2187 = vmatpush2.msra.mxu0 0.0
        %2188 = vmatprep.mubr.f32.mxu0 0.0
        %2189 = vmatmul.mubr.f32.gmra.mxu0 %v2122
        %v2190 = vpop.f32.mrf.mxu0
        %v2191 = vadd.f32 0.0, %v2190
        %v2192 = vpop.f32.mrf.mxu0
        %2193 = vdwg.mxu0
        %v2195 = vrot.slane %v2191, 3
        %v2197 = vadd.f32 %v737, %v2195
        %v2198 = vxor.u32 %v2197, 2147483648
        %v2199 = vmul.f32 %v2198, 1.442695
        %v2200 = vpow.pop %v2199
        %v2201 = vadd.f32 %v2200, 1.0
        %v2202 = vrcp.pop %v2201
        %v2203 = vmul.f32 1.0, %v2202
        %v2204 = vtanh.pop %v2197
        %v2206 = vrot.slane %v2111, 7
        %v2208 = vmul.f32 %v2203, %v2206
        %2210 = vrot.lane.b32.xlu0 %v2204, 80
        %v2211 = vpop.permute.xlu0 %2210
        %v2213 = vmul.f32 %v2203, %v2211
        %2215 = vrot.lane.b32.xlu0 %v2213, 16
        %v2216 = vpop.permute.xlu0 %2215
        %v2218 = vadd.f32 %v2208, %v2216
        %v2219 = vtanh.pop %v2218
        %2221 = vrot.lane.b32.xlu0 %v2219, 16
        %v2222 = vpop.permute.xlu0 %2221
        %v2224 = vmul.f32 %v2203, %v2222
        %v2226 = vrot.slane %v2224, 5
        %2227 = vrot.lane.b32.xlu0 %v2226, 96
        %v2228 = vpop.permute.xlu0 %2227
        %v2229 = vsel %vm740, %v2228, 0
        %2231 = vmatprep.subr.mxu0 0.0
        %2232 = vmatpush1.msra.mxu0 0.0
        %2233 = vmatprep.subr.mxu0 0.0
        %2234 = vmatpush1.msra.mxu0 0.0
        %2235 = vmatprep.subr.mxu0 0.0
        %2236 = vmatpush1.msra.mxu0 0.0
        %2237 = vmatprep.subr.mxu0 0.0
        %2238 = vmatpush1.msra.mxu0 0.0
        %2239 = vmatprep.subr.mxu0 0.0
        %2240 = vmatpush1.msra.mxu0 0.0
        %2241 = vmatprep.subr.mxu0 0.0
        %2242 = vmatpush1.msra.mxu0 0.0
        %2243 = vmatprep.subr.mxu0 0.0
        %2244 = vmatpush1.msra.mxu0 0.0
        %2245 = vmatprep.subr.mxu0 0.0
        %2246 = vmatpush1.msra.mxu0 0.0
        %2247 = vmatprep.subr.mxu0 0.0
        %2248 = vmatpush1.msra.mxu0 0.0
        %2249 = vmatprep.subr.mxu0 0.0
        %2250 = vmatpush1.msra.mxu0 0.0
        %2251 = vmatprep.subr.mxu0 0.0
        %2252 = vmatpush1.msra.mxu0 0.0
        %2253 = vmatprep.subr.mxu0 0.0
        %2254 = vmatpush1.msra.mxu0 0.0
        %2255 = vmatprep.subr.mxu0 0.0
        %2256 = vmatpush1.msra.mxu0 0.0
        %2257 = vmatprep.subr.mxu0 0.0
        %2258 = vmatpush1.msra.mxu0 0.0
        %2259 = vmatprep.subr.mxu0 0.0
        %2260 = vmatpush1.msra.mxu0 %v331
        %2261 = vmatprep.subr.mxu0 0.0
        %2262 = vmatpush1.msra.mxu0 %v330
        %2263 = vmatprep.subr.mxu0 0.0
        %2264 = vmatpush2.msra.mxu0 0.0
        %2265 = vmatprep.subr.mxu0 0.0
        %2266 = vmatpush2.msra.mxu0 0.0
        %2267 = vmatprep.subr.mxu0 0.0
        %2268 = vmatpush2.msra.mxu0 0.0
        %2269 = vmatprep.subr.mxu0 0.0
        %2270 = vmatpush2.msra.mxu0 0.0
        %2271 = vmatprep.subr.mxu0 0.0
        %2272 = vmatpush2.msra.mxu0 0.0
        %2273 = vmatprep.subr.mxu0 0.0
        %2274 = vmatpush2.msra.mxu0 0.0
        %2275 = vmatprep.subr.mxu0 0.0
        %2276 = vmatpush2.msra.mxu0 0.0
        %2277 = vmatprep.subr.mxu0 0.0
        %2278 = vmatpush2.msra.mxu0 0.0
        %2279 = vmatprep.subr.mxu0 0.0
        %2280 = vmatpush2.msra.mxu0 0.0
        %2281 = vmatprep.subr.mxu0 0.0
        %2282 = vmatpush2.msra.mxu0 0.0
        %2283 = vmatprep.subr.mxu0 0.0
        %2284 = vmatpush2.msra.mxu0 0.0
        %2285 = vmatprep.subr.mxu0 0.0
        %2286 = vmatpush2.msra.mxu0 0.0
        %2287 = vmatprep.subr.mxu0 0.0
        %2288 = vmatpush2.msra.mxu0 0.0
        %2289 = vmatprep.subr.mxu0 0.0
        %2290 = vmatpush2.msra.mxu0 0.0
        %2291 = vmatprep.subr.mxu0 0.0
        %2292 = vmatpush2.msra.mxu0 0.0
        %2293 = vmatprep.subr.mxu0 0.0
        %2294 = vmatpush2.msra.mxu0 0.0
        %2295 = vmatprep.mubr.f32.mxu0 0.0
        %2296 = vmatmul.mubr.f32.gmra.mxu0 %v2229
        %v2297 = vpop.f32.mrf.mxu0
        %v2298 = vadd.f32 0.0, %v2297
        %v2299 = vpop.f32.mrf.mxu0
        %2300 = vdwg.mxu0
        %v2302 = vrot.slane %v2298, 2
        %v2304 = vadd.f32 %v737, %v2302
        %v2305 = vxor.u32 %v2304, 2147483648
        %v2306 = vmul.f32 %v2305, 1.442695
        %v2307 = vpow.pop %v2306
        %v2308 = vadd.f32 %v2307, 1.0
        %v2309 = vrcp.pop %v2308
        %v2310 = vmul.f32 1.0, %v2309
        %v2311 = vtanh.pop %v2304
        %v2313 = vrot.slane %v2218, 7
        %v2315 = vmul.f32 %v2310, %v2313
        %2317 = vrot.lane.b32.xlu0 %v2311, 80
        %v2318 = vpop.permute.xlu0 %2317
        %v2320 = vmul.f32 %v2310, %v2318
        %2322 = vrot.lane.b32.xlu0 %v2320, 16
        %v2323 = vpop.permute.xlu0 %2322
        %v2325 = vadd.f32 %v2315, %v2323
        %v2326 = vtanh.pop %v2325
        %2328 = vrot.lane.b32.xlu0 %v2326, 16
        %v2329 = vpop.permute.xlu0 %2328
        %v2331 = vmul.f32 %v2310, %v2329
        %v2333 = vrot.slane %v2331, 6
        %2334 = vrot.lane.b32.xlu0 %v2333, 96
        %v2335 = vpop.permute.xlu0 %2334
        %v2336 = vsel %vm740, %v2335, 0
        %2338 = vmatprep.subr.mxu0 0.0
        %2339 = vmatpush1.msra.mxu0 0.0
        %2340 = vmatprep.subr.mxu0 0.0
        %2341 = vmatpush1.msra.mxu0 0.0
        %2342 = vmatprep.subr.mxu0 0.0
        %2343 = vmatpush1.msra.mxu0 0.0
        %2344 = vmatprep.subr.mxu0 0.0
        %2345 = vmatpush1.msra.mxu0 0.0
        %2346 = vmatprep.subr.mxu0 0.0
        %2347 = vmatpush1.msra.mxu0 0.0
        %2348 = vmatprep.subr.mxu0 0.0
        %2349 = vmatpush1.msra.mxu0 0.0
        %2350 = vmatprep.subr.mxu0 0.0
        %2351 = vmatpush1.msra.mxu0 0.0
        %2352 = vmatprep.subr.mxu0 0.0
        %2353 = vmatpush1.msra.mxu0 0.0
        %2354 = vmatprep.subr.mxu0 0.0
        %2355 = vmatpush1.msra.mxu0 0.0
        %2356 = vmatprep.subr.mxu0 0.0
        %2357 = vmatpush1.msra.mxu0 0.0
        %2358 = vmatprep.subr.mxu0 0.0
        %2359 = vmatpush1.msra.mxu0 0.0
        %2360 = vmatprep.subr.mxu0 0.0
        %2361 = vmatpush1.msra.mxu0 0.0
        %2362 = vmatprep.subr.mxu0 0.0
        %2363 = vmatpush1.msra.mxu0 0.0
        %2364 = vmatprep.subr.mxu0 0.0
        %2365 = vmatpush1.msra.mxu0 0.0
        %2366 = vmatprep.subr.mxu0 0.0
        %2367 = vmatpush1.msra.mxu0 %v331
        %2368 = vmatprep.subr.mxu0 0.0
        %2369 = vmatpush1.msra.mxu0 %v330
        %2370 = vmatprep.subr.mxu0 0.0
        %2371 = vmatpush2.msra.mxu0 0.0
        %2372 = vmatprep.subr.mxu0 0.0
        %2373 = vmatpush2.msra.mxu0 0.0
        %2374 = vmatprep.subr.mxu0 0.0
        %2375 = vmatpush2.msra.mxu0 0.0
        %2376 = vmatprep.subr.mxu0 0.0
        %2377 = vmatpush2.msra.mxu0 0.0
        %2378 = vmatprep.subr.mxu0 0.0
        %2379 = vmatpush2.msra.mxu0 0.0
        %2380 = vmatprep.subr.mxu0 0.0
        %2381 = vmatpush2.msra.mxu0 0.0
        %2382 = vmatprep.subr.mxu0 0.0
        %2383 = vmatpush2.msra.mxu0 0.0
        %2384 = vmatprep.subr.mxu0 0.0
        %2385 = vmatpush2.msra.mxu0 0.0
        %2386 = vmatprep.subr.mxu0 0.0
        %2387 = vmatpush2.msra.mxu0 0.0
        %2388 = vmatprep.subr.mxu0 0.0
        %2389 = vmatpush2.msra.mxu0 0.0
        %2390 = vmatprep.subr.mxu0 0.0
        %2391 = vmatpush2.msra.mxu0 0.0
        %2392 = vmatprep.subr.mxu0 0.0
        %2393 = vmatpush2.msra.mxu0 0.0
        %2394 = vmatprep.subr.mxu0 0.0
        %2395 = vmatpush2.msra.mxu0 0.0
        %2396 = vmatprep.subr.mxu0 0.0
        %2397 = vmatpush2.msra.mxu0 0.0
        %2398 = vmatprep.subr.mxu0 0.0
        %2399 = vmatpush2.msra.mxu0 0.0
        %2400 = vmatprep.subr.mxu0 0.0
        %2401 = vmatpush2.msra.mxu0 0.0
        %2402 = vmatprep.mubr.f32.mxu0 0.0
        %2403 = vmatmul.mubr.f32.gmra.mxu0 %v2336
        %v2404 = vpop.f32.mrf.mxu0
        %v2405 = vadd.f32 0.0, %v2404
        %v2406 = vpop.f32.mrf.mxu0
        %2407 = vdwg.mxu0
        %v2409 = vrot.slane %v2405, 1
        %v2411 = vadd.f32 %v737, %v2409
        %v2412 = vxor.u32 %v2411, 2147483648
        %v2413 = vmul.f32 %v2412, 1.442695
        %v2414 = vpow.pop %v2413
        %v2415 = vadd.f32 %v2414, 1.0
        %v2416 = vrcp.pop %v2415
        %v2417 = vmul.f32 1.0, %v2416
        %v2418 = vtanh.pop %v2411
        %v2420 = vrot.slane %v2325, 7
        %v2422 = vmul.f32 %v2417, %v2420
        %2424 = vrot.lane.b32.xlu0 %v2418, 80
        %v2425 = vpop.permute.xlu0 %2424
        %v2427 = vmul.f32 %v2417, %v2425
        %2429 = vrot.lane.b32.xlu0 %v2427, 16
        %v2430 = vpop.permute.xlu0 %2429
        %v2432 = vadd.f32 %v2422, %v2430
        %v2433 = vtanh.pop %v2432
        %2435 = vrot.lane.b32.xlu0 %v2433, 16
        %v2436 = vpop.permute.xlu0 %2435
        %v2438 = vmul.f32 %v2417, %v2436
        %v2439 = vsel %vm618, %v838, %v944
        %vm2440 = vcmask 1041408
        %v2441 = vsel %vm2440, %v2439, %v1051
        %v2442 = vsel %vm661, %v2441, %v1158
        %vm2443 = vcmask 1043456
        %v2444 = vsel %vm2443, %v2442, %v1265
        %vm2445 = vcmask 1044480
        %v2446 = vsel %vm2445, %v2444, %v1372
        %vm2447 = vcmask 1045504
        %v2448 = vsel %vm2447, %v2446, %v1479
        %vm2449 = vcmask 1046528
        %v2450 = vsel %vm2449, %v2448, %v1586
        %v2451 = vsel %vm618, %v1690, %v1796
        %v2452 = vsel %vm2440, %v2451, %v1903
        %v2453 = vsel %vm661, %v2452, %v2010
        %v2454 = vsel %vm2443, %v2453, %v2117
        %v2455 = vsel %vm2445, %v2454, %v2224
        %v2456 = vsel %vm2447, %v2455, %v2331
        %v2457 = vsel %vm2449, %v2456, %v2438
        %v2459 = vlaneseq
        %v2460 = vshrl.u32 %v2459, 7
        %v2461 = vsub.s32 0, %v2460
        %v2462 = vrot.slane %v335, %v2461
        %2466 = vrot.lane.b32.xlu0 %v2450, 96
        %v2467 = vpop.permute.xlu0 %2466
        %2468 = vrot.lane.b32.xlu0 %v2457, 96
        %v2469 = vpop.permute.xlu0 %2468
        %v2470 = vsel %vm740, %v2467, 0
        %v2472 = vsel %vm740, %v2469, 0
        %2474 = vmatprep.subr.mxu0 0.0
        %2475 = vmatpush1.msra.mxu0 0.0
        %2476 = vmatprep.subr.mxu0 0.0
        %2477 = vmatpush1.msra.mxu0 0.0
        %2478 = vmatprep.subr.mxu0 0.0
        %2479 = vmatpush1.msra.mxu0 0.0
        %2480 = vmatprep.subr.mxu0 0.0
        %2481 = vmatpush1.msra.mxu0 0.0
        %2482 = vmatprep.subr.mxu0 0.0
        %2483 = vmatpush1.msra.mxu0 0.0
        %2484 = vmatprep.subr.mxu0 0.0
        %2485 = vmatpush1.msra.mxu0 0.0
        %2486 = vmatprep.subr.mxu0 0.0
        %2487 = vmatpush1.msra.mxu0 0.0
        %2488 = vmatprep.subr.mxu0 0.0
        %2489 = vmatpush1.msra.mxu0 0.0
        %2490 = vmatprep.subr.mxu0 0.0
        %2491 = vmatpush1.msra.mxu0 0.0
        %2492 = vmatprep.subr.mxu0 0.0
        %2493 = vmatpush1.msra.mxu0 0.0
        %2494 = vmatprep.subr.mxu0 0.0
        %2495 = vmatpush1.msra.mxu0 0.0
        %2496 = vmatprep.subr.mxu0 0.0
        %2497 = vmatpush1.msra.mxu0 0.0
        %2498 = vmatprep.subr.mxu0 0.0
        %2499 = vmatpush1.msra.mxu0 0.0
        %2500 = vmatprep.subr.mxu0 0.0
        %2501 = vmatpush1.msra.mxu0 0.0
        %2502 = vmatprep.subr.mxu0 0.0
        %2503 = vmatpush1.msra.mxu0 %v334
        %2504 = vmatprep.subr.mxu0 0.0
        %2505 = vmatpush1.msra.mxu0 %v333
        %2506 = vmatprep.subr.mxu0 0.0
        %2507 = vmatpush2.msra.mxu0 0.0
        %2508 = vmatprep.subr.mxu0 0.0
        %2509 = vmatpush2.msra.mxu0 0.0
        %2510 = vmatprep.subr.mxu0 0.0
        %2511 = vmatpush2.msra.mxu0 0.0
        %2512 = vmatprep.subr.mxu0 0.0
        %2513 = vmatpush2.msra.mxu0 0.0
        %2514 = vmatprep.subr.mxu0 0.0
        %2515 = vmatpush2.msra.mxu0 0.0
        %2516 = vmatprep.subr.mxu0 0.0
        %2517 = vmatpush2.msra.mxu0 0.0
        %2518 = vmatprep.subr.mxu0 0.0
        %2519 = vmatpush2.msra.mxu0 0.0
        %2520 = vmatprep.subr.mxu0 0.0
        %2521 = vmatpush2.msra.mxu0 0.0
        %2522 = vmatprep.subr.mxu0 0.0
        %2523 = vmatpush2.msra.mxu0 0.0
        %2524 = vmatprep.subr.mxu0 0.0
        %2525 = vmatpush2.msra.mxu0 0.0
        %2526 = vmatprep.subr.mxu0 0.0
        %2527 = vmatpush2.msra.mxu0 0.0
        %2528 = vmatprep.subr.mxu0 0.0
        %2529 = vmatpush2.msra.mxu0 0.0
        %2530 = vmatprep.subr.mxu0 0.0
        %2531 = vmatpush2.msra.mxu0 0.0
        %2532 = vmatprep.subr.mxu0 0.0
        %2533 = vmatpush2.msra.mxu0 0.0
        %2534 = vmatprep.subr.mxu0 0.0
        %2535 = vmatpush2.msra.mxu0 0.0
        %2536 = vmatprep.subr.mxu0 0.0
        %2537 = vmatpush2.msra.mxu0 0.0
        %2538 = vmatprep.mubr.f32.mxu0 0.0
        %2539 = vmatmul.mubr.f32.gmra.mxu0 %v2470
        %v2540 = vpop.f32.mrf.mxu0
        %v2541 = vadd.f32 %v2462, %v2540
        %v2542 = vpop.f32.mrf.mxu0
        %2543 = vmatprep.mubr.f32.mxu0 0.0
        %2544 = vmatmul.mubr.f32.gmra.mxu0 %v2472
        %v2545 = vpop.f32.mrf.mxu0
        %v2546 = vadd.f32 %v2462, %v2545
        %v2547 = vpop.f32.mrf.mxu0
        %2548 = vdwg.mxu0
        %v2549 = vtanh.pop %v2541
        %v2550 = vtanh.pop %v2546
        %v2551 = vmul.f32 %v2549, 0.1
        %v2552 = vmul.f32 %v2550, 0.1
        %v2553 = vadd.f32 %v344, %v2551
        %v2554 = vadd.f32 %v345, %v2552
        %v2555 = vmax.f32 %v2553, 0.0
        %v2556 = vmax.f32 %v2554, 0.0
        %v2557 = vmin.f32 %v2555, 1.0
        %v2558 = vmin.f32 %v2556, 1.0
      $region57: #{obsbot_forward.1} parent=51 // loop_footer
        %s343 = sadd.s32 1, %s339
      $region58: #{obsbot_forward.1} parent=51 // loop_footer_branch
        %338 = sbr.rel target = $region54
      $region59: #{obsbot_forward.1} parent=51 // loop_exit
        _
      %p2559 = scmp.lt.s32.totalorder %s19, 1
      %s2560 = scalar_select %p2559, %s19, 1
      %s2561 = smul.addr %s2560, 16
      %s2562 = smul.addr %s2561, 2
      %s2563 = scalar_lea.vmem %s8, %s2562
      // Predicated region
      $region60: #{obsbot_forward.1} parent=51 // pred_check
        %p2564 = pneg %p215
      $region61: #{obsbot_forward.1} parent=51 // pred_check_branch
        %2566 = sbr.rel (%p2564) target = $region63
      $region62: #{obsbot_forward.1} parent=51 // pred_region
        _
      $region63: #{obsbot_forward.1} parent=51 // pred_fallthru
        _
    $region52: #{obsbot_forward.1} parent=5 // pred_fallthru
      _
    %p2567 = scmp.le.s32.totalorder 2, %s14
    // Predicated region
    $region64: #{obsbot_forward.1} parent=5 // pred_check
      %p2568 = pneg %p2567
    $region65: #{obsbot_forward.1} parent=5 // pred_check_branch
      %2570 = sbr.rel (%p2568) target = $region67
    $region66: #{obsbot_forward.1} parent=5 // pred_region
      %s2571 = ssub.s32 %s14, 2
      // Predicated region
      $region68: #{obsbot_forward.1} parent=66 // pred_check
        %p2572 = pneg %p221
      $region69: #{obsbot_forward.1} parent=66 // pred_check_branch
        %2574 = sbr.rel (%p2572) target = $region71
      $region70: #{obsbot_forward.1} parent=66 // pred_region
        %p2575 = scmp.lt.s32.totalorder %s20, 1
        %s2576 = scalar_select %p2575, %s20, 1
        %s2577 = smul.addr %s2576, 16
        %s2578 = smul.addr %s2577, 2
        %s2579 = scalar_lea.vmem %s8, %s2578
      $region71: #{obsbot_forward.1} parent=66 // pred_fallthru
        _
    $region67: #{obsbot_forward.1} parent=5 // pred_fallthru
      _
  $region6: #{obsbot_forward.1} parent=0 // loop_footer
    %s18 = sadd.s32 1, %s14
  $region7: #{obsbot_forward.1} parent=0 // loop_footer_branch
    %13 = sbr.rel target = $region3
  $region8: #{obsbot_forward.1} parent=0 // loop_exit
    _

</llo_original>
